<compile_context>
chip_gen: v7x
topology: tpu7x:2x2x1
jax: 0.10.0
libtpu: 0.0.40
codegen_flags: <defaults>
</compile_context>

<pallas_src>
import functools

import jax
import jax.numpy as jnp
from jax import lax
from jax.experimental import pallas as pl
from jax.experimental.pallas import tpu as pltpu


def self_attention_kernel(gamma_ref, x_ref, w_ref, o_ref,
                          f_ref, g_ref, h_ref, *, c8p, bf16_exp, proj_chunk):
    # gamma_ref: SMEM (1,)                       scalar gamma
    # x_ref:     VMEM (1, C, N) f32              resident batch slab (proj input + residual)
    # w_ref:     VMEM (2*C8p + C, C) bf16        fused [wq_pad; wk_pad; wv]
    # o_ref:     VMEM (1, C, TN) f32             output column block
    # f_ref/g_ref: VMEM (C8p, N) bf16 scratch    query / key projections (per batch)
    # h_ref:       VMEM (HR, N)  bf16 scratch    value projection + ones-row + zero pad
    j = pl.program_id(1)
    c = o_ref.shape[1]          # real channel count C
    n = f_ref.shape[1]          # N = H*W
    tn = o_ref.shape[2]         # column tile width

    # --- once per batch: fused projection matmul (chunked over N), cache in VMEM ---
    @pl.when(j == 0)
    def _():
        # Padding rows of h_ext: row c is all-ones (denominator trick), rest zero.
        ridx = lax.broadcasted_iota(jnp.int32, (h_ref.shape[0] - c, n), 0)
        h_ref[c:, :] = jnp.where(ridx == 0, 1.0, 0.0).astype(jnp.bfloat16)

        w = w_ref[...]                                           # (2*C8p + C, C) bf16
        for c0 in range(0, n, proj_chunk):                       # static unrolled chunks
            cs = min(proj_chunk, n - c0)
            xb = x_ref[0, :, c0:c0 + cs].astype(jnp.bfloat16)    # (C, cs)
            proj = jnp.dot(w, xb, preferred_element_type=jnp.float32)  # (2*C8p+C, cs)
            f_ref[:, c0:c0 + cs] = proj[:c8p].astype(jnp.bfloat16)
            g_ref[:, c0:c0 + cs] = proj[c8p:2 * c8p].astype(jnp.bfloat16)
            h_ref[:c, c0:c0 + cs] = proj[2 * c8p:].astype(jnp.bfloat16)

    col = pl.multiple_of(j * tn, tn)

    # s[i, t] = sum_k f[k, i] * g[k, col + t]   (== torch.bmm(f^T, g) column block)
    # NOTE(review): if the Mosaic dump shows a per-block relayout of f here, produce
    # f in the MXU-preferred layout once at j==0 instead (not restructured blindly).
    f = f_ref[...]                                               # (C8p, N)  bf16
    g_blk = g_ref[:, pl.ds(col, tn)]                             # (C8p, TN) bf16
    s = lax.dot_general(f, g_blk, (((0,), (0,)), ((), ())),
                        preferred_element_type=jnp.float32)      # (N, TN) f32

    # torch F.softmax(..., dim=1): normalize over axis 0 (per output column).
    m = jnp.max(s, axis=0, keepdims=True)                        # (1, TN)
    if bf16_exp:
        # v6e/v7x: bf16 EUP/VPU -> halve the exp stream; p lands in the MXU dtype.
        p = jnp.exp((s - m).astype(jnp.bfloat16))                # (N, TN) bf16
    else:
        # v5e: no bf16 VPU/EUP -> keep the elementwise math in f32, cast only for MXU.
        p = jnp.exp(s - m).astype(jnp.bfloat16)

    # Second matmul with the ones-row-extended value projection:
    #   rows [:C]  -> un-normalized attention output,
    #   row  [C]   -> f32-accumulated column sums of p (softmax denominator).
    oe = jnp.dot(h_ref[...], p, preferred_element_type=jnp.float32)   # (HR, TN) f32
    ob = oe[:c]                                                  # (C, TN)
    denom = oe[c:c + 1]                                          # (1, TN)

    # Fused normalization + gamma: one (1, TN) scale broadcast over C rows.
    scale = gamma_ref[0] * pl.reciprocal(denom, approx=True)     # (1, TN)
    xc = x_ref[0, :, pl.ds(col, tn)]                             # (C, TN) f32 residual
    o_ref[0] = (ob * scale + xc).astype(o_ref.dtype)


def self_attention(x_bchw, wq, wk, wv, gamma):
    """Pallas-backed forward pass. x_bchw: (B, C, H, W) float32."""
    B, C, H, W = x_bchw.shape
    N = H * W
    C8 = wq.shape[0]

    # Pad the tiny C//8 query/key projections up to a sublane multiple of 8 and
    # fuse all three 1x1-conv weights into one channel-mixing matmul operand.
    C8p = max(8, ((C8 + 7) // 8) * 8)
    HR = ((C + 1 + 7) // 8) * 8          # value rows + ones-row + zero pad (sublane mult.)
    wq_p = jnp.zeros((C8p, C), wq.dtype).at[:C8].set(wq)
    wk_p = jnp.zeros((C8p, C), wk.dtype).at[:C8].set(wk)
    w_all = jnp.concatenate([wq_p, wk_p, wv], axis=0).astype(jnp.bfloat16)

    # Single f32 x slab: projection input AND residual (no duplicate bf16 copy).
    x = x_bchw.reshape(B, C, N)

    # Generation-specific tuning.
    kind = jax.devices()[0].device_kind.lower()
    is_v7 = "v7" in kind
    bf16_exp = ("v6" in kind) or ("v7" in kind)      # v5e (and unknown) keep f32 exp

    # Column tile over N: lane-dense (multiple of 128) when possible; fall back to a
    # single full-width block for tiny / odd feature maps. v7x (64 MiB VMEM) keeps
    # TN <= 256; v5e/v6e (128 MiB) go wider to amortize per-step + per-block overhead.
    tn_cands = (256, 128) if is_v7 else (512, 256, 128)
    TN = N
    for cand in tn_cands:
        if N % cand == 0:
            TN = cand
            break
    NJ = N // TN

    PROJ_CHUNK = min(N, 512)             # bounds the j==0 f32 projection temp

    # Advisory cost estimate for the XLA scheduler.
    flops = 2 * B * ((2 * C8p + C) * C * N + C8p * N * N + HR * N * N)
    cost = pl.CostEstimate(
        flops=int(flops),
        transcendentals=int(B * N * N),
        bytes_accessed=int(B * C * N * (4 + 4) + (2 * C8p + C) * C * 2),
    )

    # Rough per-core VMEM footprint; cap per generation (48 MiB v7x, ~100 MiB else).
    x_bufs = 1 if is_v7 else 2
    vmem_est = (
        x_bufs * C * N * 4                   # resident f32 x slab
        + 2 * C * TN * 4                     # output column blocks (double-buffered)
        + 2 * (2 * C8p + C) * C * 2          # fused weights
        + (2 * C8p + HR) * N * 2             # f/g/h_ext bf16 scratch
        + (2 * C8p + C) * PROJ_CHUNK * 4     # per-chunk projection temp
        + N * TN * 4 + N * TN * 2            # s (f32) + p (bf16) live temps
        + HR * TN * 4                        # oe temp
    )
    vmem_cap = 48 * 1024 * 1024 if is_v7 else 100 * 1024 * 1024
    vmem_limit = min(max(2 * vmem_est, 32 * 1024 * 1024), vmem_cap)

    # Resident x slab: its index_map is constant in j, so on v7x single-buffer it
    # (halves the largest VMEM consumer; overlap loss only once per batch).
    if is_v7:
        x_spec = pl.BlockSpec((1, C, N), lambda b, j: (b, 0, 0),
                              pipeline_mode=pl.Buffered(1))
    else:
        x_spec = pl.BlockSpec((1, C, N), lambda b, j: (b, 0, 0))

    kernel = functools.partial(self_attention_kernel, c8p=C8p,
                               bf16_exp=bf16_exp, proj_chunk=PROJ_CHUNK)

    # TODO(synk): on v7x with B == 1 (or odd B) megacore is under-utilized; hoist the
    # projection into its own call so the column axis can be marked "parallel".
    out = pl.pallas_call(
        kernel,
        out_shape=jax.ShapeDtypeStruct((B, C, N), x.dtype),
        grid=(B, NJ),
        in_specs=[
            pl.BlockSpec(memory_space=pltpu.SMEM),                # gamma (1,)
            x_spec,                                               # f32 slab (resident)
            pl.BlockSpec((2 * C8p + C, C), lambda b, j: (0, 0)),  # fused weights
        ],
        out_specs=pl.BlockSpec((1, C, TN), lambda b, j: (b, 0, j)),
        scratch_shapes=[
            pltpu.VMEM((C8p, N), jnp.bfloat16),   # f (query proj, per-batch cache)
            pltpu.VMEM((C8p, N), jnp.bfloat16),   # g (key proj,   per-batch cache)
            pltpu.VMEM((HR, N), jnp.bfloat16),    # h_ext (value proj + ones-row + pad)
        ],
        compiler_params=pltpu.CompilerParams(
            # column axis carries the per-batch scratch state -> must stay
            # "arbitrary"; batch axis is independent -> megacore-parallel.
            dimension_semantics=("parallel", "arbitrary"),
            vmem_limit_bytes=int(vmem_limit),
        ),
        cost_estimate=cost,
    )(gamma, x, w_all)
    return out.reshape(B, C, H, W)


# ------------------------- plain-JAX reference (for checking) -----------------
def self_attention_reference(x_bchw, wq, wk, wv, gamma):
    B, C, H, W = x_bchw.shape
    x = x_bchw.reshape(B, C, -1)
    f = jnp.einsum('oc,bcn->bon', wq, x)
    g = jnp.einsum('oc,bcn->bon', wk, x)
    h = jnp.einsum('oc,bcn->bon', wv, x)
    s = jnp.einsum('bci,bcj->bij', f, g)          # bmm(f^T, g)
    beta = jax.nn.softmax(s, axis=1)              # dim=1
    o = gamma[0] * jnp.einsum('bci,bij->bcj', h, beta) + x
    return o.reshape(B, C, H, W)


def _spectral_normalize(w):
    # ConvLayer uses NormType.Spectral: weight divided by its largest singular
    # value (exact SVD here instead of power iteration). This is a host-side
    # weight parametrization, not part of the per-step attention math.
    sigma = jnp.linalg.svd(w, compute_uv=False)[0]
    return w / sigma


if __name__ == "__main__":
    key = jax.random.PRNGKey(0)
    B, C, H, W = 2, 32, 16, 64        # N = 1024 -> >= 2 lane-dense column blocks per chip
    C8 = C // 8

    kx, kq, kk, kv = jax.random.split(key, 4)
    x = jax.random.normal(kx, (B, C, H, W), dtype=jnp.float32)

    # 1x1 conv weights (out, in, 1) -> stored as (out, in); kaiming-ish scale,
    # then spectral-normalized (as in ConvLayer with NormType.Spectral, bias=False).
    scale = 1.0 / jnp.sqrt(C)
    wq = _spectral_normalize(scale * jax.random.normal(kq, (C8, C), dtype=jnp.float32))
    wk = _spectral_normalize(scale * jax.random.normal(kk, (C8, C), dtype=jnp.float32))
    wv = _spectral_normalize(scale * jax.random.normal(kv, (C, C), dtype=jnp.float32))

    # gamma initialized to 0.0 exactly as in the module's __init__:
    # output must equal the residual exactly (residual path is f32 end-to-end).
    gamma0 = jnp.zeros((1,), dtype=jnp.float32)
    out0 = jax.block_until_ready(self_attention(x, wq, wk, wv, gamma0))
    ref0 = self_attention_reference(x, wq, wk, wv, gamma0)
    assert out0.shape == (B, C, H, W)
    assert jnp.allclose(out0, ref0, atol=1e-6, rtol=1e-6)

    # Nonzero gamma exercises the full attention path. bf16 MXU operands, bf16 exp
    # (v6e/v7x) and approximate reciprocal -> relaxed tolerance vs pure-f32 reference.
    gamma1 = jnp.full((1,), 0.7, dtype=jnp.float32)
    out1 = jax.block_until_ready(self_attention(x, wq, wk, wv, gamma1))
    ref1 = self_attention_reference(x, wq, wk, wv, gamma1)
    max_err = float(jnp.max(jnp.abs(out1 - ref1)))
    assert jnp.allclose(out1, ref1, atol=5e-2, rtol=5e-2), f"max abs err {max_err}"

    print("KERNEL_OK")
</pallas_src>

<mosaic_0001>
module attributes {stable_mosaic.version = 11 : i64} {
  func.func @self_attention_kernel(%arg0: i32, %arg1: i32, %arg2: memref<1xf32, #tpu.memory_space<smem>>, %arg3: memref<1x32x1024xf32, #tpu.memory_space<vmem>>, %arg4: memref<48x32xbf16, #tpu.memory_space<vmem>>, %arg5: memref<1x32x512xf32, #tpu.memory_space<vmem>>, %arg6: memref<8x1024xbf16, #tpu.memory_space<vmem>>, %arg7: memref<8x1024xbf16, #tpu.memory_space<vmem>>, %arg8: memref<40x1024xbf16, #tpu.memory_space<vmem>>) attributes {dimension_semantics = [#tpu.dimension_semantics<parallel>, #tpu.dimension_semantics<arbitrary>], iteration_bounds = array<i64: 2, 2>, scalar_prefetch = 0 : i64, scratch_operands = 3 : i64, tpu.core_type = #tpu.core_type<tc>, window_params = [{transform_indices = @transform_0, window_bounds = array<i64: 1>}, {transform_indices = @transform_1, window_bounds = array<i64: 1, 32, 1024>}, {pipeline_mode = #tpu.pipeline_mode<synchronous>, transform_indices = @transform_2, window_bounds = array<i64: 48, 32>}, {transform_indices = @transform_3, window_bounds = array<i64: 1, 32, 512>}]} {
    %c0_i32 = arith.constant 0 : i32
    %0 = arith.cmpi eq, %arg1, %c0_i32 : i32
    %1 = arith.extui %0 : i1 to i32
    %c0_i32_0 = arith.constant 0 : i32
    %2 = arith.cmpi ne, %1, %c0_i32_0 : i32
    scf.if %2 {
      %32 = tpu.iota {dimensions = array<i32: 0>} : vector<8x1024xi32>
      %c0_i32_13 = arith.constant 0 : i32
      %33 = vector.broadcast %c0_i32_13 : i32 to vector<8x1024xi32>
      %34 = arith.cmpi eq, %32, %33 : vector<8x1024xi32>
      %cst_14 = arith.constant 1.000000e+00 : f32
      %cst_15 = arith.constant 0.000000e+00 : f32
      %35 = vector.broadcast %cst_14 : f32 to vector<8x1024xf32>
      %36 = vector.broadcast %cst_15 : f32 to vector<8x1024xf32>
      %37 = arith.select %34, %35, %36 : vector<8x1024xi1>, vector<8x1024xf32>
      %38 = arith.truncf %37 : vector<8x1024xf32> to vector<8x1024xbf16>
      %c32 = arith.constant 32 : index
      %c0_16 = arith.constant 0 : index
      %39 = vector.load %arg8[%c32, %c0_16] : memref<40x1024xbf16, #tpu.memory_space<vmem>>, vector<8x1024xbf16>
      tpu.vector_store %arg8[%c32, %c0_16], %38 {strides = array<i32>} : memref<40x1024xbf16, #tpu.memory_space<vmem>>, vector<8x1024xbf16>,
      %c0_17 = arith.constant 0 : index
      %c0_18 = arith.constant 0 : index
      %40 = vector.load %arg4[%c0_17, %c0_18] : memref<48x32xbf16, #tpu.memory_space<vmem>>, vector<48x32xbf16>
      %c0_19 = arith.constant 0 : index
      %c0_20 = arith.constant 0 : index
      %c0_21 = arith.constant 0 : index
      %41 = vector.load %arg3[%c0_19, %c0_20, %c0_21] : memref<1x32x1024xf32, #tpu.memory_space<vmem>>, vector<1x32x512xf32>
      %42 = vector.shape_cast %41 : vector<1x32x512xf32> to vector<32x512xf32>
      %43 = arith.truncf %42 : vector<32x512xf32> to vector<32x512xbf16>
      %cst_22 = arith.constant dense<0.000000e+00> : vector<48x512xf32>
      %44 = tpu.matmul %40, %43, %cst_22 {dimension_numbers = #tpu.dot_dimension_numbers<[1], [0], [0], [1], [0, 0, 1, 1], [], []>} : vector<48x32xbf16>, vector<32x512xbf16>, vector<48x512xf32> -> vector<48x512xf32>
      %45 = vector.extract_strided_slice %44 {offsets = [0, 0], sizes = [8, 512], strides = [1, 1]} : vector<48x512xf32> to vector<8x512xf32>
      %46 = arith.truncf %45 : vector<8x512xf32> to vector<8x512xbf16>
      %c0_23 = arith.constant 0 : index
      %c0_24 = arith.constant 0 : index
      %47 = vector.load %arg6[%c0_23, %c0_24] : memref<8x1024xbf16, #tpu.memory_space<vmem>>, vector<8x512xbf16>
      tpu.vector_store %arg6[%c0_23, %c0_24], %46 {strides = array<i32>} : memref<8x1024xbf16, #tpu.memory_space<vmem>>, vector<8x512xbf16>,
      %48 = vector.extract_strided_slice %44 {offsets = [8, 0], sizes = [8, 512], strides = [1, 1]} : vector<48x512xf32> to vector<8x512xf32>
      %49 = arith.truncf %48 : vector<8x512xf32> to vector<8x512xbf16>
      %c0_25 = arith.constant 0 : index
      %c0_26 = arith.constant 0 : index
      %50 = vector.load %arg7[%c0_25, %c0_26] : memref<8x1024xbf16, #tpu.memory_space<vmem>>, vector<8x512xbf16>
      tpu.vector_store %arg7[%c0_25, %c0_26], %49 {strides = array<i32>} : memref<8x1024xbf16, #tpu.memory_space<vmem>>, vector<8x512xbf16>,
      %51 = vector.extract_strided_slice %44 {offsets = [16, 0], sizes = [32, 512], strides = [1, 1]} : vector<48x512xf32> to vector<32x512xf32>
      %52 = arith.truncf %51 : vector<32x512xf32> to vector<32x512xbf16>
      %c0_27 = arith.constant 0 : index
      %c0_28 = arith.constant 0 : index
      %53 = vector.load %arg8[%c0_27, %c0_28] : memref<40x1024xbf16, #tpu.memory_space<vmem>>, vector<32x512xbf16>
      tpu.vector_store %arg8[%c0_27, %c0_28], %52 {strides = array<i32>} : memref<40x1024xbf16, #tpu.memory_space<vmem>>, vector<32x512xbf16>,
      %c0_29 = arith.constant 0 : index
      %c0_30 = arith.constant 0 : index
      %c512 = arith.constant 512 : index
      %54 = vector.load %arg3[%c0_29, %c0_30, %c512] : memref<1x32x1024xf32, #tpu.memory_space<vmem>>, vector<1x32x512xf32>
      %55 = vector.shape_cast %54 : vector<1x32x512xf32> to vector<32x512xf32>
      %56 = arith.truncf %55 : vector<32x512xf32> to vector<32x512xbf16>
      %cst_31 = arith.constant dense<0.000000e+00> : vector<48x512xf32>
      %57 = tpu.matmul %40, %56, %cst_31 {dimension_numbers = #tpu.dot_dimension_numbers<[1], [0], [0], [1], [0, 0, 1, 1], [], []>} : vector<48x32xbf16>, vector<32x512xbf16>, vector<48x512xf32> -> vector<48x512xf32>
      %58 = vector.extract_strided_slice %57 {offsets = [0, 0], sizes = [8, 512], strides = [1, 1]} : vector<48x512xf32> to vector<8x512xf32>
      %59 = arith.truncf %58 : vector<8x512xf32> to vector<8x512xbf16>
      %c0_32 = arith.constant 0 : index
      %c512_33 = arith.constant 512 : index
      %60 = vector.load %arg6[%c0_32, %c512_33] : memref<8x1024xbf16, #tpu.memory_space<vmem>>, vector<8x512xbf16>
      tpu.vector_store %arg6[%c0_32, %c512_33], %59 {strides = array<i32>} : memref<8x1024xbf16, #tpu.memory_space<vmem>>, vector<8x512xbf16>,
      %61 = vector.extract_strided_slice %57 {offsets = [8, 0], sizes = [8, 512], strides = [1, 1]} : vector<48x512xf32> to vector<8x512xf32>
      %62 = arith.truncf %61 : vector<8x512xf32> to vector<8x512xbf16>
      %c0_34 = arith.constant 0 : index
      %c512_35 = arith.constant 512 : index
      %63 = vector.load %arg7[%c0_34, %c512_35] : memref<8x1024xbf16, #tpu.memory_space<vmem>>, vector<8x512xbf16>
      tpu.vector_store %arg7[%c0_34, %c512_35], %62 {strides = array<i32>} : memref<8x1024xbf16, #tpu.memory_space<vmem>>, vector<8x512xbf16>,
      %64 = vector.extract_strided_slice %57 {offsets = [16, 0], sizes = [32, 512], strides = [1, 1]} : vector<48x512xf32> to vector<32x512xf32>
      %65 = arith.truncf %64 : vector<32x512xf32> to vector<32x512xbf16>
      %c0_36 = arith.constant 0 : index
      %c512_37 = arith.constant 512 : index
      %66 = vector.load %arg8[%c0_36, %c512_37] : memref<40x1024xbf16, #tpu.memory_space<vmem>>, vector<32x512xbf16>
      tpu.vector_store %arg8[%c0_36, %c512_37], %65 {strides = array<i32>} : memref<40x1024xbf16, #tpu.memory_space<vmem>>, vector<32x512xbf16>,
    } else {
    }
    %c512_i32 = arith.constant 512 : i32
    %3 = arith.muli %arg1, %c512_i32 : i32
    %4 = tpu.assume_multiple %3, 512 : i32
    %c0 = arith.constant 0 : index
    %c0_1 = arith.constant 0 : index
    %5 = vector.load %arg6[%c0, %c0_1] : memref<8x1024xbf16, #tpu.memory_space<vmem>>, vector<8x1024xbf16>
    %c0_2 = arith.constant 0 : index
    %6 = arith.index_cast %4 : i32 to index
    %7 = vector.load %arg7[%c0_2, %6] : memref<8x1024xbf16, #tpu.memory_space<vmem>>, vector<8x512xbf16>
    %cst = arith.constant dense<0.000000e+00> : vector<1024x512xf32>
    %8 = tpu.matmul %5, %7, %cst {dimension_numbers = #tpu.dot_dimension_numbers<[0], [0], [1], [1], [0, 1, 1, 1], [], []>} : vector<8x1024xbf16>, vector<8x512xbf16>, vector<1024x512xf32> -> vector<1024x512xf32>
    %cst_3 = arith.constant dense<0xFF800000> : vector<512xf32>
    %9 = vector.multi_reduction <maximumf>, %8, %cst_3 [0] : vector<1024x512xf32> to vector<512xf32>
    %10 = vector.shape_cast %9 : vector<512xf32> to vector<1x512xf32>
    %11 = vector.broadcast %10 : vector<1x512xf32> to vector<1024x512xf32>
    %12 = arith.subf %8, %11 : vector<1024x512xf32>
    %13 = math.exp %12 : vector<1024x512xf32>
    %14 = arith.truncf %13 : vector<1024x512xf32> to vector<1024x512xbf16>
    %c0_4 = arith.constant 0 : index
    %c0_5 = arith.constant 0 : index
    %15 = vector.load %arg8[%c0_4, %c0_5] : memref<40x1024xbf16, #tpu.memory_space<vmem>>, vector<40x1024xbf16>
    %cst_6 = arith.constant dense<0.000000e+00> : vector<40x512xf32>
    %16 = tpu.matmul %15, %14, %cst_6 {dimension_numbers = #tpu.dot_dimension_numbers<[1], [0], [0], [1], [0, 0, 1, 1], [], []>} : vector<40x1024xbf16>, vector<1024x512xbf16>, vector<40x512xf32> -> vector<40x512xf32>
    %17 = vector.extract_strided_slice %16 {offsets = [0, 0], sizes = [32, 512], strides = [1, 1]} : vector<40x512xf32> to vector<32x512xf32>
    %18 = vector.extract_strided_slice %16 {offsets = [32, 0], sizes = [1, 512], strides = [1, 1]} : vector<40x512xf32> to vector<1x512xf32>
    %c0_7 = arith.constant 0 : index
    %19 = memref.load %arg2[%c0_7] : memref<1xf32, #tpu.memory_space<smem>>
    %20 = tpu.reciprocal %18 {approx = true} : vector<1x512xf32> -> vector<1x512xf32>
    %21 = vector.broadcast %19 : f32 to vector<1x512xf32>
    %22 = arith.mulf %21, %20 : vector<1x512xf32>
    %c0_8 = arith.constant 0 : index
    %c0_9 = arith.constant 0 : index
    %23 = arith.index_cast %4 : i32 to index
    %24 = vector.load %arg3[%c0_8, %c0_9, %23] : memref<1x32x1024xf32, #tpu.memory_space<vmem>>, vector<1x32x512xf32>
    %25 = vector.shape_cast %24 : vector<1x32x512xf32> to vector<32x512xf32>
    %26 = vector.broadcast %22 : vector<1x512xf32> to vector<32x512xf32>
    %27 = arith.mulf %17, %26 : vector<32x512xf32>
    %28 = arith.addf %27, %25 : vector<32x512xf32>
    %c0_10 = arith.constant 0 : index
    %c0_11 = arith.constant 0 : index
    %c0_12 = arith.constant 0 : index
    %29 = vector.load %arg5[%c0_10, %c0_11, %c0_12] : memref<1x32x512xf32, #tpu.memory_space<vmem>>, vector<1x32x512xf32>
    %30 = vector.shape_cast %29 : vector<1x32x512xf32> to vector<32x512xf32>
    %31 = vector.shape_cast %28 : vector<32x512xf32> to vector<1x32x512xf32>
    tpu.vector_store %arg5[%c0_10, %c0_11, %c0_12], %31 {strides = array<i32>} : memref<1x32x512xf32, #tpu.memory_space<vmem>>, vector<1x32x512xf32>,
    return
  }
  func.func @transform_0(%arg0: i32, %arg1: i32) -> i32 {
    %c0_i32 = arith.constant 0 : i32
    %c0_i32_0 = arith.constant 0 : i32
    return %c0_i32 : i32
  }
  func.func @transform_1(%arg0: i32, %arg1: i32) -> (i32, i32, i32) {
    %c0_i32 = arith.constant 0 : i32
    %c0_i32_0 = arith.constant 0 : i32
    %c0_i32_1 = arith.constant 0 : i32
    return %arg0, %c0_i32, %c0_i32_0 : i32, i32, i32
  }
  func.func @transform_2(%arg0: i32, %arg1: i32) -> (i32, i32) {
    %c0_i32 = arith.constant 0 : i32
    %c0_i32_0 = arith.constant 0 : i32
    %c0_i32_1 = arith.constant 0 : i32
    return %c0_i32, %c0_i32_0 : i32, i32
  }
  func.func @transform_3(%arg0: i32, %arg1: i32) -> (i32, i32, i32) {
    %c0_i32 = arith.constant 0 : i32
    %c0_i32_0 = arith.constant 0 : i32
    return %arg0, %c0_i32, %arg1 : i32, i32, i32
  }
}

</mosaic_0001>

<llo_original>
// kernel: tpu_custom_call.1
$region0: #{tpu_custom_call.1}
  #allocation0 [shape = 'u32[]', space=smem, size = 0x4, offset = 0x4, fixed_abs, tag = 'smem constant byte address 0x4 - core index']
  #allocation1 [shape = 'u32[144,128]{1,0:T(1,128)}', space=vmem, size = 0x12000, scoped, tag = 'internal scratch']
  #allocation2 [shape = 'bf16[8,1024]{1,0:T(8,128)(2,1)}', space=vmem, size = 0x4000, scoped, tag = 'scratch operand']
  #allocation3 [shape = 'bf16[8,1024]{1,0:T(8,128)(2,1)}', space=vmem, size = 0x4000, scoped, tag = 'scratch operand']
  #allocation4 [shape = 'bf16[40,1024]{1,0:T(8,128)(2,1)}', space=vmem, size = 0x14000, scoped, tag = 'scratch operand']
  #allocation5 [shape = 'f32[1]{0:T(128)S(6)}', space=smem, size = 0x200, scoped, tag = 'scoped memory for tpu_custom_call.1']
  %s0 = inlined_call_operand.<no memory space> [shape: f32[1], index: 0, kind: input, shape index: {}]
  %s1 = inlined_call_operand.hbm [shape: f32[2,32,1024], index: 1, kind: input, shape index: {}]
  %s2 = inlined_call_operand.vmem [shape: bf16[48,32], index: 2, kind: input, shape index: {}]
  %s3 = inlined_call_operand.hbm [shape: f32[2,32,1024], index: 3, kind: output, shape index: {}]
  %s4 = sld [smem:[#allocation0]]
  $region53: #{tpu_custom_call.1} parent=0
    _
  %s6 = ssub.s32 1, %s4
  %s7 = scalar_select 0, %s6, %s4
  %8 = sst [smem:[#allocation5]] %s0
  $region1: #{tpu_custom_call.1} parent=0
    #allocation6 [shape = 'u8[262144]{0}', space=vmem, size = 0x40000, scoped, tag = 'input window, operand 1']
    #allocation7 [shape = 's32[2]{0}', space=sflag, size = 0x8, scoped, tag = 'scoped memory for tpu_custom_call.1']
    #allocation8 [shape = 's32[2]{0}', space=sflag, size = 0x8, scoped, tag = 'scoped memory for tpu_custom_call.1']
    #allocation9 [shape = 'u8[131072]{0}', space=vmem, size = 0x20000, scoped, tag = 'output window, operand 0']
    %9 = vsyncpa [#allocation7], 0
    %s10 = scalar_lea.sflag [#allocation7], 1
    %11 = vsyncpa %s10, 0
    %12 = vsyncpa [#allocation8], 0
    %s13 = scalar_lea.sflag [#allocation8], 1
    %14 = vsyncpa %s13, 0
    loop: start=0, step=1, limit=6
    $region2: #{tpu_custom_call.1} parent=1 // loop_pre_header
      _
    $region3: #{tpu_custom_call.1} parent=1 // loop_header
      %s16 = sphi 0, %s20
      %p17 = scmp.ge.s32.totalorder %s16, 6
      %s23 = sphi 0, %s35
      %s24 = sphi 0, %s31
      %s25 = sphi 0, %s23
      %s26 = sphi 0, %s24
      %s27 = sphi 0, %s25
      %s28 = sphi 0, %s26
      %s36 = sphi 0, %s36
      %s38 = sphi 0, %s36
      %s39 = sphi 0, %s38
      %s53 = sphi 0, %s39
      %s59 = sphi 0, %s61
      %s62 = sphi 0, %s59
      %s63 = sphi 0, %s62
      %s79 = sphi 0, %s63
      %s83 = sphi 0, %s83
      %s85 = sphi 0, %s83
      %s86 = sphi 0, %s85
      %s100 = sphi 0, %s86
      %s108 = sphi 0, %s110
      %s111 = sphi 0, %s108
      %s112 = sphi 0, %s111
      %s128 = sphi 0, %s112
    $region4: #{tpu_custom_call.1} parent=1 // loop_header_branch
      %19 = sbr.rel (%p17) target = $region8
    $region5: #{tpu_custom_call.1} parent=1 // loop_body
      %s21 = ssub.s32 %s16, 1
      %s22 = ssub.s32 %s16, 2
      %s29 = sadd.s32 1, %s24
      %p30 = scmp.ge.s32.totalorder %s29, 2
      %s31 = scalar_select %p30, 0, %s29
      %s32 = sadd.s32 1, %s23
      %s33 = scalar_select %p30, %s32, %s23
      %p34 = scmp.ge.s32.totalorder %s33, 2
      %s35 = scalar_select %p34, 0, %s33
      %s37 = sadd.s32 %s36, 1
      %p40 = scmp.eq.s32.totalorder %s16, 3
      %p41 = scmp.ne.s32.totalorder %s36, %s38
      %p42 = scmp.eq.s32.totalorder %s16, 0
      %p43 = por %p41, %p42
      %p44 = scmp.ne.s32.totalorder %s36, %s38
      %p45 = scmp.eq.s32.totalorder %s21, 3
      %p46 = por %p44, %p45
      %p47 = scmp.ne.s32.totalorder %s38, %s39
      %p48 = scmp.eq.s32.totalorder %s21, 0
      %p49 = por %p47, %p48
      %p50 = scmp.ne.s32.totalorder %s38, %s39
      %p51 = scmp.eq.s32.totalorder %s22, 3
      %p52 = por %p50, %p51
      %p54 = scmp.ne.s32.totalorder %s39, %s53
      %p55 = scmp.eq.s32.totalorder %s22, 0
      %p56 = por %p54, %p55
      %s57 = ssub.s32 %s23, %s35
      %p58 = scmp.eq.s32.totalorder %s57, 0
      %s60 = sadd.s32 %s59, 1
      %s61 = scalar_select %p58, %s59, %s60
      %p64 = pneg %p58
      %p65 = scmp.eq.s32.totalorder %s16, 3
      %p66 = por %p64, %p65
      %p67 = scmp.ne.s32.totalorder %s59, %s62
      %p68 = scmp.eq.s32.totalorder %s16, 0
      %p69 = por %p67, %p68
      %p70 = scmp.ne.s32.totalorder %s59, %s62
      %p71 = scmp.eq.s32.totalorder %s21, 3
      %p72 = por %p70, %p71
      %p73 = scmp.ne.s32.totalorder %s62, %s63
      %p74 = scmp.eq.s32.totalorder %s21, 0
      %p75 = por %p73, %p74
      %p76 = scmp.ne.s32.totalorder %s62, %s63
      %p77 = scmp.eq.s32.totalorder %s22, 3
      %p78 = por %p76, %p77
      %p80 = scmp.ne.s32.totalorder %s63, %s79
      %p81 = scmp.eq.s32.totalorder %s22, 0
      %p82 = por %p80, %p81
      %s84 = sadd.s32 %s83, 1
      %p87 = scmp.eq.s32.totalorder %s16, 3
      %p88 = scmp.ne.s32.totalorder %s83, %s85
      %p89 = scmp.eq.s32.totalorder %s16, 0
      %p90 = por %p88, %p89
      %p91 = scmp.ne.s32.totalorder %s83, %s85
      %p92 = scmp.eq.s32.totalorder %s21, 3
      %p93 = por %p91, %p92
      %p94 = scmp.ne.s32.totalorder %s85, %s86
      %p95 = scmp.eq.s32.totalorder %s21, 0
      %p96 = por %p94, %p95
      %p97 = scmp.ne.s32.totalorder %s85, %s86
      %p98 = scmp.eq.s32.totalorder %s22, 3
      %p99 = por %p97, %p98
      %p101 = scmp.ne.s32.totalorder %s86, %s100
      %p102 = scmp.eq.s32.totalorder %s22, 0
      %p103 = por %p101, %p102
      %s104 = ssub.s32 %s23, %s35
      %s105 = ssub.s32 %s24, %s31
      %s106 = sor.u32 %s104, %s105
      %p107 = scmp.eq.s32.totalorder %s106, 0
      %s109 = sadd.s32 %s108, 1
      %s110 = scalar_select %p107, %s108, %s109
      %p113 = pneg %p107
      %p114 = scmp.eq.s32.totalorder %s16, 3
      %p115 = por %p113, %p114
      %p116 = scmp.ne.s32.totalorder %s108, %s111
      %p117 = scmp.eq.s32.totalorder %s16, 0
      %p118 = por %p116, %p117
      %p119 = scmp.ne.s32.totalorder %s108, %s111
      %p120 = scmp.eq.s32.totalorder %s21, 3
      %p121 = por %p119, %p120
      %p122 = scmp.ne.s32.totalorder %s111, %s112
      %p123 = scmp.eq.s32.totalorder %s21, 0
      %p124 = por %p122, %p123
      %p125 = scmp.ne.s32.totalorder %s111, %s112
      %p126 = scmp.eq.s32.totalorder %s22, 3
      %p127 = por %p125, %p126
      %p129 = scmp.ne.s32.totalorder %s112, %s128
      %p130 = scmp.eq.s32.totalorder %s22, 0
      %p131 = por %p129, %p130
      %p132 = scmp.le.s32.totalorder 1, %s16
      %p133 = scmp.lt.s32.totalorder %s16, 5
      %p134 = pnand %p132, %p133
      %p135 = pneg %p134
      // Predicated region
      $region9: #{tpu_custom_call.1} parent=5 // pred_check
        _
      $region10: #{tpu_custom_call.1} parent=5 // pred_check_branch
        %137 = sbr.rel (%p134) target = $region12
      $region11: #{tpu_custom_call.1} parent=5 // pred_region
        %s138 = ssub.s32 %s16, 1
        // Predicated region
        $region13: #{tpu_custom_call.1} parent=11 // pred_check
          %p139 = pneg %p49
        $region14: #{tpu_custom_call.1} parent=11 // pred_check_branch
          %141 = sbr.rel (%p139) target = $region16
        $region15: #{tpu_custom_call.1} parent=11 // pred_region
          _
        $region16: #{tpu_custom_call.1} parent=11 // pred_fallthru
          _
        // Predicated region
        $region17: #{tpu_custom_call.1} parent=11 // pred_check
          %p142 = pneg %p96
        $region18: #{tpu_custom_call.1} parent=11 // pred_check_branch
          %144 = sbr.rel (%p142) target = $region20
        $region19: #{tpu_custom_call.1} parent=11 // pred_region
          _
        $region20: #{tpu_custom_call.1} parent=11 // pred_fallthru
          _
      $region12: #{tpu_custom_call.1} parent=5 // pred_fallthru
        _
      %p145 = scmp.lt.s32.totalorder %s16, 4
      // Predicated region
      $region21: #{tpu_custom_call.1} parent=5 // pred_check
        %p146 = pneg %p145
      $region22: #{tpu_custom_call.1} parent=5 // pred_check_branch
        %148 = sbr.rel (%p146) target = $region24
      $region23: #{tpu_custom_call.1} parent=5 // pred_region
        // Predicated region
        $region25: #{tpu_custom_call.1} parent=23 // pred_check
          %p149 = pneg %p69
        $region26: #{tpu_custom_call.1} parent=23 // pred_check_branch
          %151 = sbr.rel (%p149) target = $region28
        $region27: #{tpu_custom_call.1} parent=23 // pred_region
          %s152 = sand.u32 %s59, 1
          %s153 = scalar_lea.sflag [#allocation7], %s152
          %s154 = sand.u32 %s59, 1
          %s155 = smul.addr %s154, 256
          %s156 = scalar_lea.vmem [#allocation6], %s155
          %s158 = ssub.s32 4096, 4096
          %159 = vsyncadd %s153, %s158
          %s160 = smul.addr %s23, 32
          %s161 = smul.addr %s160, 128
          %s162 = scalar_lea.hbm %s1, %s161
          %s163 = sshll.u32 %s156, 4
          %s164 = int_to_ptr.vmem [resolvable:$true] %s163
          %169 = dma.hbm_to_vmem [thread:$0]  %s162, 4096, %s164, %s153, 1024, 1024, 64
        $region28: #{tpu_custom_call.1} parent=23 // pred_fallthru
          _
      $region24: #{tpu_custom_call.1} parent=5 // pred_fallthru
        _
      %p170 = scmp.le.s32.totalorder 1, %s16
      %p171 = scmp.lt.s32.totalorder %s16, 5
      %p172 = pnand %p170, %p171
      %p173 = pneg %p172
      // Predicated region
      $region29: #{tpu_custom_call.1} parent=5 // pred_check
        _
      $region30: #{tpu_custom_call.1} parent=5 // pred_check_branch
        %175 = sbr.rel (%p172) target = $region32
      $region31: #{tpu_custom_call.1} parent=5 // pred_region
        %s176 = ssub.s32 %s16, 1
        %s177 = sand.u32 %s62, 1
        %s178 = scalar_lea.sflag [#allocation7], %s177
        %s179 = sand.u32 %s62, 1
        %s180 = smul.addr %s179, 256
        %s181 = scalar_lea.vmem [#allocation6], %s180
        // Predicated region
        $region33: #{tpu_custom_call.1} parent=31 // pred_check
          %p182 = pneg %p75
        $region34: #{tpu_custom_call.1} parent=31 // pred_check_branch
          %184 = sbr.rel (%p182) target = $region36
        $region35: #{tpu_custom_call.1} parent=31 // pred_region
          %185 = dma.done %s178, 4096
        $region36: #{tpu_custom_call.1} parent=31 // pred_fallthru
          _
        %p186 = pneg %p49
        %p187 = pneg %p46
        %s188 = sand.u32 %s62, 1
        %s189 = scalar_lea.sflag [#allocation7], %s188
        %s190 = sand.u32 %s62, 1
        %s191 = smul.addr %s190, 256
        %s192 = scalar_lea.vmem [#allocation6], %s191
        %p193 = pneg %p75
        %p194 = pneg %p72
        %p195 = pneg %p96
        %p196 = pneg %p93
        %p197 = pneg %p124
        %p198 = pneg %p121
        %s199 = sand.u32 %s111, 1
        %s200 = scalar_lea.sflag [#allocation8], %s199
        %s201 = sand.u32 %s111, 1
        %s202 = smul.addr %s201, 128
        %s203 = scalar_lea.vmem [#allocation9], %s202
        %s204 = smul.u32 4, %s26
        %p206 = scmp.eq.s32.totalorder %s26, 0
        // Predicated region
        $region37: #{tpu_custom_call.1} parent=31 // pred_check
          %p207 = pneg %p206
        $region38: #{tpu_custom_call.1} parent=31 // pred_check_branch
          %209 = sbr.rel (%p207) target = $region40
        $region39: #{tpu_custom_call.1} parent=31 // pred_region
          %v210 = vlaneseq
          %v211 = vshrl.u32 %v210, 7
          %vm212 = vcmp.eq.s32.totalorder %v211, 0
          %v213 = vsel %vm212, 1.0, 0.0
          %v214 = vpack.c.bf16 %v213, %v213
          %v217 = vunpack.c.l.s4 839922192
          %v218 = vunpack.c.0.s8 %v217
          %v219 = vlaneseq
          %v220 = vshrl.u32 %v219, 7
          %v221 = vsub.s32 %v218, %v220
          %v222 = vrot.slane %v214, %v221
          %224 = vst [vmem:[#allocation4 + $0x80] sm:$0xff] %v222
          %225 = vst [vmem:[#allocation4 + $0x88] sm:$0xff] %v222
          %226 = vst [vmem:[#allocation4 + $0x90] sm:$0xff] %v222
          %227 = vst [vmem:[#allocation4 + $0x98] sm:$0xff] %v222
          %v228 = vld [vmem:[%s2] sm:$0xf]
          %v229 = vld [vmem:[%s2 + $0x4] sm:$0xf]
          %v230 = vld [vmem:[%s2 + $0x8] sm:$0xf]
          %v231 = vld [vmem:[%s2 + $0xc] sm:$0xf]
          %v232 = vld [vmem:[%s2 + $0x10] sm:$0xf]
          %v233 = vld [vmem:[%s2 + $0x14] sm:$0xf]
          %v234 = vld [vmem:[%s181] sm:$0xff]
          %v235 = vld [vmem:[%s181 + $0x8] sm:$0xff]
          %v236 = vld [vmem:[%s181 + $0x10] sm:$0xff]
          %v237 = vld [vmem:[%s181 + $0x18] sm:$0xff]
          %v238 = vld [vmem:[%s181 + $0x40] sm:$0xff]
          %v239 = vld [vmem:[%s181 + $0x48] sm:$0xff]
          %v240 = vld [vmem:[%s181 + $0x50] sm:$0xff]
          %v241 = vld [vmem:[%s181 + $0x58] sm:$0xff]
          %v242 = vld [vmem:[%s181 + $0x80] sm:$0xff]
          %v243 = vld [vmem:[%s181 + $0x88] sm:$0xff]
          %v244 = vld [vmem:[%s181 + $0x90] sm:$0xff]
          %v245 = vld [vmem:[%s181 + $0x98] sm:$0xff]
          %v246 = vld [vmem:[%s181 + $0xc0] sm:$0xff]
          %v247 = vld [vmem:[%s181 + $0xc8] sm:$0xff]
          %v248 = vld [vmem:[%s181 + $0xd0] sm:$0xff]
          %v249 = vld [vmem:[%s181 + $0xd8] sm:$0xff]
          %v250 = vpack.c.bf16 %v238, %v234
          %v251 = vpack.c.bf16 %v239, %v235
          %v252 = vpack.c.bf16 %v240, %v236
          %v253 = vpack.c.bf16 %v241, %v237
          %v254 = vpack.c.bf16 %v246, %v242
          %v255 = vpack.c.bf16 %v247, %v243
          %v256 = vpack.c.bf16 %v248, %v244
          %v257 = vpack.c.bf16 %v249, %v245
          %v264 = vunpack.c.l.b16 %v228
          %v265 = vunpack.c.l.b16 %v229
          %v266 = vunpack.c.l.b16 %v230
          %v267 = vunpack.c.l.b16 %v231
          %v268 = vunpack.c.l.b16 %v232
          %v269 = vunpack.c.l.b16 %v233
          %v270 = vpack.c.b16 %v265, %v264
          %v271 = vpack.c.b16 %v267, %v266
          %v272 = vpack.c.b16 %v269, %v268
          %vm273 = vcmask 261120
          %v275 = vsel %vm273, %v270, 0
          %v278 = vsel %vm273, %v271, 0
          %v281 = vsel %vm273, %v272, 0
          %283 = vmatprep.subr.bf16.mxu0 %v251
          %284 = vmatpush1.bf16.msra.mxu0 %v250
          %285 = vmatprep.subr.bf16.mxu0 %v255
          %286 = vmatpush1.bf16.msra.mxu0 %v254
          %287 = vmatprep.subr.bf16.mxu0 0
          %288 = vmatpush1.bf16.msra.mxu0 0
          %289 = vmatprep.subr.bf16.mxu0 0
          %290 = vmatpush1.bf16.msra.mxu0 0
          %291 = vmatprep.subr.bf16.mxu0 0
          %292 = vmatpush1.bf16.msra.mxu0 0
          %293 = vmatprep.subr.bf16.mxu0 0
          %294 = vmatpush1.bf16.msra.mxu0 0
          %295 = vmatprep.subr.bf16.mxu0 0
          %296 = vmatpush1.bf16.msra.mxu0 0
          %297 = vmatprep.subr.bf16.mxu0 0
          %298 = vmatpush1.bf16.msra.mxu0 0
          %299 = vmatprep.subr.bf16.mxu0 0
          %300 = vmatpush1.bf16.msra.mxu0 0
          %301 = vmatprep.subr.bf16.mxu0 0
          %302 = vmatpush1.bf16.msra.mxu0 0
          %303 = vmatprep.subr.bf16.mxu0 0
          %304 = vmatpush1.bf16.msra.mxu0 0
          %305 = vmatprep.subr.bf16.mxu0 0
          %306 = vmatpush1.bf16.msra.mxu0 0
          %307 = vmatprep.subr.bf16.mxu0 0
          %308 = vmatpush1.bf16.msra.mxu0 0
          %309 = vmatprep.subr.bf16.mxu0 0
          %310 = vmatpush1.bf16.msra.mxu0 0
          %311 = vmatprep.subr.bf16.mxu0 0
          %312 = vmatpush1.bf16.msra.mxu0 0
          %313 = vmatprep.subr.bf16.mxu0 0
          %314 = vmatpush1.bf16.msra.mxu0 0
          %315 = vmatprep.mubr.bf16.mxu0 0
          %316 = vmatmul.mubr.bf16.gmra.mrb[0].mxu0 %v275
          %v317 = vpop.f32.mrb[0].mxu0
          %v318 = vadd.f32 0.0, %v317
          %v319 = vpop.f32.mrb[0].mxu0
          %v320 = vadd.f32 0.0, %v319
          %v321 = vpop.f32.mrb[0].mxu0
          %v322 = vadd.f32 0.0, %v321
          %v323 = vpop.f32.mrb[0].mxu0
          %v324 = vadd.f32 0.0, %v323
          %325 = vmatprep.mubr.bf16.mxu0 0
          %326 = vmatmul.mubr.bf16.gmra.mrb[0].mxu0 %v278
          %v327 = vpop.f32.mrb[0].mxu0
          %v328 = vadd.f32 0.0, %v327
          %v329 = vpop.f32.mrb[0].mxu0
          %v330 = vadd.f32 0.0, %v329
          %v331 = vpop.f32.mrb[0].mxu0
          %v332 = vadd.f32 0.0, %v331
          %v333 = vpop.f32.mrb[0].mxu0
          %v334 = vadd.f32 0.0, %v333
          %335 = vmatprep.mubr.bf16.mxu0 0
          %336 = vmatmul.mubr.bf16.gmra.mrb[0].mxu0 %v281
          %v337 = vpop.f32.mrb[0].mxu0
          %v338 = vadd.f32 0.0, %v337
          %v339 = vpop.f32.mrb[0].mxu0
          %v340 = vadd.f32 0.0, %v339
          %v341 = vpop.f32.mrb[0].mxu0
          %v342 = vadd.f32 0.0, %v341
          %v343 = vpop.f32.mrb[0].mxu0
          %v344 = vadd.f32 0.0, %v343
          %345 = vdwg.mxu0
          %346 = vmatprep.subr.bf16.mxu0 %v253
          %347 = vmatpush1.bf16.msra.mxu0 %v252
          %348 = vmatprep.subr.bf16.mxu0 %v257
          %349 = vmatpush1.bf16.msra.mxu0 %v256
          %350 = vmatprep.subr.bf16.mxu0 0
          %351 = vmatpush1.bf16.msra.mxu0 0
          %352 = vmatprep.subr.bf16.mxu0 0
          %353 = vmatpush1.bf16.msra.mxu0 0
          %354 = vmatprep.subr.bf16.mxu0 0
          %355 = vmatpush1.bf16.msra.mxu0 0
          %356 = vmatprep.subr.bf16.mxu0 0
          %357 = vmatpush1.bf16.msra.mxu0 0
          %358 = vmatprep.subr.bf16.mxu0 0
          %359 = vmatpush1.bf16.msra.mxu0 0
          %360 = vmatprep.subr.bf16.mxu0 0
          %361 = vmatpush1.bf16.msra.mxu0 0
          %362 = vmatprep.subr.bf16.mxu0 0
          %363 = vmatpush1.bf16.msra.mxu0 0
          %364 = vmatprep.subr.bf16.mxu0 0
          %365 = vmatpush1.bf16.msra.mxu0 0
          %366 = vmatprep.subr.bf16.mxu0 0
          %367 = vmatpush1.bf16.msra.mxu0 0
          %368 = vmatprep.subr.bf16.mxu0 0
          %369 = vmatpush1.bf16.msra.mxu0 0
          %370 = vmatprep.subr.bf16.mxu0 0
          %371 = vmatpush1.bf16.msra.mxu0 0
          %372 = vmatprep.subr.bf16.mxu0 0
          %373 = vmatpush1.bf16.msra.mxu0 0
          %374 = vmatprep.subr.bf16.mxu0 0
          %375 = vmatpush1.bf16.msra.mxu0 0
          %376 = vmatprep.subr.bf16.mxu0 0
          %377 = vmatpush1.bf16.msra.mxu0 0
          %378 = vmatprep.mubr.bf16.mxu0 0
          %379 = vmatmul.mubr.bf16.gmra.mrb[0].mxu0 %v275
          %v380 = vpop.f32.mrb[0].mxu0
          %v381 = vadd.f32 0.0, %v380
          %v382 = vpop.f32.mrb[0].mxu0
          %v383 = vadd.f32 0.0, %v382
          %v384 = vpop.f32.mrb[0].mxu0
          %v385 = vadd.f32 0.0, %v384
          %v386 = vpop.f32.mrb[0].mxu0
          %v387 = vadd.f32 0.0, %v386
          %388 = vmatprep.mubr.bf16.mxu0 0
          %389 = vmatmul.mubr.bf16.gmra.mrb[0].mxu0 %v278
          %v390 = vpop.f32.mrb[0].mxu0
          %v391 = vadd.f32 0.0, %v390
          %v392 = vpop.f32.mrb[0].mxu0
          %v393 = vadd.f32 0.0, %v392
          %v394 = vpop.f32.mrb[0].mxu0
          %v395 = vadd.f32 0.0, %v394
          %v396 = vpop.f32.mrb[0].mxu0
          %v397 = vadd.f32 0.0, %v396
          %398 = vmatprep.mubr.bf16.mxu0 0
          %399 = vmatmul.mubr.bf16.gmra.mrb[0].mxu0 %v281
          %v400 = vpop.f32.mrb[0].mxu0
          %v401 = vadd.f32 0.0, %v400
          %v402 = vpop.f32.mrb[0].mxu0
          %v403 = vadd.f32 0.0, %v402
          %v404 = vpop.f32.mrb[0].mxu0
          %v405 = vadd.f32 0.0, %v404
          %v406 = vpop.f32.mrb[0].mxu0
          %v407 = vadd.f32 0.0, %v406
          %408 = vdwg.mxu0
          %v409 = vpack.c.bf16 %v318, %v318
          %v410 = vpack.c.bf16 %v320, %v320
          %v411 = vpack.c.bf16 %v381, %v381
          %v412 = vpack.c.bf16 %v383, %v383
          %v417 = vunpack.c.l.b16 %v409
          %v418 = vunpack.c.l.b16 %v410
          %v419 = vunpack.c.l.b16 %v411
          %v420 = vunpack.c.l.b16 %v412
          %v421 = vpack.c.b16 %v418, %v417
          %v422 = vpack.c.b16 %v420, %v419
          %425 = vst [vmem:[#allocation2] sm:$0xff] %v421
          %426 = vst [vmem:[#allocation2 + $0x8] sm:$0xff] %v422
          %v427 = vpack.c.bf16 %v322, %v322
          %v428 = vpack.c.bf16 %v324, %v324
          %v429 = vpack.c.bf16 %v385, %v385
          %v430 = vpack.c.bf16 %v387, %v387
          %v435 = vunpack.c.l.b16 %v427
          %v436 = vunpack.c.l.b16 %v428
          %v437 = vunpack.c.l.b16 %v429
          %v438 = vunpack.c.l.b16 %v430
          %v439 = vpack.c.b16 %v436, %v435
          %v440 = vpack.c.b16 %v438, %v437
          %443 = vst [vmem:[#allocation3] sm:$0xff] %v439
          %444 = vst [vmem:[#allocation3 + $0x8] sm:$0xff] %v440
          %v445 = vpack.c.bf16 %v332, %v328
          %v446 = vpack.c.bf16 %v334, %v330
          %v447 = vpack.c.bf16 %v395, %v391
          %v448 = vpack.c.bf16 %v397, %v393
          %v449 = vpack.c.bf16 %v342, %v338
          %v450 = vpack.c.bf16 %v344, %v340
          %v451 = vpack.c.bf16 %v405, %v401
          %v452 = vpack.c.bf16 %v407, %v403
          %v461 = vunpack.c.l.b16 %v445
          %v462 = vunpack.c.l.b16 %v446
          %v463 = vunpack.c.l.b16 %v447
          %v464 = vunpack.c.l.b16 %v448
          %v465 = vunpack.c.h.b16 %v445
          %v466 = vunpack.c.h.b16 %v446
          %v467 = vunpack.c.h.b16 %v447
          %v468 = vunpack.c.h.b16 %v448
          %v469 = vunpack.c.l.b16 %v449
          %v470 = vunpack.c.l.b16 %v450
          %v471 = vunpack.c.l.b16 %v451
          %v472 = vunpack.c.l.b16 %v452
          %v473 = vunpack.c.h.b16 %v449
          %v474 = vunpack.c.h.b16 %v450
          %v475 = vunpack.c.h.b16 %v451
          %v476 = vunpack.c.h.b16 %v452
          %v477 = vpack.c.b16 %v462, %v461
          %v478 = vpack.c.b16 %v464, %v463
          %v479 = vpack.c.b16 %v466, %v465
          %v480 = vpack.c.b16 %v468, %v467
          %v481 = vpack.c.b16 %v470, %v469
          %v482 = vpack.c.b16 %v472, %v471
          %v483 = vpack.c.b16 %v474, %v473
          %v484 = vpack.c.b16 %v476, %v475
          %493 = vst [vmem:[#allocation4] sm:$0xff] %v477
          %494 = vst [vmem:[#allocation4 + $0x8] sm:$0xff] %v478
          %495 = vst [vmem:[#allocation4 + $0x20] sm:$0xff] %v479
          %496 = vst [vmem:[#allocation4 + $0x28] sm:$0xff] %v480
          %497 = vst [vmem:[#allocation4 + $0x40] sm:$0xff] %v481
          %498 = vst [vmem:[#allocation4 + $0x48] sm:$0xff] %v482
          %499 = vst [vmem:[#allocation4 + $0x60] sm:$0xff] %v483
          %500 = vst [vmem:[#allocation4 + $0x68] sm:$0xff] %v484
          %v501 = vld [vmem:[%s181 + $0x20] sm:$0xff]
          %v502 = vld [vmem:[%s181 + $0x28] sm:$0xff]
          %v503 = vld [vmem:[%s181 + $0x30] sm:$0xff]
          %v504 = vld [vmem:[%s181 + $0x38] sm:$0xff]
          %v505 = vld [vmem:[%s181 + $0x60] sm:$0xff]
          %v506 = vld [vmem:[%s181 + $0x68] sm:$0xff]
          %v507 = vld [vmem:[%s181 + $0x70] sm:$0xff]
          %v508 = vld [vmem:[%s181 + $0x78] sm:$0xff]
          %v509 = vld [vmem:[%s181 + $0xa0] sm:$0xff]
          %v510 = vld [vmem:[%s181 + $0xa8] sm:$0xff]
          %v511 = vld [vmem:[%s181 + $0xb0] sm:$0xff]
          %v512 = vld [vmem:[%s181 + $0xb8] sm:$0xff]
          %v513 = vld [vmem:[%s181 + $0xe0] sm:$0xff]
          %v514 = vld [vmem:[%s181 + $0xe8] sm:$0xff]
          %v515 = vld [vmem:[%s181 + $0xf0] sm:$0xff]
          %v516 = vld [vmem:[%s181 + $0xf8] sm:$0xff]
          %v517 = vpack.c.bf16 %v505, %v501
          %v518 = vpack.c.bf16 %v506, %v502
          %v519 = vpack.c.bf16 %v507, %v503
          %v520 = vpack.c.bf16 %v508, %v504
          %v521 = vpack.c.bf16 %v513, %v509
          %v522 = vpack.c.bf16 %v514, %v510
          %v523 = vpack.c.bf16 %v515, %v511
          %v524 = vpack.c.bf16 %v516, %v512
          %525 = vmatprep.subr.bf16.mxu0 %v518
          %526 = vmatpush1.bf16.msra.mxu0 %v517
          %527 = vmatprep.subr.bf16.mxu0 %v522
          %528 = vmatpush1.bf16.msra.mxu0 %v521
          %529 = vmatprep.subr.bf16.mxu0 0
          %530 = vmatpush1.bf16.msra.mxu0 0
          %531 = vmatprep.subr.bf16.mxu0 0
          %532 = vmatpush1.bf16.msra.mxu0 0
          %533 = vmatprep.subr.bf16.mxu0 0
          %534 = vmatpush1.bf16.msra.mxu0 0
          %535 = vmatprep.subr.bf16.mxu0 0
          %536 = vmatpush1.bf16.msra.mxu0 0
          %537 = vmatprep.subr.bf16.mxu0 0
          %538 = vmatpush1.bf16.msra.mxu0 0
          %539 = vmatprep.subr.bf16.mxu0 0
          %540 = vmatpush1.bf16.msra.mxu0 0
          %541 = vmatprep.subr.bf16.mxu0 0
          %542 = vmatpush1.bf16.msra.mxu0 0
          %543 = vmatprep.subr.bf16.mxu0 0
          %544 = vmatpush1.bf16.msra.mxu0 0
          %545 = vmatprep.subr.bf16.mxu0 0
          %546 = vmatpush1.bf16.msra.mxu0 0
          %547 = vmatprep.subr.bf16.mxu0 0
          %548 = vmatpush1.bf16.msra.mxu0 0
          %549 = vmatprep.subr.bf16.mxu0 0
          %550 = vmatpush1.bf16.msra.mxu0 0
          %551 = vmatprep.subr.bf16.mxu0 0
          %552 = vmatpush1.bf16.msra.mxu0 0
          %553 = vmatprep.subr.bf16.mxu0 0
          %554 = vmatpush1.bf16.msra.mxu0 0
          %555 = vmatprep.subr.bf16.mxu0 0
          %556 = vmatpush1.bf16.msra.mxu0 0
          %557 = vmatprep.mubr.bf16.mxu0 0
          %558 = vmatmul.mubr.bf16.gmra.mrb[0].mxu0 %v275
          %v559 = vpop.f32.mrb[0].mxu0
          %v560 = vadd.f32 0.0, %v559
          %v561 = vpop.f32.mrb[0].mxu0
          %v562 = vadd.f32 0.0, %v561
          %v563 = vpop.f32.mrb[0].mxu0
          %v564 = vadd.f32 0.0, %v563
          %v565 = vpop.f32.mrb[0].mxu0
          %v566 = vadd.f32 0.0, %v565
          %567 = vmatprep.mubr.bf16.mxu0 0
          %568 = vmatmul.mubr.bf16.gmra.mrb[0].mxu0 %v278
          %v569 = vpop.f32.mrb[0].mxu0
          %v570 = vadd.f32 0.0, %v569
          %v571 = vpop.f32.mrb[0].mxu0
          %v572 = vadd.f32 0.0, %v571
          %v573 = vpop.f32.mrb[0].mxu0
          %v574 = vadd.f32 0.0, %v573
          %v575 = vpop.f32.mrb[0].mxu0
          %v576 = vadd.f32 0.0, %v575
          %577 = vmatprep.mubr.bf16.mxu0 0
          %578 = vmatmul.mubr.bf16.gmra.mrb[0].mxu0 %v281
          %v579 = vpop.f32.mrb[0].mxu0
          %v580 = vadd.f32 0.0, %v579
          %v581 = vpop.f32.mrb[0].mxu0
          %v582 = vadd.f32 0.0, %v581
          %v583 = vpop.f32.mrb[0].mxu0
          %v584 = vadd.f32 0.0, %v583
          %v585 = vpop.f32.mrb[0].mxu0
          %v586 = vadd.f32 0.0, %v585
          %587 = vdwg.mxu0
          %588 = vmatprep.subr.bf16.mxu0 %v520
          %589 = vmatpush1.bf16.msra.mxu0 %v519
          %590 = vmatprep.subr.bf16.mxu0 %v524
          %591 = vmatpush1.bf16.msra.mxu0 %v523
          %592 = vmatprep.subr.bf16.mxu0 0
          %593 = vmatpush1.bf16.msra.mxu0 0
          %594 = vmatprep.subr.bf16.mxu0 0
          %595 = vmatpush1.bf16.msra.mxu0 0
          %596 = vmatprep.subr.bf16.mxu0 0
          %597 = vmatpush1.bf16.msra.mxu0 0
          %598 = vmatprep.subr.bf16.mxu0 0
          %599 = vmatpush1.bf16.msra.mxu0 0
          %600 = vmatprep.subr.bf16.mxu0 0
          %601 = vmatpush1.bf16.msra.mxu0 0
          %602 = vmatprep.subr.bf16.mxu0 0
          %603 = vmatpush1.bf16.msra.mxu0 0
          %604 = vmatprep.subr.bf16.mxu0 0
          %605 = vmatpush1.bf16.msra.mxu0 0
          %606 = vmatprep.subr.bf16.mxu0 0
          %607 = vmatpush1.bf16.msra.mxu0 0
          %608 = vmatprep.subr.bf16.mxu0 0
          %609 = vmatpush1.bf16.msra.mxu0 0
          %610 = vmatprep.subr.bf16.mxu0 0
          %611 = vmatpush1.bf16.msra.mxu0 0
          %612 = vmatprep.subr.bf16.mxu0 0
          %613 = vmatpush1.bf16.msra.mxu0 0
          %614 = vmatprep.subr.bf16.mxu0 0
          %615 = vmatpush1.bf16.msra.mxu0 0
          %616 = vmatprep.subr.bf16.mxu0 0
          %617 = vmatpush1.bf16.msra.mxu0 0
          %618 = vmatprep.subr.bf16.mxu0 0
          %619 = vmatpush1.bf16.msra.mxu0 0
          %620 = vmatprep.mubr.bf16.mxu0 0
          %621 = vmatmul.mubr.bf16.gmra.mrb[0].mxu0 %v275
          %v622 = vpop.f32.mrb[0].mxu0
          %v623 = vadd.f32 0.0, %v622
          %v624 = vpop.f32.mrb[0].mxu0
          %v625 = vadd.f32 0.0, %v624
          %v626 = vpop.f32.mrb[0].mxu0
          %v627 = vadd.f32 0.0, %v626
          %v628 = vpop.f32.mrb[0].mxu0
          %v629 = vadd.f32 0.0, %v628
          %630 = vmatprep.mubr.bf16.mxu0 0
          %631 = vmatmul.mubr.bf16.gmra.mrb[0].mxu0 %v278
          %v632 = vpop.f32.mrb[0].mxu0
          %v633 = vadd.f32 0.0, %v632
          %v634 = vpop.f32.mrb[0].mxu0
          %v635 = vadd.f32 0.0, %v634
          %v636 = vpop.f32.mrb[0].mxu0
          %v637 = vadd.f32 0.0, %v636
          %v638 = vpop.f32.mrb[0].mxu0
          %v639 = vadd.f32 0.0, %v638
          %640 = vmatprep.mubr.bf16.mxu0 0
          %641 = vmatmul.mubr.bf16.gmra.mrb[0].mxu0 %v281
          %v642 = vpop.f32.mrb[0].mxu0
          %v643 = vadd.f32 0.0, %v642
          %v644 = vpop.f32.mrb[0].mxu0
          %v645 = vadd.f32 0.0, %v644
          %v646 = vpop.f32.mrb[0].mxu0
          %v647 = vadd.f32 0.0, %v646
          %v648 = vpop.f32.mrb[0].mxu0
          %v649 = vadd.f32 0.0, %v648
          %650 = vdwg.mxu0
          %v651 = vpack.c.bf16 %v560, %v560
          %v652 = vpack.c.bf16 %v562, %v562
          %v653 = vpack.c.bf16 %v623, %v623
          %v654 = vpack.c.bf16 %v625, %v625
          %v659 = vunpack.c.l.b16 %v651
          %v660 = vunpack.c.l.b16 %v652
          %v661 = vunpack.c.l.b16 %v653
          %v662 = vunpack.c.l.b16 %v654
          %v663 = vpack.c.b16 %v660, %v659
          %v664 = vpack.c.b16 %v662, %v661
          %667 = vst [vmem:[#allocation2 + $0x10] sm:$0xff] %v663
          %668 = vst [vmem:[#allocation2 + $0x18] sm:$0xff] %v664
          %v669 = vpack.c.bf16 %v564, %v564
          %v670 = vpack.c.bf16 %v566, %v566
          %v671 = vpack.c.bf16 %v627, %v627
          %v672 = vpack.c.bf16 %v629, %v629
          %v677 = vunpack.c.l.b16 %v669
          %v678 = vunpack.c.l.b16 %v670
          %v679 = vunpack.c.l.b16 %v671
          %v680 = vunpack.c.l.b16 %v672
          %v681 = vpack.c.b16 %v678, %v677
          %v682 = vpack.c.b16 %v680, %v679
          %685 = vst [vmem:[#allocation3 + $0x10] sm:$0xff] %v681
          %686 = vst [vmem:[#allocation3 + $0x18] sm:$0xff] %v682
          %v687 = vpack.c.bf16 %v574, %v570
          %v688 = vpack.c.bf16 %v576, %v572
          %v689 = vpack.c.bf16 %v637, %v633
          %v690 = vpack.c.bf16 %v639, %v635
          %v691 = vpack.c.bf16 %v584, %v580
          %v692 = vpack.c.bf16 %v586, %v582
          %v693 = vpack.c.bf16 %v647, %v643
          %v694 = vpack.c.bf16 %v649, %v645
          %v703 = vunpack.c.l.b16 %v687
          %v704 = vunpack.c.l.b16 %v688
          %v705 = vunpack.c.l.b16 %v689
          %v706 = vunpack.c.l.b16 %v690
          %v707 = vunpack.c.h.b16 %v687
          %v708 = vunpack.c.h.b16 %v688
          %v709 = vunpack.c.h.b16 %v689
          %v710 = vunpack.c.h.b16 %v690
          %v711 = vunpack.c.l.b16 %v691
          %v712 = vunpack.c.l.b16 %v692
          %v713 = vunpack.c.l.b16 %v693
          %v714 = vunpack.c.l.b16 %v694
          %v715 = vunpack.c.h.b16 %v691
          %v716 = vunpack.c.h.b16 %v692
          %v717 = vunpack.c.h.b16 %v693
          %v718 = vunpack.c.h.b16 %v694
          %v719 = vpack.c.b16 %v704, %v703
          %v720 = vpack.c.b16 %v706, %v705
          %v721 = vpack.c.b16 %v708, %v707
          %v722 = vpack.c.b16 %v710, %v709
          %v723 = vpack.c.b16 %v712, %v711
          %v724 = vpack.c.b16 %v714, %v713
          %v725 = vpack.c.b16 %v716, %v715
          %v726 = vpack.c.b16 %v718, %v717
          %735 = vst [vmem:[#allocation4 + $0x10] sm:$0xff] %v719
          %736 = vst [vmem:[#allocation4 + $0x18] sm:$0xff] %v720
          %737 = vst [vmem:[#allocation4 + $0x30] sm:$0xff] %v721
          %738 = vst [vmem:[#allocation4 + $0x38] sm:$0xff] %v722
          %739 = vst [vmem:[#allocation4 + $0x50] sm:$0xff] %v723
          %740 = vst [vmem:[#allocation4 + $0x58] sm:$0xff] %v724
          %741 = vst [vmem:[#allocation4 + $0x70] sm:$0xff] %v725
          %742 = vst [vmem:[#allocation4 + $0x78] sm:$0xff] %v726
        $region40: #{tpu_custom_call.1} parent=31 // pred_fallthru
          _
        %s743 = smul.u32 %s26, 512
        %v744 = vld [vmem:[#allocation2] sm:$0xff]
        %v745 = vld [vmem:[#allocation2 + $0x8] sm:$0xff]
        %v746 = vld [vmem:[#allocation2 + $0x10] sm:$0xff]
        %v747 = vld [vmem:[#allocation2 + $0x18] sm:$0xff]
        %s748 = sshra.s32 %s743, 7
        %s749 = sand.u32 %s743, 127
        %s750 = smul.addr %s748, 4
        %s751 = scalar_lea.vmem [#allocation3], %s750
        %v752 = vld [vmem:[%s751] sm:$0xff]
        %v753 = vld [vmem:[%s751 + $0x8] sm:$0xff]
        %v758 = vunpack.c.l.b16 %v744
        %v759 = vunpack.c.h.b16 %v744
        %v760 = vunpack.c.l.b16 %v745
        %v761 = vunpack.c.h.b16 %v745
        %v762 = vunpack.c.l.b16 %v746
        %v763 = vunpack.c.h.b16 %v746
        %v764 = vunpack.c.l.b16 %v747
        %v765 = vunpack.c.h.b16 %v747
        %v766 = vpack.c.b16 %v758, %v758
        %v767 = vpack.c.b16 %v759, %v759
        %v768 = vpack.c.b16 %v760, %v760
        %v769 = vpack.c.b16 %v761, %v761
        %v770 = vpack.c.b16 %v762, %v762
        %v771 = vpack.c.b16 %v763, %v763
        %v772 = vpack.c.b16 %v764, %v764
        %v773 = vpack.c.b16 %v765, %v765
        %782 = vxpose.xlu0.c.b16.start [1/8] %v766, 128
        %783 = vxpose.xlu0.c.b16.cont [2/8] 0, 128
        %784 = vxpose.xlu0.c.b16.cont [3/8] 0, 128
        %785 = vxpose.xlu0.c.b16.cont [4/8] 0, 128
        %786 = vxpose.xlu0.c.b16.cont [5/8] 0, 128
        %787 = vxpose.xlu0.c.b16.cont [6/8] 0, 128
        %788 = vxpose.xlu0.c.b16.cont [7/8] 0, 128
        %789 = vxpose.xlu0.c.b16.end [8/8] 0, 128
        %v790 = vpop.trf.xlu0
        %v791 = vpop.trf.xlu0
        %v792 = vpop.trf.xlu0
        %v793 = vpop.trf.xlu0
        %v794 = vpop.trf.xlu0
        %v795 = vpop.trf.xlu0
        %v796 = vpop.trf.xlu0
        %v797 = vpop.trf.xlu0
        %798 = vxpose.xlu0.c.b16.start [1/8] %v767, 128
        %799 = vxpose.xlu0.c.b16.cont [2/8] 0, 128
        %800 = vxpose.xlu0.c.b16.cont [3/8] 0, 128
        %801 = vxpose.xlu0.c.b16.cont [4/8] 0, 128
        %802 = vxpose.xlu0.c.b16.cont [5/8] 0, 128
        %803 = vxpose.xlu0.c.b16.cont [6/8] 0, 128
        %804 = vxpose.xlu0.c.b16.cont [7/8] 0, 128
        %805 = vxpose.xlu0.c.b16.end [8/8] 0, 128
        %v806 = vpop.trf.xlu0
        %v807 = vpop.trf.xlu0
        %v808 = vpop.trf.xlu0
        %v809 = vpop.trf.xlu0
        %v810 = vpop.trf.xlu0
        %v811 = vpop.trf.xlu0
        %v812 = vpop.trf.xlu0
        %v813 = vpop.trf.xlu0
        %814 = vxpose.xlu0.c.b16.start [1/8] %v768, 128
        %815 = vxpose.xlu0.c.b16.cont [2/8] 0, 128
        %816 = vxpose.xlu0.c.b16.cont [3/8] 0, 128
        %817 = vxpose.xlu0.c.b16.cont [4/8] 0, 128
        %818 = vxpose.xlu0.c.b16.cont [5/8] 0, 128
        %819 = vxpose.xlu0.c.b16.cont [6/8] 0, 128
        %820 = vxpose.xlu0.c.b16.cont [7/8] 0, 128
        %821 = vxpose.xlu0.c.b16.end [8/8] 0, 128
        %v822 = vpop.trf.xlu0
        %v823 = vpop.trf.xlu0
        %v824 = vpop.trf.xlu0
        %v825 = vpop.trf.xlu0
        %v826 = vpop.trf.xlu0
        %v827 = vpop.trf.xlu0
        %v828 = vpop.trf.xlu0
        %v829 = vpop.trf.xlu0
        %830 = vxpose.xlu0.c.b16.start [1/8] %v769, 128
        %831 = vxpose.xlu0.c.b16.cont [2/8] 0, 128
        %832 = vxpose.xlu0.c.b16.cont [3/8] 0, 128
        %833 = vxpose.xlu0.c.b16.cont [4/8] 0, 128
        %834 = vxpose.xlu0.c.b16.cont [5/8] 0, 128
        %835 = vxpose.xlu0.c.b16.cont [6/8] 0, 128
        %836 = vxpose.xlu0.c.b16.cont [7/8] 0, 128
        %837 = vxpose.xlu0.c.b16.end [8/8] 0, 128
        %v838 = vpop.trf.xlu0
        %v839 = vpop.trf.xlu0
        %v840 = vpop.trf.xlu0
        %v841 = vpop.trf.xlu0
        %v842 = vpop.trf.xlu0
        %v843 = vpop.trf.xlu0
        %v844 = vpop.trf.xlu0
        %v845 = vpop.trf.xlu0
        %846 = vxpose.xlu0.c.b16.start [1/8] %v770, 128
        %847 = vxpose.xlu0.c.b16.cont [2/8] 0, 128
        %848 = vxpose.xlu0.c.b16.cont [3/8] 0, 128
        %849 = vxpose.xlu0.c.b16.cont [4/8] 0, 128
        %850 = vxpose.xlu0.c.b16.cont [5/8] 0, 128
        %851 = vxpose.xlu0.c.b16.cont [6/8] 0, 128
        %852 = vxpose.xlu0.c.b16.cont [7/8] 0, 128
        %853 = vxpose.xlu0.c.b16.end [8/8] 0, 128
        %v854 = vpop.trf.xlu0
        %v855 = vpop.trf.xlu0
        %v856 = vpop.trf.xlu0
        %v857 = vpop.trf.xlu0
        %v858 = vpop.trf.xlu0
        %v859 = vpop.trf.xlu0
        %v860 = vpop.trf.xlu0
        %v861 = vpop.trf.xlu0
        %862 = vxpose.xlu0.c.b16.start [1/8] %v771, 128
        %863 = vxpose.xlu0.c.b16.cont [2/8] 0, 128
        %864 = vxpose.xlu0.c.b16.cont [3/8] 0, 128
        %865 = vxpose.xlu0.c.b16.cont [4/8] 0, 128
        %866 = vxpose.xlu0.c.b16.cont [5/8] 0, 128
        %867 = vxpose.xlu0.c.b16.cont [6/8] 0, 128
        %868 = vxpose.xlu0.c.b16.cont [7/8] 0, 128
        %869 = vxpose.xlu0.c.b16.end [8/8] 0, 128
        %v870 = vpop.trf.xlu0
        %v871 = vpop.trf.xlu0
        %v872 = vpop.trf.xlu0
        %v873 = vpop.trf.xlu0
        %v874 = vpop.trf.xlu0
        %v875 = vpop.trf.xlu0
        %v876 = vpop.trf.xlu0
        %v877 = vpop.trf.xlu0
        %878 = vxpose.xlu0.c.b16.start [1/8] %v772, 128
        %879 = vxpose.xlu0.c.b16.cont [2/8] 0, 128
        %880 = vxpose.xlu0.c.b16.cont [3/8] 0, 128
        %881 = vxpose.xlu0.c.b16.cont [4/8] 0, 128
        %882 = vxpose.xlu0.c.b16.cont [5/8] 0, 128
        %883 = vxpose.xlu0.c.b16.cont [6/8] 0, 128
        %884 = vxpose.xlu0.c.b16.cont [7/8] 0, 128
        %885 = vxpose.xlu0.c.b16.end [8/8] 0, 128
        %v886 = vpop.trf.xlu0
        %v887 = vpop.trf.xlu0
        %v888 = vpop.trf.xlu0
        %v889 = vpop.trf.xlu0
        %v890 = vpop.trf.xlu0
        %v891 = vpop.trf.xlu0
        %v892 = vpop.trf.xlu0
        %v893 = vpop.trf.xlu0
        %894 = vxpose.xlu0.c.b16.start [1/8] %v773, 128
        %895 = vxpose.xlu0.c.b16.cont [2/8] 0, 128
        %896 = vxpose.xlu0.c.b16.cont [3/8] 0, 128
        %897 = vxpose.xlu0.c.b16.cont [4/8] 0, 128
        %898 = vxpose.xlu0.c.b16.cont [5/8] 0, 128
        %899 = vxpose.xlu0.c.b16.cont [6/8] 0, 128
        %900 = vxpose.xlu0.c.b16.cont [7/8] 0, 128
        %901 = vxpose.xlu0.c.b16.end [8/8] 0, 128
        %v902 = vpop.trf.xlu0
        %v903 = vpop.trf.xlu0
        %v904 = vpop.trf.xlu0
        %v905 = vpop.trf.xlu0
        %v906 = vpop.trf.xlu0
        %v907 = vpop.trf.xlu0
        %v908 = vpop.trf.xlu0
        %v909 = vpop.trf.xlu0
        %v912 = vunpack.c.l.b16 %v752
        %v913 = vunpack.c.h.b16 %v752
        %v914 = vunpack.c.l.b16 %v753
        %v915 = vunpack.c.h.b16 %v753
        %v916 = vpack.c.b16 %v912, %v912
        %v917 = vpack.c.b16 %v913, %v913
        %v918 = vpack.c.b16 %v914, %v914
        %v919 = vpack.c.b16 %v915, %v915
        %vm920 = vcmask 64512
        %v922 = vsel %vm920, %v790, 0
        %v925 = vsel %vm920, %v791, 0
        %v928 = vsel %vm920, %v792, 0
        %v931 = vsel %vm920, %v793, 0
        %v934 = vsel %vm920, %v794, 0
        %v937 = vsel %vm920, %v795, 0
        %v940 = vsel %vm920, %v796, 0
        %v943 = vsel %vm920, %v797, 0
        %v946 = vsel %vm920, %v806, 0
        %v949 = vsel %vm920, %v807, 0
        %v952 = vsel %vm920, %v808, 0
        %v955 = vsel %vm920, %v809, 0
        %v958 = vsel %vm920, %v810, 0
        %v961 = vsel %vm920, %v811, 0
        %v964 = vsel %vm920, %v812, 0
        %v967 = vsel %vm920, %v813, 0
        %v970 = vsel %vm920, %v822, 0
        %v973 = vsel %vm920, %v823, 0
        %v976 = vsel %vm920, %v824, 0
        %v979 = vsel %vm920, %v825, 0
        %v982 = vsel %vm920, %v826, 0
        %v985 = vsel %vm920, %v827, 0
        %v988 = vsel %vm920, %v828, 0
        %v991 = vsel %vm920, %v829, 0
        %v994 = vsel %vm920, %v838, 0
        %v997 = vsel %vm920, %v839, 0
        %v1000 = vsel %vm920, %v840, 0
        %v1003 = vsel %vm920, %v841, 0
        %v1006 = vsel %vm920, %v842, 0
        %v1009 = vsel %vm920, %v843, 0
        %v1012 = vsel %vm920, %v844, 0
        %v1015 = vsel %vm920, %v845, 0
        %v1018 = vsel %vm920, %v854, 0
        %v1021 = vsel %vm920, %v855, 0
        %v1024 = vsel %vm920, %v856, 0
        %v1027 = vsel %vm920, %v857, 0
        %v1030 = vsel %vm920, %v858, 0
        %v1033 = vsel %vm920, %v859, 0
        %v1036 = vsel %vm920, %v860, 0
        %v1039 = vsel %vm920, %v861, 0
        %v1042 = vsel %vm920, %v870, 0
        %v1045 = vsel %vm920, %v871, 0
        %v1048 = vsel %vm920, %v872, 0
        %v1051 = vsel %vm920, %v873, 0
        %v1054 = vsel %vm920, %v874, 0
        %v1057 = vsel %vm920, %v875, 0
        %v1060 = vsel %vm920, %v876, 0
        %v1063 = vsel %vm920, %v877, 0
        %v1066 = vsel %vm920, %v886, 0
        %v1069 = vsel %vm920, %v887, 0
        %v1072 = vsel %vm920, %v888, 0
        %v1075 = vsel %vm920, %v889, 0
        %v1078 = vsel %vm920, %v890, 0
        %v1081 = vsel %vm920, %v891, 0
        %v1084 = vsel %vm920, %v892, 0
        %v1087 = vsel %vm920, %v893, 0
        %v1090 = vsel %vm920, %v902, 0
        %v1093 = vsel %vm920, %v903, 0
        %v1096 = vsel %vm920, %v904, 0
        %v1099 = vsel %vm920, %v905, 0
        %v1102 = vsel %vm920, %v906, 0
        %v1105 = vsel %vm920, %v907, 0
        %v1108 = vsel %vm920, %v908, 0
        %v1111 = vsel %vm920, %v909, 0
        %vm1113 = vcmask 1043456
        %v1115 = vsel %vm1113, %v916, 0
        %v1118 = vsel %vm1113, %v917, 0
        %v1121 = vsel %vm1113, %v918, 0
        %v1124 = vsel %vm1113, %v919, 0
        %1126 = vmatprep.subr.bf16.mxu0 %v1118
        %1127 = vmatpush1.bf16.msra.mxu0 %v1115
        %1128 = vmatprep.subr.bf16.mxu0 0
        %1129 = vmatpush1.bf16.msra.mxu0 0
        %1130 = vmatprep.subr.bf16.mxu0 0
        %1131 = vmatpush1.bf16.msra.mxu0 0
        %1132 = vmatprep.subr.bf16.mxu0 0
        %1133 = vmatpush1.bf16.msra.mxu0 0
        %1134 = vmatprep.subr.bf16.mxu0 0
        %1135 = vmatpush1.bf16.msra.mxu0 0
        %1136 = vmatprep.subr.bf16.mxu0 0
        %1137 = vmatpush1.bf16.msra.mxu0 0
        %1138 = vmatprep.subr.bf16.mxu0 0
        %1139 = vmatpush1.bf16.msra.mxu0 0
        %1140 = vmatprep.subr.bf16.mxu0 0
        %1141 = vmatpush1.bf16.msra.mxu0 0
        %1142 = vmatprep.subr.bf16.mxu0 0
        %1143 = vmatpush1.bf16.msra.mxu0 0
        %1144 = vmatprep.subr.bf16.mxu0 0
        %1145 = vmatpush1.bf16.msra.mxu0 0
        %1146 = vmatprep.subr.bf16.mxu0 0
        %1147 = vmatpush1.bf16.msra.mxu0 0
        %1148 = vmatprep.subr.bf16.mxu0 0
        %1149 = vmatpush1.bf16.msra.mxu0 0
        %1150 = vmatprep.subr.bf16.mxu0 0
        %1151 = vmatpush1.bf16.msra.mxu0 0
        %1152 = vmatprep.subr.bf16.mxu0 0
        %1153 = vmatpush1.bf16.msra.mxu0 0
        %1154 = vmatprep.subr.bf16.mxu0 0
        %1155 = vmatpush1.bf16.msra.mxu0 0
        %1156 = vmatprep.subr.bf16.mxu0 0
        %1157 = vmatpush1.bf16.msra.mxu0 0
        %1158 = vmatprep.mubr.bf16.mxu0 0
        %1159 = vmatmul.mubr.bf16.gmra.mrb[0].mxu0 %v922
        %v1160 = vpop.f32.mrb[0].mxu0
        %v1161 = vadd.f32 0.0, %v1160
        %v1162 = vpop.f32.mrb[0].mxu0
        %v1163 = vadd.f32 0.0, %v1162
        %v1164 = vpop.f32.mrb[0].mxu0
        %v1165 = vadd.f32 0.0, %v1164
        %v1166 = vpop.f32.mrb[0].mxu0
        %v1167 = vadd.f32 0.0, %v1166
        %1168 = vmatprep.mubr.bf16.mxu0 0
        %1169 = vmatmul.mubr.bf16.gmra.mrb[0].mxu0 %v925
        %v1170 = vpop.f32.mrb[0].mxu0
        %v1171 = vadd.f32 0.0, %v1170
        %v1172 = vpop.f32.mrb[0].mxu0
        %v1173 = vadd.f32 0.0, %v1172
        %v1174 = vpop.f32.mrb[0].mxu0
        %v1175 = vadd.f32 0.0, %v1174
        %v1176 = vpop.f32.mrb[0].mxu0
        %v1177 = vadd.f32 0.0, %v1176
        %1178 = vmatprep.mubr.bf16.mxu0 0
        %1179 = vmatmul.mubr.bf16.gmra.mrb[0].mxu0 %v928
        %v1180 = vpop.f32.mrb[0].mxu0
        %v1181 = vadd.f32 0.0, %v1180
        %v1182 = vpop.f32.mrb[0].mxu0
        %v1183 = vadd.f32 0.0, %v1182
        %v1184 = vpop.f32.mrb[0].mxu0
        %v1185 = vadd.f32 0.0, %v1184
        %v1186 = vpop.f32.mrb[0].mxu0
        %v1187 = vadd.f32 0.0, %v1186
        %1188 = vmatprep.mubr.bf16.mxu0 0
        %1189 = vmatmul.mubr.bf16.gmra.mrb[0].mxu0 %v931
        %v1190 = vpop.f32.mrb[0].mxu0
        %v1191 = vadd.f32 0.0, %v1190
        %v1192 = vpop.f32.mrb[0].mxu0
        %v1193 = vadd.f32 0.0, %v1192
        %v1194 = vpop.f32.mrb[0].mxu0
        %v1195 = vadd.f32 0.0, %v1194
        %v1196 = vpop.f32.mrb[0].mxu0
        %v1197 = vadd.f32 0.0, %v1196
        %1198 = vmatprep.mubr.bf16.mxu0 0
        %1199 = vmatmul.mubr.bf16.gmra.mrb[0].mxu0 %v934
        %v1200 = vpop.f32.mrb[0].mxu0
        %v1201 = vadd.f32 0.0, %v1200
        %v1202 = vpop.f32.mrb[0].mxu0
        %v1203 = vadd.f32 0.0, %v1202
        %v1204 = vpop.f32.mrb[0].mxu0
        %v1205 = vadd.f32 0.0, %v1204
        %v1206 = vpop.f32.mrb[0].mxu0
        %v1207 = vadd.f32 0.0, %v1206
        %1208 = vmatprep.mubr.bf16.mxu0 0
        %1209 = vmatmul.mubr.bf16.gmra.mrb[0].mxu0 %v937
        %v1210 = vpop.f32.mrb[0].mxu0
        %v1211 = vadd.f32 0.0, %v1210
        %v1212 = vpop.f32.mrb[0].mxu0
        %v1213 = vadd.f32 0.0, %v1212
        %v1214 = vpop.f32.mrb[0].mxu0
        %v1215 = vadd.f32 0.0, %v1214
        %v1216 = vpop.f32.mrb[0].mxu0
        %v1217 = vadd.f32 0.0, %v1216
        %1218 = vmatprep.mubr.bf16.mxu0 0
        %1219 = vmatmul.mubr.bf16.gmra.mrb[0].mxu0 %v940
        %v1220 = vpop.f32.mrb[0].mxu0
        %v1221 = vadd.f32 0.0, %v1220
        %v1222 = vpop.f32.mrb[0].mxu0
        %v1223 = vadd.f32 0.0, %v1222
        %v1224 = vpop.f32.mrb[0].mxu0
        %v1225 = vadd.f32 0.0, %v1224
        %v1226 = vpop.f32.mrb[0].mxu0
        %v1227 = vadd.f32 0.0, %v1226
        %1228 = vmatprep.mubr.bf16.mxu0 0
        %1229 = vmatmul.mubr.bf16.gmra.mrb[0].mxu0 %v943
        %v1230 = vpop.f32.mrb[0].mxu0
        %v1231 = vadd.f32 0.0, %v1230
        %v1232 = vpop.f32.mrb[0].mxu0
        %v1233 = vadd.f32 0.0, %v1232
        %v1234 = vpop.f32.mrb[0].mxu0
        %v1235 = vadd.f32 0.0, %v1234
        %v1236 = vpop.f32.mrb[0].mxu0
        %v1237 = vadd.f32 0.0, %v1236
        %1238 = vmatprep.mubr.bf16.mxu0 0
        %1239 = vmatmul.mubr.bf16.gmra.mrb[0].mxu0 %v946
        %v1240 = vpop.f32.mrb[0].mxu0
        %v1241 = vadd.f32 0.0, %v1240
        %v1242 = vpop.f32.mrb[0].mxu0
        %v1243 = vadd.f32 0.0, %v1242
        %v1244 = vpop.f32.mrb[0].mxu0
        %v1245 = vadd.f32 0.0, %v1244
        %v1246 = vpop.f32.mrb[0].mxu0
        %v1247 = vadd.f32 0.0, %v1246
        %1248 = vmatprep.mubr.bf16.mxu0 0
        %1249 = vmatmul.mubr.bf16.gmra.mrb[0].mxu0 %v949
        %v1250 = vpop.f32.mrb[0].mxu0
        %v1251 = vadd.f32 0.0, %v1250
        %v1252 = vpop.f32.mrb[0].mxu0
        %v1253 = vadd.f32 0.0, %v1252
        %v1254 = vpop.f32.mrb[0].mxu0
        %v1255 = vadd.f32 0.0, %v1254
        %v1256 = vpop.f32.mrb[0].mxu0
        %v1257 = vadd.f32 0.0, %v1256
        %1258 = vmatprep.mubr.bf16.mxu0 0
        %1259 = vmatmul.mubr.bf16.gmra.mrb[0].mxu0 %v952
        %v1260 = vpop.f32.mrb[0].mxu0
        %v1261 = vadd.f32 0.0, %v1260
        %v1262 = vpop.f32.mrb[0].mxu0
        %v1263 = vadd.f32 0.0, %v1262
        %v1264 = vpop.f32.mrb[0].mxu0
        %v1265 = vadd.f32 0.0, %v1264
        %v1266 = vpop.f32.mrb[0].mxu0
        %v1267 = vadd.f32 0.0, %v1266
        %1268 = vmatprep.mubr.bf16.mxu0 0
        %1269 = vmatmul.mubr.bf16.gmra.mrb[0].mxu0 %v955
        %v1270 = vpop.f32.mrb[0].mxu0
        %v1271 = vadd.f32 0.0, %v1270
        %v1272 = vpop.f32.mrb[0].mxu0
        %v1273 = vadd.f32 0.0, %v1272
        %v1274 = vpop.f32.mrb[0].mxu0
        %v1275 = vadd.f32 0.0, %v1274
        %v1276 = vpop.f32.mrb[0].mxu0
        %v1277 = vadd.f32 0.0, %v1276
        %1278 = vmatprep.mubr.bf16.mxu0 0
        %1279 = vmatmul.mubr.bf16.gmra.mrb[0].mxu0 %v958
        %v1280 = vpop.f32.mrb[0].mxu0
        %v1281 = vadd.f32 0.0, %v1280
        %v1282 = vpop.f32.mrb[0].mxu0
        %v1283 = vadd.f32 0.0, %v1282
        %v1284 = vpop.f32.mrb[0].mxu0
        %v1285 = vadd.f32 0.0, %v1284
        %v1286 = vpop.f32.mrb[0].mxu0
        %v1287 = vadd.f32 0.0, %v1286
        %1288 = vmatprep.mubr.bf16.mxu0 0
        %1289 = vmatmul.mubr.bf16.gmra.mrb[0].mxu0 %v961
        %v1290 = vpop.f32.mrb[0].mxu0
        %v1291 = vadd.f32 0.0, %v1290
        %v1292 = vpop.f32.mrb[0].mxu0
        %v1293 = vadd.f32 0.0, %v1292
        %v1294 = vpop.f32.mrb[0].mxu0
        %v1295 = vadd.f32 0.0, %v1294
        %v1296 = vpop.f32.mrb[0].mxu0
        %v1297 = vadd.f32 0.0, %v1296
        %1298 = vmatprep.mubr.bf16.mxu0 0
        %1299 = vmatmul.mubr.bf16.gmra.mrb[0].mxu0 %v964
        %v1300 = vpop.f32.mrb[0].mxu0
        %v1301 = vadd.f32 0.0, %v1300
        %v1302 = vpop.f32.mrb[0].mxu0
        %v1303 = vadd.f32 0.0, %v1302
        %v1304 = vpop.f32.mrb[0].mxu0
        %v1305 = vadd.f32 0.0, %v1304
        %v1306 = vpop.f32.mrb[0].mxu0
        %v1307 = vadd.f32 0.0, %v1306
        %1308 = vmatprep.mubr.bf16.mxu0 0
        %1309 = vmatmul.mubr.bf16.gmra.mrb[0].mxu0 %v967
        %v1310 = vpop.f32.mrb[0].mxu0
        %v1311 = vadd.f32 0.0, %v1310
        %v1312 = vpop.f32.mrb[0].mxu0
        %v1313 = vadd.f32 0.0, %v1312
        %v1314 = vpop.f32.mrb[0].mxu0
        %v1315 = vadd.f32 0.0, %v1314
        %v1316 = vpop.f32.mrb[0].mxu0
        %v1317 = vadd.f32 0.0, %v1316
        %1318 = vmatprep.mubr.bf16.mxu0 0
        %1319 = vmatmul.mubr.bf16.gmra.mrb[0].mxu0 %v970
        %v1320 = vpop.f32.mrb[0].mxu0
        %v1321 = vadd.f32 0.0, %v1320
        %v1322 = vpop.f32.mrb[0].mxu0
        %v1323 = vadd.f32 0.0, %v1322
        %v1324 = vpop.f32.mrb[0].mxu0
        %v1325 = vadd.f32 0.0, %v1324
        %v1326 = vpop.f32.mrb[0].mxu0
        %v1327 = vadd.f32 0.0, %v1326
        %1328 = vmatprep.mubr.bf16.mxu0 0
        %1329 = vmatmul.mubr.bf16.gmra.mrb[0].mxu0 %v973
        %v1330 = vpop.f32.mrb[0].mxu0
        %v1331 = vadd.f32 0.0, %v1330
        %v1332 = vpop.f32.mrb[0].mxu0
        %v1333 = vadd.f32 0.0, %v1332
        %v1334 = vpop.f32.mrb[0].mxu0
        %v1335 = vadd.f32 0.0, %v1334
        %v1336 = vpop.f32.mrb[0].mxu0
        %v1337 = vadd.f32 0.0, %v1336
        %1338 = vmatprep.mubr.bf16.mxu0 0
        %1339 = vmatmul.mubr.bf16.gmra.mrb[0].mxu0 %v976
        %v1340 = vpop.f32.mrb[0].mxu0
        %v1341 = vadd.f32 0.0, %v1340
        %v1342 = vpop.f32.mrb[0].mxu0
        %v1343 = vadd.f32 0.0, %v1342
        %v1344 = vpop.f32.mrb[0].mxu0
        %v1345 = vadd.f32 0.0, %v1344
        %v1346 = vpop.f32.mrb[0].mxu0
        %v1347 = vadd.f32 0.0, %v1346
        %1348 = vmatprep.mubr.bf16.mxu0 0
        %1349 = vmatmul.mubr.bf16.gmra.mrb[0].mxu0 %v979
        %v1350 = vpop.f32.mrb[0].mxu0
        %v1351 = vadd.f32 0.0, %v1350
        %v1352 = vpop.f32.mrb[0].mxu0
        %v1353 = vadd.f32 0.0, %v1352
        %v1354 = vpop.f32.mrb[0].mxu0
        %v1355 = vadd.f32 0.0, %v1354
        %v1356 = vpop.f32.mrb[0].mxu0
        %v1357 = vadd.f32 0.0, %v1356
        %1358 = vmatprep.mubr.bf16.mxu0 0
        %1359 = vmatmul.mubr.bf16.gmra.mrb[0].mxu0 %v982
        %v1360 = vpop.f32.mrb[0].mxu0
        %v1361 = vadd.f32 0.0, %v1360
        %v1362 = vpop.f32.mrb[0].mxu0
        %v1363 = vadd.f32 0.0, %v1362
        %v1364 = vpop.f32.mrb[0].mxu0
        %v1365 = vadd.f32 0.0, %v1364
        %v1366 = vpop.f32.mrb[0].mxu0
        %v1367 = vadd.f32 0.0, %v1366
        %1368 = vmatprep.mubr.bf16.mxu0 0
        %1369 = vmatmul.mubr.bf16.gmra.mrb[0].mxu0 %v985
        %v1370 = vpop.f32.mrb[0].mxu0
        %v1371 = vadd.f32 0.0, %v1370
        %v1372 = vpop.f32.mrb[0].mxu0
        %v1373 = vadd.f32 0.0, %v1372
        %v1374 = vpop.f32.mrb[0].mxu0
        %v1375 = vadd.f32 0.0, %v1374
        %v1376 = vpop.f32.mrb[0].mxu0
        %v1377 = vadd.f32 0.0, %v1376
        %1378 = vmatprep.mubr.bf16.mxu0 0
        %1379 = vmatmul.mubr.bf16.gmra.mrb[0].mxu0 %v988
        %v1380 = vpop.f32.mrb[0].mxu0
        %v1381 = vadd.f32 0.0, %v1380
        %v1382 = vpop.f32.mrb[0].mxu0
        %v1383 = vadd.f32 0.0, %v1382
        %v1384 = vpop.f32.mrb[0].mxu0
        %v1385 = vadd.f32 0.0, %v1384
        %v1386 = vpop.f32.mrb[0].mxu0
        %v1387 = vadd.f32 0.0, %v1386
        %1388 = vmatprep.mubr.bf16.mxu0 0
        %1389 = vmatmul.mubr.bf16.gmra.mrb[0].mxu0 %v991
        %v1390 = vpop.f32.mrb[0].mxu0
        %v1391 = vadd.f32 0.0, %v1390
        %v1392 = vpop.f32.mrb[0].mxu0
        %v1393 = vadd.f32 0.0, %v1392
        %v1394 = vpop.f32.mrb[0].mxu0
        %v1395 = vadd.f32 0.0, %v1394
        %v1396 = vpop.f32.mrb[0].mxu0
        %v1397 = vadd.f32 0.0, %v1396
        %1398 = vmatprep.mubr.bf16.mxu0 0
        %1399 = vmatmul.mubr.bf16.gmra.mrb[0].mxu0 %v994
        %v1400 = vpop.f32.mrb[0].mxu0
        %v1401 = vadd.f32 0.0, %v1400
        %v1402 = vpop.f32.mrb[0].mxu0
        %v1403 = vadd.f32 0.0, %v1402
        %v1404 = vpop.f32.mrb[0].mxu0
        %v1405 = vadd.f32 0.0, %v1404
        %v1406 = vpop.f32.mrb[0].mxu0
        %v1407 = vadd.f32 0.0, %v1406
        %1408 = vmatprep.mubr.bf16.mxu0 0
        %1409 = vmatmul.mubr.bf16.gmra.mrb[0].mxu0 %v997
        %v1410 = vpop.f32.mrb[0].mxu0
        %v1411 = vadd.f32 0.0, %v1410
        %v1412 = vpop.f32.mrb[0].mxu0
        %v1413 = vadd.f32 0.0, %v1412
        %v1414 = vpop.f32.mrb[0].mxu0
        %v1415 = vadd.f32 0.0, %v1414
        %v1416 = vpop.f32.mrb[0].mxu0
        %v1417 = vadd.f32 0.0, %v1416
        %1418 = vmatprep.mubr.bf16.mxu0 0
        %1419 = vmatmul.mubr.bf16.gmra.mrb[0].mxu0 %v1000
        %v1420 = vpop.f32.mrb[0].mxu0
        %v1421 = vadd.f32 0.0, %v1420
        %v1422 = vpop.f32.mrb[0].mxu0
        %v1423 = vadd.f32 0.0, %v1422
        %v1424 = vpop.f32.mrb[0].mxu0
        %v1425 = vadd.f32 0.0, %v1424
        %v1426 = vpop.f32.mrb[0].mxu0
        %v1427 = vadd.f32 0.0, %v1426
        %1428 = vmatprep.mubr.bf16.mxu0 0
        %1429 = vmatmul.mubr.bf16.gmra.mrb[0].mxu0 %v1003
        %v1430 = vpop.f32.mrb[0].mxu0
        %v1431 = vadd.f32 0.0, %v1430
        %v1432 = vpop.f32.mrb[0].mxu0
        %v1433 = vadd.f32 0.0, %v1432
        %v1434 = vpop.f32.mrb[0].mxu0
        %v1435 = vadd.f32 0.0, %v1434
        %v1436 = vpop.f32.mrb[0].mxu0
        %v1437 = vadd.f32 0.0, %v1436
        %1438 = vmatprep.mubr.bf16.mxu0 0
        %1439 = vmatmul.mubr.bf16.gmra.mrb[0].mxu0 %v1006
        %v1440 = vpop.f32.mrb[0].mxu0
        %v1441 = vadd.f32 0.0, %v1440
        %v1442 = vpop.f32.mrb[0].mxu0
        %v1443 = vadd.f32 0.0, %v1442
        %v1444 = vpop.f32.mrb[0].mxu0
        %v1445 = vadd.f32 0.0, %v1444
        %v1446 = vpop.f32.mrb[0].mxu0
        %v1447 = vadd.f32 0.0, %v1446
        %1448 = vmatprep.mubr.bf16.mxu0 0
        %1449 = vmatmul.mubr.bf16.gmra.mrb[0].mxu0 %v1009
        %v1450 = vpop.f32.mrb[0].mxu0
        %v1451 = vadd.f32 0.0, %v1450
        %v1452 = vpop.f32.mrb[0].mxu0
        %v1453 = vadd.f32 0.0, %v1452
        %v1454 = vpop.f32.mrb[0].mxu0
        %v1455 = vadd.f32 0.0, %v1454
        %v1456 = vpop.f32.mrb[0].mxu0
        %v1457 = vadd.f32 0.0, %v1456
        %1458 = vmatprep.mubr.bf16.mxu0 0
        %1459 = vmatmul.mubr.bf16.gmra.mrb[0].mxu0 %v1012
        %v1460 = vpop.f32.mrb[0].mxu0
        %v1461 = vadd.f32 0.0, %v1460
        %v1462 = vpop.f32.mrb[0].mxu0
        %v1463 = vadd.f32 0.0, %v1462
        %v1464 = vpop.f32.mrb[0].mxu0
        %v1465 = vadd.f32 0.0, %v1464
        %v1466 = vpop.f32.mrb[0].mxu0
        %v1467 = vadd.f32 0.0, %v1466
        %1468 = vmatprep.mubr.bf16.mxu0 0
        %1469 = vmatmul.mubr.bf16.gmra.mrb[0].mxu0 %v1015
        %v1470 = vpop.f32.mrb[0].mxu0
        %v1471 = vadd.f32 0.0, %v1470
        %v1472 = vpop.f32.mrb[0].mxu0
        %v1473 = vadd.f32 0.0, %v1472
        %v1474 = vpop.f32.mrb[0].mxu0
        %v1475 = vadd.f32 0.0, %v1474
        %v1476 = vpop.f32.mrb[0].mxu0
        %v1477 = vadd.f32 0.0, %v1476
        %1478 = vmatprep.mubr.bf16.mxu0 0
        %1479 = vmatmul.mubr.bf16.gmra.mrb[0].mxu0 %v1018
        %v1480 = vpop.f32.mrb[0].mxu0
        %v1481 = vadd.f32 0.0, %v1480
        %v1482 = vpop.f32.mrb[0].mxu0
        %v1483 = vadd.f32 0.0, %v1482
        %v1484 = vpop.f32.mrb[0].mxu0
        %v1485 = vadd.f32 0.0, %v1484
        %v1486 = vpop.f32.mrb[0].mxu0
        %v1487 = vadd.f32 0.0, %v1486
        %1488 = vmatprep.mubr.bf16.mxu0 0
        %1489 = vmatmul.mubr.bf16.gmra.mrb[0].mxu0 %v1021
        %v1490 = vpop.f32.mrb[0].mxu0
        %v1491 = vadd.f32 0.0, %v1490
        %v1492 = vpop.f32.mrb[0].mxu0
        %v1493 = vadd.f32 0.0, %v1492
        %v1494 = vpop.f32.mrb[0].mxu0
        %v1495 = vadd.f32 0.0, %v1494
        %v1496 = vpop.f32.mrb[0].mxu0
        %v1497 = vadd.f32 0.0, %v1496
        %1498 = vmatprep.mubr.bf16.mxu0 0
        %1499 = vmatmul.mubr.bf16.gmra.mrb[0].mxu0 %v1024
        %v1500 = vpop.f32.mrb[0].mxu0
        %v1501 = vadd.f32 0.0, %v1500
        %v1502 = vpop.f32.mrb[0].mxu0
        %v1503 = vadd.f32 0.0, %v1502
        %v1504 = vpop.f32.mrb[0].mxu0
        %v1505 = vadd.f32 0.0, %v1504
        %v1506 = vpop.f32.mrb[0].mxu0
        %v1507 = vadd.f32 0.0, %v1506
        %1508 = vmatprep.mubr.bf16.mxu0 0
        %1509 = vmatmul.mubr.bf16.gmra.mrb[0].mxu0 %v1027
        %v1510 = vpop.f32.mrb[0].mxu0
        %v1511 = vadd.f32 0.0, %v1510
        %v1512 = vpop.f32.mrb[0].mxu0
        %v1513 = vadd.f32 0.0, %v1512
        %v1514 = vpop.f32.mrb[0].mxu0
        %v1515 = vadd.f32 0.0, %v1514
        %v1516 = vpop.f32.mrb[0].mxu0
        %v1517 = vadd.f32 0.0, %v1516
        %1518 = vmatprep.mubr.bf16.mxu0 0
        %1519 = vmatmul.mubr.bf16.gmra.mrb[0].mxu0 %v1030
        %v1520 = vpop.f32.mrb[0].mxu0
        %v1521 = vadd.f32 0.0, %v1520
        %v1522 = vpop.f32.mrb[0].mxu0
        %v1523 = vadd.f32 0.0, %v1522
        %v1524 = vpop.f32.mrb[0].mxu0
        %v1525 = vadd.f32 0.0, %v1524
        %v1526 = vpop.f32.mrb[0].mxu0
        %v1527 = vadd.f32 0.0, %v1526
        %1528 = vmatprep.mubr.bf16.mxu0 0
        %1529 = vmatmul.mubr.bf16.gmra.mrb[0].mxu0 %v1033
        %v1530 = vpop.f32.mrb[0].mxu0
        %v1531 = vadd.f32 0.0, %v1530
        %v1532 = vpop.f32.mrb[0].mxu0
        %v1533 = vadd.f32 0.0, %v1532
        %v1534 = vpop.f32.mrb[0].mxu0
        %v1535 = vadd.f32 0.0, %v1534
        %v1536 = vpop.f32.mrb[0].mxu0
        %v1537 = vadd.f32 0.0, %v1536
        %1538 = vmatprep.mubr.bf16.mxu0 0
        %1539 = vmatmul.mubr.bf16.gmra.mrb[0].mxu0 %v1036
        %v1540 = vpop.f32.mrb[0].mxu0
        %v1541 = vadd.f32 0.0, %v1540
        %v1542 = vpop.f32.mrb[0].mxu0
        %v1543 = vadd.f32 0.0, %v1542
        %v1544 = vpop.f32.mrb[0].mxu0
        %v1545 = vadd.f32 0.0, %v1544
        %v1546 = vpop.f32.mrb[0].mxu0
        %v1547 = vadd.f32 0.0, %v1546
        %1548 = vmatprep.mubr.bf16.mxu0 0
        %1549 = vmatmul.mubr.bf16.gmra.mrb[0].mxu0 %v1039
        %v1550 = vpop.f32.mrb[0].mxu0
        %v1551 = vadd.f32 0.0, %v1550
        %v1552 = vpop.f32.mrb[0].mxu0
        %v1553 = vadd.f32 0.0, %v1552
        %v1554 = vpop.f32.mrb[0].mxu0
        %v1555 = vadd.f32 0.0, %v1554
        %v1556 = vpop.f32.mrb[0].mxu0
        %v1557 = vadd.f32 0.0, %v1556
        %1558 = vmatprep.mubr.bf16.mxu0 0
        %1559 = vmatmul.mubr.bf16.gmra.mrb[0].mxu0 %v1042
        %v1560 = vpop.f32.mrb[0].mxu0
        %v1561 = vadd.f32 0.0, %v1560
        %v1562 = vpop.f32.mrb[0].mxu0
        %v1563 = vadd.f32 0.0, %v1562
        %v1564 = vpop.f32.mrb[0].mxu0
        %v1565 = vadd.f32 0.0, %v1564
        %v1566 = vpop.f32.mrb[0].mxu0
        %v1567 = vadd.f32 0.0, %v1566
        %1568 = vmatprep.mubr.bf16.mxu0 0
        %1569 = vmatmul.mubr.bf16.gmra.mrb[0].mxu0 %v1045
        %v1570 = vpop.f32.mrb[0].mxu0
        %v1571 = vadd.f32 0.0, %v1570
        %v1572 = vpop.f32.mrb[0].mxu0
        %v1573 = vadd.f32 0.0, %v1572
        %v1574 = vpop.f32.mrb[0].mxu0
        %v1575 = vadd.f32 0.0, %v1574
        %v1576 = vpop.f32.mrb[0].mxu0
        %v1577 = vadd.f32 0.0, %v1576
        %1578 = vmatprep.mubr.bf16.mxu0 0
        %1579 = vmatmul.mubr.bf16.gmra.mrb[0].mxu0 %v1048
        %v1580 = vpop.f32.mrb[0].mxu0
        %v1581 = vadd.f32 0.0, %v1580
        %v1582 = vpop.f32.mrb[0].mxu0
        %v1583 = vadd.f32 0.0, %v1582
        %v1584 = vpop.f32.mrb[0].mxu0
        %v1585 = vadd.f32 0.0, %v1584
        %v1586 = vpop.f32.mrb[0].mxu0
        %v1587 = vadd.f32 0.0, %v1586
        %1588 = vmatprep.mubr.bf16.mxu0 0
        %1589 = vmatmul.mubr.bf16.gmra.mrb[0].mxu0 %v1051
        %v1590 = vpop.f32.mrb[0].mxu0
        %v1591 = vadd.f32 0.0, %v1590
        %v1592 = vpop.f32.mrb[0].mxu0
        %v1593 = vadd.f32 0.0, %v1592
        %v1594 = vpop.f32.mrb[0].mxu0
        %v1595 = vadd.f32 0.0, %v1594
        %v1596 = vpop.f32.mrb[0].mxu0
        %v1597 = vadd.f32 0.0, %v1596
        %1598 = vmatprep.mubr.bf16.mxu0 0
        %1599 = vmatmul.mubr.bf16.gmra.mrb[0].mxu0 %v1054
        %v1600 = vpop.f32.mrb[0].mxu0
        %v1601 = vadd.f32 0.0, %v1600
        %v1602 = vpop.f32.mrb[0].mxu0
        %v1603 = vadd.f32 0.0, %v1602
        %v1604 = vpop.f32.mrb[0].mxu0
        %v1605 = vadd.f32 0.0, %v1604
        %v1606 = vpop.f32.mrb[0].mxu0
        %v1607 = vadd.f32 0.0, %v1606
        %1608 = vmatprep.mubr.bf16.mxu0 0
        %1609 = vmatmul.mubr.bf16.gmra.mrb[0].mxu0 %v1057
        %v1610 = vpop.f32.mrb[0].mxu0
        %v1611 = vadd.f32 0.0, %v1610
        %v1612 = vpop.f32.mrb[0].mxu0
        %v1613 = vadd.f32 0.0, %v1612
        %v1614 = vpop.f32.mrb[0].mxu0
        %v1615 = vadd.f32 0.0, %v1614
        %v1616 = vpop.f32.mrb[0].mxu0
        %v1617 = vadd.f32 0.0, %v1616
        %1618 = vmatprep.mubr.bf16.mxu0 0
        %1619 = vmatmul.mubr.bf16.gmra.mrb[0].mxu0 %v1060
        %v1620 = vpop.f32.mrb[0].mxu0
        %v1621 = vadd.f32 0.0, %v1620
        %v1622 = vpop.f32.mrb[0].mxu0
        %v1623 = vadd.f32 0.0, %v1622
        %v1624 = vpop.f32.mrb[0].mxu0
        %v1625 = vadd.f32 0.0, %v1624
        %v1626 = vpop.f32.mrb[0].mxu0
        %v1627 = vadd.f32 0.0, %v1626
        %1628 = vmatprep.mubr.bf16.mxu0 0
        %1629 = vmatmul.mubr.bf16.gmra.mrb[0].mxu0 %v1063
        %v1630 = vpop.f32.mrb[0].mxu0
        %v1631 = vadd.f32 0.0, %v1630
        %v1632 = vpop.f32.mrb[0].mxu0
        %v1633 = vadd.f32 0.0, %v1632
        %v1634 = vpop.f32.mrb[0].mxu0
        %v1635 = vadd.f32 0.0, %v1634
        %v1636 = vpop.f32.mrb[0].mxu0
        %v1637 = vadd.f32 0.0, %v1636
        %1638 = vmatprep.mubr.bf16.mxu0 0
        %1639 = vmatmul.mubr.bf16.gmra.mrb[0].mxu0 %v1066
        %v1640 = vpop.f32.mrb[0].mxu0
        %v1641 = vadd.f32 0.0, %v1640
        %v1642 = vpop.f32.mrb[0].mxu0
        %v1643 = vadd.f32 0.0, %v1642
        %v1644 = vpop.f32.mrb[0].mxu0
        %v1645 = vadd.f32 0.0, %v1644
        %v1646 = vpop.f32.mrb[0].mxu0
        %v1647 = vadd.f32 0.0, %v1646
        %1648 = vmatprep.mubr.bf16.mxu0 0
        %1649 = vmatmul.mubr.bf16.gmra.mrb[0].mxu0 %v1069
        %v1650 = vpop.f32.mrb[0].mxu0
        %v1651 = vadd.f32 0.0, %v1650
        %v1652 = vpop.f32.mrb[0].mxu0
        %v1653 = vadd.f32 0.0, %v1652
        %v1654 = vpop.f32.mrb[0].mxu0
        %v1655 = vadd.f32 0.0, %v1654
        %v1656 = vpop.f32.mrb[0].mxu0
        %v1657 = vadd.f32 0.0, %v1656
        %1658 = vmatprep.mubr.bf16.mxu0 0
        %1659 = vmatmul.mubr.bf16.gmra.mrb[0].mxu0 %v1072
        %v1660 = vpop.f32.mrb[0].mxu0
        %v1661 = vadd.f32 0.0, %v1660
        %v1662 = vpop.f32.mrb[0].mxu0
        %v1663 = vadd.f32 0.0, %v1662
        %v1664 = vpop.f32.mrb[0].mxu0
        %v1665 = vadd.f32 0.0, %v1664
        %v1666 = vpop.f32.mrb[0].mxu0
        %v1667 = vadd.f32 0.0, %v1666
        %1668 = vmatprep.mubr.bf16.mxu0 0
        %1669 = vmatmul.mubr.bf16.gmra.mrb[0].mxu0 %v1075
        %v1670 = vpop.f32.mrb[0].mxu0
        %v1671 = vadd.f32 0.0, %v1670
        %v1672 = vpop.f32.mrb[0].mxu0
        %v1673 = vadd.f32 0.0, %v1672
        %v1674 = vpop.f32.mrb[0].mxu0
        %v1675 = vadd.f32 0.0, %v1674
        %v1676 = vpop.f32.mrb[0].mxu0
        %v1677 = vadd.f32 0.0, %v1676
        %1678 = vmatprep.mubr.bf16.mxu0 0
        %1679 = vmatmul.mubr.bf16.gmra.mrb[0].mxu0 %v1078
        %v1680 = vpop.f32.mrb[0].mxu0
        %v1681 = vadd.f32 0.0, %v1680
        %v1682 = vpop.f32.mrb[0].mxu0
        %v1683 = vadd.f32 0.0, %v1682
        %v1684 = vpop.f32.mrb[0].mxu0
        %v1685 = vadd.f32 0.0, %v1684
        %v1686 = vpop.f32.mrb[0].mxu0
        %v1687 = vadd.f32 0.0, %v1686
        %1688 = vmatprep.mubr.bf16.mxu0 0
        %1689 = vmatmul.mubr.bf16.gmra.mrb[0].mxu0 %v1081
        %v1690 = vpop.f32.mrb[0].mxu0
        %v1691 = vadd.f32 0.0, %v1690
        %v1692 = vpop.f32.mrb[0].mxu0
        %v1693 = vadd.f32 0.0, %v1692
        %v1694 = vpop.f32.mrb[0].mxu0
        %v1695 = vadd.f32 0.0, %v1694
        %v1696 = vpop.f32.mrb[0].mxu0
        %v1697 = vadd.f32 0.0, %v1696
        %1698 = vmatprep.mubr.bf16.mxu0 0
        %1699 = vmatmul.mubr.bf16.gmra.mrb[0].mxu0 %v1084
        %v1700 = vpop.f32.mrb[0].mxu0
        %v1701 = vadd.f32 0.0, %v1700
        %v1702 = vpop.f32.mrb[0].mxu0
        %v1703 = vadd.f32 0.0, %v1702
        %v1704 = vpop.f32.mrb[0].mxu0
        %v1705 = vadd.f32 0.0, %v1704
        %v1706 = vpop.f32.mrb[0].mxu0
        %v1707 = vadd.f32 0.0, %v1706
        %1708 = vmatprep.mubr.bf16.mxu0 0
        %1709 = vmatmul.mubr.bf16.gmra.mrb[0].mxu0 %v1087
        %v1710 = vpop.f32.mrb[0].mxu0
        %v1711 = vadd.f32 0.0, %v1710
        %v1712 = vpop.f32.mrb[0].mxu0
        %v1713 = vadd.f32 0.0, %v1712
        %v1714 = vpop.f32.mrb[0].mxu0
        %v1715 = vadd.f32 0.0, %v1714
        %v1716 = vpop.f32.mrb[0].mxu0
        %v1717 = vadd.f32 0.0, %v1716
        %1718 = vmatprep.mubr.bf16.mxu0 0
        %1719 = vmatmul.mubr.bf16.gmra.mrb[0].mxu0 %v1090
        %v1720 = vpop.f32.mrb[0].mxu0
        %v1721 = vadd.f32 0.0, %v1720
        %v1722 = vpop.f32.mrb[0].mxu0
        %v1723 = vadd.f32 0.0, %v1722
        %v1724 = vpop.f32.mrb[0].mxu0
        %v1725 = vadd.f32 0.0, %v1724
        %v1726 = vpop.f32.mrb[0].mxu0
        %v1727 = vadd.f32 0.0, %v1726
        %1728 = vmatprep.mubr.bf16.mxu0 0
        %1729 = vmatmul.mubr.bf16.gmra.mrb[0].mxu0 %v1093
        %v1730 = vpop.f32.mrb[0].mxu0
        %v1731 = vadd.f32 0.0, %v1730
        %v1732 = vpop.f32.mrb[0].mxu0
        %v1733 = vadd.f32 0.0, %v1732
        %v1734 = vpop.f32.mrb[0].mxu0
        %v1735 = vadd.f32 0.0, %v1734
        %v1736 = vpop.f32.mrb[0].mxu0
        %v1737 = vadd.f32 0.0, %v1736
        %1738 = vmatprep.mubr.bf16.mxu0 0
        %1739 = vmatmul.mubr.bf16.gmra.mrb[0].mxu0 %v1096
        %v1740 = vpop.f32.mrb[0].mxu0
        %v1741 = vadd.f32 0.0, %v1740
        %v1742 = vpop.f32.mrb[0].mxu0
        %v1743 = vadd.f32 0.0, %v1742
        %v1744 = vpop.f32.mrb[0].mxu0
        %v1745 = vadd.f32 0.0, %v1744
        %v1746 = vpop.f32.mrb[0].mxu0
        %v1747 = vadd.f32 0.0, %v1746
        %1748 = vmatprep.mubr.bf16.mxu0 0
        %1749 = vmatmul.mubr.bf16.gmra.mrb[0].mxu0 %v1099
        %v1750 = vpop.f32.mrb[0].mxu0
        %v1751 = vadd.f32 0.0, %v1750
        %v1752 = vpop.f32.mrb[0].mxu0
        %v1753 = vadd.f32 0.0, %v1752
        %v1754 = vpop.f32.mrb[0].mxu0
        %v1755 = vadd.f32 0.0, %v1754
        %v1756 = vpop.f32.mrb[0].mxu0
        %v1757 = vadd.f32 0.0, %v1756
        %1758 = vmatprep.mubr.bf16.mxu0 0
        %1759 = vmatmul.mubr.bf16.gmra.mrb[0].mxu0 %v1102
        %v1760 = vpop.f32.mrb[0].mxu0
        %v1761 = vadd.f32 0.0, %v1760
        %v1762 = vpop.f32.mrb[0].mxu0
        %v1763 = vadd.f32 0.0, %v1762
        %v1764 = vpop.f32.mrb[0].mxu0
        %v1765 = vadd.f32 0.0, %v1764
        %v1766 = vpop.f32.mrb[0].mxu0
        %v1767 = vadd.f32 0.0, %v1766
        %1768 = vmatprep.mubr.bf16.mxu0 0
        %1769 = vmatmul.mubr.bf16.gmra.mrb[0].mxu0 %v1105
        %v1770 = vpop.f32.mrb[0].mxu0
        %v1771 = vadd.f32 0.0, %v1770
        %v1772 = vpop.f32.mrb[0].mxu0
        %v1773 = vadd.f32 0.0, %v1772
        %v1774 = vpop.f32.mrb[0].mxu0
        %v1775 = vadd.f32 0.0, %v1774
        %v1776 = vpop.f32.mrb[0].mxu0
        %v1777 = vadd.f32 0.0, %v1776
        %1778 = vmatprep.mubr.bf16.mxu0 0
        %1779 = vmatmul.mubr.bf16.gmra.mrb[0].mxu0 %v1108
        %v1780 = vpop.f32.mrb[0].mxu0
        %v1781 = vadd.f32 0.0, %v1780
        %v1782 = vpop.f32.mrb[0].mxu0
        %v1783 = vadd.f32 0.0, %v1782
        %v1784 = vpop.f32.mrb[0].mxu0
        %v1785 = vadd.f32 0.0, %v1784
        %v1786 = vpop.f32.mrb[0].mxu0
        %v1787 = vadd.f32 0.0, %v1786
        %1788 = vmatprep.mubr.bf16.mxu0 0
        %1789 = vmatmul.mubr.bf16.gmra.mrb[0].mxu0 %v1111
        %v1790 = vpop.f32.mrb[0].mxu0
        %v1791 = vadd.f32 0.0, %v1790
        %v1792 = vpop.f32.mrb[0].mxu0
        %v1793 = vadd.f32 0.0, %v1792
        %v1794 = vpop.f32.mrb[0].mxu0
        %v1795 = vadd.f32 0.0, %v1794
        %v1796 = vpop.f32.mrb[0].mxu0
        %v1797 = vadd.f32 0.0, %v1796
        %1798 = vdwg.mxu0
        %1799 = vmatprep.subr.bf16.mxu0 %v1124
        %1800 = vmatpush1.bf16.msra.mxu0 %v1121
        %1801 = vmatprep.subr.bf16.mxu0 0
        %1802 = vmatpush1.bf16.msra.mxu0 0
        %1803 = vmatprep.subr.bf16.mxu0 0
        %1804 = vmatpush1.bf16.msra.mxu0 0
        %1805 = vmatprep.subr.bf16.mxu0 0
        %1806 = vmatpush1.bf16.msra.mxu0 0
        %1807 = vmatprep.subr.bf16.mxu0 0
        %1808 = vmatpush1.bf16.msra.mxu0 0
        %1809 = vmatprep.subr.bf16.mxu0 0
        %1810 = vmatpush1.bf16.msra.mxu0 0
        %1811 = vmatprep.subr.bf16.mxu0 0
        %1812 = vmatpush1.bf16.msra.mxu0 0
        %1813 = vmatprep.subr.bf16.mxu0 0
        %1814 = vmatpush1.bf16.msra.mxu0 0
        %1815 = vmatprep.subr.bf16.mxu0 0
        %1816 = vmatpush1.bf16.msra.mxu0 0
        %1817 = vmatprep.subr.bf16.mxu0 0
        %1818 = vmatpush1.bf16.msra.mxu0 0
        %1819 = vmatprep.subr.bf16.mxu0 0
        %1820 = vmatpush1.bf16.msra.mxu0 0
        %1821 = vmatprep.subr.bf16.mxu0 0
        %1822 = vmatpush1.bf16.msra.mxu0 0
        %1823 = vmatprep.subr.bf16.mxu0 0
        %1824 = vmatpush1.bf16.msra.mxu0 0
        %1825 = vmatprep.subr.bf16.mxu0 0
        %1826 = vmatpush1.bf16.msra.mxu0 0
        %1827 = vmatprep.subr.bf16.mxu0 0
        %1828 = vmatpush1.bf16.msra.mxu0 0
        %1829 = vmatprep.subr.bf16.mxu0 0
        %1830 = vmatpush1.bf16.msra.mxu0 0
        %1831 = vmatprep.mubr.bf16.mxu0 0
        %1832 = vmatmul.mubr.bf16.gmra.mrb[0].mxu0 %v922
        %v1833 = vpop.f32.mrb[0].mxu0
        %v1834 = vadd.f32 0.0, %v1833
        %v1835 = vpop.f32.mrb[0].mxu0
        %v1836 = vadd.f32 0.0, %v1835
        %v1837 = vpop.f32.mrb[0].mxu0
        %v1838 = vadd.f32 0.0, %v1837
        %v1839 = vpop.f32.mrb[0].mxu0
        %v1840 = vadd.f32 0.0, %v1839
        %1841 = vmatprep.mubr.bf16.mxu0 0
        %1842 = vmatmul.mubr.bf16.gmra.mrb[0].mxu0 %v925
        %v1843 = vpop.f32.mrb[0].mxu0
        %v1844 = vadd.f32 0.0, %v1843
        %v1845 = vpop.f32.mrb[0].mxu0
        %v1846 = vadd.f32 0.0, %v1845
        %v1847 = vpop.f32.mrb[0].mxu0
        %v1848 = vadd.f32 0.0, %v1847
        %v1849 = vpop.f32.mrb[0].mxu0
        %v1850 = vadd.f32 0.0, %v1849
        %1851 = vmatprep.mubr.bf16.mxu0 0
        %1852 = vmatmul.mubr.bf16.gmra.mrb[0].mxu0 %v928
        %v1853 = vpop.f32.mrb[0].mxu0
        %v1854 = vadd.f32 0.0, %v1853
        %v1855 = vpop.f32.mrb[0].mxu0
        %v1856 = vadd.f32 0.0, %v1855
        %v1857 = vpop.f32.mrb[0].mxu0
        %v1858 = vadd.f32 0.0, %v1857
        %v1859 = vpop.f32.mrb[0].mxu0
        %v1860 = vadd.f32 0.0, %v1859
        %1861 = vmatprep.mubr.bf16.mxu0 0
        %1862 = vmatmul.mubr.bf16.gmra.mrb[0].mxu0 %v931
        %v1863 = vpop.f32.mrb[0].mxu0
        %v1864 = vadd.f32 0.0, %v1863
        %v1865 = vpop.f32.mrb[0].mxu0
        %v1866 = vadd.f32 0.0, %v1865
        %v1867 = vpop.f32.mrb[0].mxu0
        %v1868 = vadd.f32 0.0, %v1867
        %v1869 = vpop.f32.mrb[0].mxu0
        %v1870 = vadd.f32 0.0, %v1869
        %1871 = vmatprep.mubr.bf16.mxu0 0
        %1872 = vmatmul.mubr.bf16.gmra.mrb[0].mxu0 %v934
        %v1873 = vpop.f32.mrb[0].mxu0
        %v1874 = vadd.f32 0.0, %v1873
        %v1875 = vpop.f32.mrb[0].mxu0
        %v1876 = vadd.f32 0.0, %v1875
        %v1877 = vpop.f32.mrb[0].mxu0
        %v1878 = vadd.f32 0.0, %v1877
        %v1879 = vpop.f32.mrb[0].mxu0
        %v1880 = vadd.f32 0.0, %v1879
        %1881 = vmatprep.mubr.bf16.mxu0 0
        %1882 = vmatmul.mubr.bf16.gmra.mrb[0].mxu0 %v937
        %v1883 = vpop.f32.mrb[0].mxu0
        %v1884 = vadd.f32 0.0, %v1883
        %v1885 = vpop.f32.mrb[0].mxu0
        %v1886 = vadd.f32 0.0, %v1885
        %v1887 = vpop.f32.mrb[0].mxu0
        %v1888 = vadd.f32 0.0, %v1887
        %v1889 = vpop.f32.mrb[0].mxu0
        %v1890 = vadd.f32 0.0, %v1889
        %1891 = vmatprep.mubr.bf16.mxu0 0
        %1892 = vmatmul.mubr.bf16.gmra.mrb[0].mxu0 %v940
        %v1893 = vpop.f32.mrb[0].mxu0
        %v1894 = vadd.f32 0.0, %v1893
        %v1895 = vpop.f32.mrb[0].mxu0
        %v1896 = vadd.f32 0.0, %v1895
        %v1897 = vpop.f32.mrb[0].mxu0
        %v1898 = vadd.f32 0.0, %v1897
        %v1899 = vpop.f32.mrb[0].mxu0
        %v1900 = vadd.f32 0.0, %v1899
        %1901 = vmatprep.mubr.bf16.mxu0 0
        %1902 = vmatmul.mubr.bf16.gmra.mrb[0].mxu0 %v943
        %v1903 = vpop.f32.mrb[0].mxu0
        %v1904 = vadd.f32 0.0, %v1903
        %v1905 = vpop.f32.mrb[0].mxu0
        %v1906 = vadd.f32 0.0, %v1905
        %v1907 = vpop.f32.mrb[0].mxu0
        %v1908 = vadd.f32 0.0, %v1907
        %v1909 = vpop.f32.mrb[0].mxu0
        %v1910 = vadd.f32 0.0, %v1909
        %1911 = vmatprep.mubr.bf16.mxu0 0
        %1912 = vmatmul.mubr.bf16.gmra.mrb[0].mxu0 %v946
        %v1913 = vpop.f32.mrb[0].mxu0
        %v1914 = vadd.f32 0.0, %v1913
        %v1915 = vpop.f32.mrb[0].mxu0
        %v1916 = vadd.f32 0.0, %v1915
        %v1917 = vpop.f32.mrb[0].mxu0
        %v1918 = vadd.f32 0.0, %v1917
        %v1919 = vpop.f32.mrb[0].mxu0
        %v1920 = vadd.f32 0.0, %v1919
        %1921 = vmatprep.mubr.bf16.mxu0 0
        %1922 = vmatmul.mubr.bf16.gmra.mrb[0].mxu0 %v949
        %v1923 = vpop.f32.mrb[0].mxu0
        %v1924 = vadd.f32 0.0, %v1923
        %v1925 = vpop.f32.mrb[0].mxu0
        %v1926 = vadd.f32 0.0, %v1925
        %v1927 = vpop.f32.mrb[0].mxu0
        %v1928 = vadd.f32 0.0, %v1927
        %v1929 = vpop.f32.mrb[0].mxu0
        %v1930 = vadd.f32 0.0, %v1929
        %1931 = vmatprep.mubr.bf16.mxu0 0
        %1932 = vmatmul.mubr.bf16.gmra.mrb[0].mxu0 %v952
        %v1933 = vpop.f32.mrb[0].mxu0
        %v1934 = vadd.f32 0.0, %v1933
        %v1935 = vpop.f32.mrb[0].mxu0
        %v1936 = vadd.f32 0.0, %v1935
        %v1937 = vpop.f32.mrb[0].mxu0
        %v1938 = vadd.f32 0.0, %v1937
        %v1939 = vpop.f32.mrb[0].mxu0
        %v1940 = vadd.f32 0.0, %v1939
        %1941 = vmatprep.mubr.bf16.mxu0 0
        %1942 = vmatmul.mubr.bf16.gmra.mrb[0].mxu0 %v955
        %v1943 = vpop.f32.mrb[0].mxu0
        %v1944 = vadd.f32 0.0, %v1943
        %v1945 = vpop.f32.mrb[0].mxu0
        %v1946 = vadd.f32 0.0, %v1945
        %v1947 = vpop.f32.mrb[0].mxu0
        %v1948 = vadd.f32 0.0, %v1947
        %v1949 = vpop.f32.mrb[0].mxu0
        %v1950 = vadd.f32 0.0, %v1949
        %1951 = vmatprep.mubr.bf16.mxu0 0
        %1952 = vmatmul.mubr.bf16.gmra.mrb[0].mxu0 %v958
        %v1953 = vpop.f32.mrb[0].mxu0
        %v1954 = vadd.f32 0.0, %v1953
        %v1955 = vpop.f32.mrb[0].mxu0
        %v1956 = vadd.f32 0.0, %v1955
        %v1957 = vpop.f32.mrb[0].mxu0
        %v1958 = vadd.f32 0.0, %v1957
        %v1959 = vpop.f32.mrb[0].mxu0
        %v1960 = vadd.f32 0.0, %v1959
        %1961 = vmatprep.mubr.bf16.mxu0 0
        %1962 = vmatmul.mubr.bf16.gmra.mrb[0].mxu0 %v961
        %v1963 = vpop.f32.mrb[0].mxu0
        %v1964 = vadd.f32 0.0, %v1963
        %v1965 = vpop.f32.mrb[0].mxu0
        %v1966 = vadd.f32 0.0, %v1965
        %v1967 = vpop.f32.mrb[0].mxu0
        %v1968 = vadd.f32 0.0, %v1967
        %v1969 = vpop.f32.mrb[0].mxu0
        %v1970 = vadd.f32 0.0, %v1969
        %1971 = vmatprep.mubr.bf16.mxu0 0
        %1972 = vmatmul.mubr.bf16.gmra.mrb[0].mxu0 %v964
        %v1973 = vpop.f32.mrb[0].mxu0
        %v1974 = vadd.f32 0.0, %v1973
        %v1975 = vpop.f32.mrb[0].mxu0
        %v1976 = vadd.f32 0.0, %v1975
        %v1977 = vpop.f32.mrb[0].mxu0
        %v1978 = vadd.f32 0.0, %v1977
        %v1979 = vpop.f32.mrb[0].mxu0
        %v1980 = vadd.f32 0.0, %v1979
        %1981 = vmatprep.mubr.bf16.mxu0 0
        %1982 = vmatmul.mubr.bf16.gmra.mrb[0].mxu0 %v967
        %v1983 = vpop.f32.mrb[0].mxu0
        %v1984 = vadd.f32 0.0, %v1983
        %v1985 = vpop.f32.mrb[0].mxu0
        %v1986 = vadd.f32 0.0, %v1985
        %v1987 = vpop.f32.mrb[0].mxu0
        %v1988 = vadd.f32 0.0, %v1987
        %v1989 = vpop.f32.mrb[0].mxu0
        %v1990 = vadd.f32 0.0, %v1989
        %1991 = vmatprep.mubr.bf16.mxu0 0
        %1992 = vmatmul.mubr.bf16.gmra.mrb[0].mxu0 %v970
        %v1993 = vpop.f32.mrb[0].mxu0
        %v1994 = vadd.f32 0.0, %v1993
        %v1995 = vpop.f32.mrb[0].mxu0
        %v1996 = vadd.f32 0.0, %v1995
        %v1997 = vpop.f32.mrb[0].mxu0
        %v1998 = vadd.f32 0.0, %v1997
        %v1999 = vpop.f32.mrb[0].mxu0
        %v2000 = vadd.f32 0.0, %v1999
        %2001 = vmatprep.mubr.bf16.mxu0 0
        %2002 = vmatmul.mubr.bf16.gmra.mrb[0].mxu0 %v973
        %v2003 = vpop.f32.mrb[0].mxu0
        %v2004 = vadd.f32 0.0, %v2003
        %v2005 = vpop.f32.mrb[0].mxu0
        %v2006 = vadd.f32 0.0, %v2005
        %v2007 = vpop.f32.mrb[0].mxu0
        %v2008 = vadd.f32 0.0, %v2007
        %v2009 = vpop.f32.mrb[0].mxu0
        %v2010 = vadd.f32 0.0, %v2009
        %2011 = vmatprep.mubr.bf16.mxu0 0
        %2012 = vmatmul.mubr.bf16.gmra.mrb[0].mxu0 %v976
        %v2013 = vpop.f32.mrb[0].mxu0
        %v2014 = vadd.f32 0.0, %v2013
        %v2015 = vpop.f32.mrb[0].mxu0
        %v2016 = vadd.f32 0.0, %v2015
        %v2017 = vpop.f32.mrb[0].mxu0
        %v2018 = vadd.f32 0.0, %v2017
        %v2019 = vpop.f32.mrb[0].mxu0
        %v2020 = vadd.f32 0.0, %v2019
        %2021 = vmatprep.mubr.bf16.mxu0 0
        %2022 = vmatmul.mubr.bf16.gmra.mrb[0].mxu0 %v979
        %v2023 = vpop.f32.mrb[0].mxu0
        %v2024 = vadd.f32 0.0, %v2023
        %v2025 = vpop.f32.mrb[0].mxu0
        %v2026 = vadd.f32 0.0, %v2025
        %v2027 = vpop.f32.mrb[0].mxu0
        %v2028 = vadd.f32 0.0, %v2027
        %v2029 = vpop.f32.mrb[0].mxu0
        %v2030 = vadd.f32 0.0, %v2029
        %2031 = vmatprep.mubr.bf16.mxu0 0
        %2032 = vmatmul.mubr.bf16.gmra.mrb[0].mxu0 %v982
        %v2033 = vpop.f32.mrb[0].mxu0
        %v2034 = vadd.f32 0.0, %v2033
        %v2035 = vpop.f32.mrb[0].mxu0
        %v2036 = vadd.f32 0.0, %v2035
        %v2037 = vpop.f32.mrb[0].mxu0
        %v2038 = vadd.f32 0.0, %v2037
        %v2039 = vpop.f32.mrb[0].mxu0
        %v2040 = vadd.f32 0.0, %v2039
        %2041 = vmatprep.mubr.bf16.mxu0 0
        %2042 = vmatmul.mubr.bf16.gmra.mrb[0].mxu0 %v985
        %v2043 = vpop.f32.mrb[0].mxu0
        %v2044 = vadd.f32 0.0, %v2043
        %v2045 = vpop.f32.mrb[0].mxu0
        %v2046 = vadd.f32 0.0, %v2045
        %v2047 = vpop.f32.mrb[0].mxu0
        %v2048 = vadd.f32 0.0, %v2047
        %v2049 = vpop.f32.mrb[0].mxu0
        %v2050 = vadd.f32 0.0, %v2049
        %2051 = vmatprep.mubr.bf16.mxu0 0
        %2052 = vmatmul.mubr.bf16.gmra.mrb[0].mxu0 %v988
        %v2053 = vpop.f32.mrb[0].mxu0
        %v2054 = vadd.f32 0.0, %v2053
        %v2055 = vpop.f32.mrb[0].mxu0
        %v2056 = vadd.f32 0.0, %v2055
        %v2057 = vpop.f32.mrb[0].mxu0
        %v2058 = vadd.f32 0.0, %v2057
        %v2059 = vpop.f32.mrb[0].mxu0
        %v2060 = vadd.f32 0.0, %v2059
        %2061 = vmatprep.mubr.bf16.mxu0 0
        %2062 = vmatmul.mubr.bf16.gmra.mrb[0].mxu0 %v991
        %v2063 = vpop.f32.mrb[0].mxu0
        %v2064 = vadd.f32 0.0, %v2063
        %v2065 = vpop.f32.mrb[0].mxu0
        %v2066 = vadd.f32 0.0, %v2065
        %v2067 = vpop.f32.mrb[0].mxu0
        %v2068 = vadd.f32 0.0, %v2067
        %v2069 = vpop.f32.mrb[0].mxu0
        %v2070 = vadd.f32 0.0, %v2069
        %2071 = vmatprep.mubr.bf16.mxu0 0
        %2072 = vmatmul.mubr.bf16.gmra.mrb[0].mxu0 %v994
        %v2073 = vpop.f32.mrb[0].mxu0
        %v2074 = vadd.f32 0.0, %v2073
        %v2075 = vpop.f32.mrb[0].mxu0
        %v2076 = vadd.f32 0.0, %v2075
        %v2077 = vpop.f32.mrb[0].mxu0
        %v2078 = vadd.f32 0.0, %v2077
        %v2079 = vpop.f32.mrb[0].mxu0
        %v2080 = vadd.f32 0.0, %v2079
        %2081 = vmatprep.mubr.bf16.mxu0 0
        %2082 = vmatmul.mubr.bf16.gmra.mrb[0].mxu0 %v997
        %v2083 = vpop.f32.mrb[0].mxu0
        %v2084 = vadd.f32 0.0, %v2083
        %v2085 = vpop.f32.mrb[0].mxu0
        %v2086 = vadd.f32 0.0, %v2085
        %v2087 = vpop.f32.mrb[0].mxu0
        %v2088 = vadd.f32 0.0, %v2087
        %v2089 = vpop.f32.mrb[0].mxu0
        %v2090 = vadd.f32 0.0, %v2089
        %2091 = vmatprep.mubr.bf16.mxu0 0
        %2092 = vmatmul.mubr.bf16.gmra.mrb[0].mxu0 %v1000
        %v2093 = vpop.f32.mrb[0].mxu0
        %v2094 = vadd.f32 0.0, %v2093
        %v2095 = vpop.f32.mrb[0].mxu0
        %v2096 = vadd.f32 0.0, %v2095
        %v2097 = vpop.f32.mrb[0].mxu0
        %v2098 = vadd.f32 0.0, %v2097
        %v2099 = vpop.f32.mrb[0].mxu0
        %v2100 = vadd.f32 0.0, %v2099
        %2101 = vmatprep.mubr.bf16.mxu0 0
        %2102 = vmatmul.mubr.bf16.gmra.mrb[0].mxu0 %v1003
        %v2103 = vpop.f32.mrb[0].mxu0
        %v2104 = vadd.f32 0.0, %v2103
        %v2105 = vpop.f32.mrb[0].mxu0
        %v2106 = vadd.f32 0.0, %v2105
        %v2107 = vpop.f32.mrb[0].mxu0
        %v2108 = vadd.f32 0.0, %v2107
        %v2109 = vpop.f32.mrb[0].mxu0
        %v2110 = vadd.f32 0.0, %v2109
        %2111 = vmatprep.mubr.bf16.mxu0 0
        %2112 = vmatmul.mubr.bf16.gmra.mrb[0].mxu0 %v1006
        %v2113 = vpop.f32.mrb[0].mxu0
        %v2114 = vadd.f32 0.0, %v2113
        %v2115 = vpop.f32.mrb[0].mxu0
        %v2116 = vadd.f32 0.0, %v2115
        %v2117 = vpop.f32.mrb[0].mxu0
        %v2118 = vadd.f32 0.0, %v2117
        %v2119 = vpop.f32.mrb[0].mxu0
        %v2120 = vadd.f32 0.0, %v2119
        %2121 = vmatprep.mubr.bf16.mxu0 0
        %2122 = vmatmul.mubr.bf16.gmra.mrb[0].mxu0 %v1009
        %v2123 = vpop.f32.mrb[0].mxu0
        %v2124 = vadd.f32 0.0, %v2123
        %v2125 = vpop.f32.mrb[0].mxu0
        %v2126 = vadd.f32 0.0, %v2125
        %v2127 = vpop.f32.mrb[0].mxu0
        %v2128 = vadd.f32 0.0, %v2127
        %v2129 = vpop.f32.mrb[0].mxu0
        %v2130 = vadd.f32 0.0, %v2129
        %2131 = vmatprep.mubr.bf16.mxu0 0
        %2132 = vmatmul.mubr.bf16.gmra.mrb[0].mxu0 %v1012
        %v2133 = vpop.f32.mrb[0].mxu0
        %v2134 = vadd.f32 0.0, %v2133
        %v2135 = vpop.f32.mrb[0].mxu0
        %v2136 = vadd.f32 0.0, %v2135
        %v2137 = vpop.f32.mrb[0].mxu0
        %v2138 = vadd.f32 0.0, %v2137
        %v2139 = vpop.f32.mrb[0].mxu0
        %v2140 = vadd.f32 0.0, %v2139
        %2141 = vmatprep.mubr.bf16.mxu0 0
        %2142 = vmatmul.mubr.bf16.gmra.mrb[0].mxu0 %v1015
        %v2143 = vpop.f32.mrb[0].mxu0
        %v2144 = vadd.f32 0.0, %v2143
        %v2145 = vpop.f32.mrb[0].mxu0
        %v2146 = vadd.f32 0.0, %v2145
        %v2147 = vpop.f32.mrb[0].mxu0
        %v2148 = vadd.f32 0.0, %v2147
        %v2149 = vpop.f32.mrb[0].mxu0
        %v2150 = vadd.f32 0.0, %v2149
        %2151 = vmatprep.mubr.bf16.mxu0 0
        %2152 = vmatmul.mubr.bf16.gmra.mrb[0].mxu0 %v1018
        %v2153 = vpop.f32.mrb[0].mxu0
        %v2154 = vadd.f32 0.0, %v2153
        %v2155 = vpop.f32.mrb[0].mxu0
        %v2156 = vadd.f32 0.0, %v2155
        %v2157 = vpop.f32.mrb[0].mxu0
        %v2158 = vadd.f32 0.0, %v2157
        %v2159 = vpop.f32.mrb[0].mxu0
        %v2160 = vadd.f32 0.0, %v2159
        %2161 = vmatprep.mubr.bf16.mxu0 0
        %2162 = vmatmul.mubr.bf16.gmra.mrb[0].mxu0 %v1021
        %v2163 = vpop.f32.mrb[0].mxu0
        %v2164 = vadd.f32 0.0, %v2163
        %v2165 = vpop.f32.mrb[0].mxu0
        %v2166 = vadd.f32 0.0, %v2165
        %v2167 = vpop.f32.mrb[0].mxu0
        %v2168 = vadd.f32 0.0, %v2167
        %v2169 = vpop.f32.mrb[0].mxu0
        %v2170 = vadd.f32 0.0, %v2169
        %2171 = vmatprep.mubr.bf16.mxu0 0
        %2172 = vmatmul.mubr.bf16.gmra.mrb[0].mxu0 %v1024
        %v2173 = vpop.f32.mrb[0].mxu0
        %v2174 = vadd.f32 0.0, %v2173
        %v2175 = vpop.f32.mrb[0].mxu0
        %v2176 = vadd.f32 0.0, %v2175
        %v2177 = vpop.f32.mrb[0].mxu0
        %v2178 = vadd.f32 0.0, %v2177
        %v2179 = vpop.f32.mrb[0].mxu0
        %v2180 = vadd.f32 0.0, %v2179
        %2181 = vmatprep.mubr.bf16.mxu0 0
        %2182 = vmatmul.mubr.bf16.gmra.mrb[0].mxu0 %v1027
        %v2183 = vpop.f32.mrb[0].mxu0
        %v2184 = vadd.f32 0.0, %v2183
        %v2185 = vpop.f32.mrb[0].mxu0
        %v2186 = vadd.f32 0.0, %v2185
        %v2187 = vpop.f32.mrb[0].mxu0
        %v2188 = vadd.f32 0.0, %v2187
        %v2189 = vpop.f32.mrb[0].mxu0
        %v2190 = vadd.f32 0.0, %v2189
        %2191 = vmatprep.mubr.bf16.mxu0 0
        %2192 = vmatmul.mubr.bf16.gmra.mrb[0].mxu0 %v1030
        %v2193 = vpop.f32.mrb[0].mxu0
        %v2194 = vadd.f32 0.0, %v2193
        %v2195 = vpop.f32.mrb[0].mxu0
        %v2196 = vadd.f32 0.0, %v2195
        %v2197 = vpop.f32.mrb[0].mxu0
        %v2198 = vadd.f32 0.0, %v2197
        %v2199 = vpop.f32.mrb[0].mxu0
        %v2200 = vadd.f32 0.0, %v2199
        %2201 = vmatprep.mubr.bf16.mxu0 0
        %2202 = vmatmul.mubr.bf16.gmra.mrb[0].mxu0 %v1033
        %v2203 = vpop.f32.mrb[0].mxu0
        %v2204 = vadd.f32 0.0, %v2203
        %v2205 = vpop.f32.mrb[0].mxu0
        %v2206 = vadd.f32 0.0, %v2205
        %v2207 = vpop.f32.mrb[0].mxu0
        %v2208 = vadd.f32 0.0, %v2207
        %v2209 = vpop.f32.mrb[0].mxu0
        %v2210 = vadd.f32 0.0, %v2209
        %2211 = vmatprep.mubr.bf16.mxu0 0
        %2212 = vmatmul.mubr.bf16.gmra.mrb[0].mxu0 %v1036
        %v2213 = vpop.f32.mrb[0].mxu0
        %v2214 = vadd.f32 0.0, %v2213
        %v2215 = vpop.f32.mrb[0].mxu0
        %v2216 = vadd.f32 0.0, %v2215
        %v2217 = vpop.f32.mrb[0].mxu0
        %v2218 = vadd.f32 0.0, %v2217
        %v2219 = vpop.f32.mrb[0].mxu0
        %v2220 = vadd.f32 0.0, %v2219
        %2221 = vmatprep.mubr.bf16.mxu0 0
        %2222 = vmatmul.mubr.bf16.gmra.mrb[0].mxu0 %v1039
        %v2223 = vpop.f32.mrb[0].mxu0
        %v2224 = vadd.f32 0.0, %v2223
        %v2225 = vpop.f32.mrb[0].mxu0
        %v2226 = vadd.f32 0.0, %v2225
        %v2227 = vpop.f32.mrb[0].mxu0
        %v2228 = vadd.f32 0.0, %v2227
        %v2229 = vpop.f32.mrb[0].mxu0
        %v2230 = vadd.f32 0.0, %v2229
        %2231 = vmatprep.mubr.bf16.mxu0 0
        %2232 = vmatmul.mubr.bf16.gmra.mrb[0].mxu0 %v1042
        %v2233 = vpop.f32.mrb[0].mxu0
        %v2234 = vadd.f32 0.0, %v2233
        %v2235 = vpop.f32.mrb[0].mxu0
        %v2236 = vadd.f32 0.0, %v2235
        %v2237 = vpop.f32.mrb[0].mxu0
        %v2238 = vadd.f32 0.0, %v2237
        %v2239 = vpop.f32.mrb[0].mxu0
        %v2240 = vadd.f32 0.0, %v2239
        %2241 = vmatprep.mubr.bf16.mxu0 0
        %2242 = vmatmul.mubr.bf16.gmra.mrb[0].mxu0 %v1045
        %v2243 = vpop.f32.mrb[0].mxu0
        %v2244 = vadd.f32 0.0, %v2243
        %v2245 = vpop.f32.mrb[0].mxu0
        %v2246 = vadd.f32 0.0, %v2245
        %v2247 = vpop.f32.mrb[0].mxu0
        %v2248 = vadd.f32 0.0, %v2247
        %v2249 = vpop.f32.mrb[0].mxu0
        %v2250 = vadd.f32 0.0, %v2249
        %2251 = vmatprep.mubr.bf16.mxu0 0
        %2252 = vmatmul.mubr.bf16.gmra.mrb[0].mxu0 %v1048
        %v2253 = vpop.f32.mrb[0].mxu0
        %v2254 = vadd.f32 0.0, %v2253
        %v2255 = vpop.f32.mrb[0].mxu0
        %v2256 = vadd.f32 0.0, %v2255
        %v2257 = vpop.f32.mrb[0].mxu0
        %v2258 = vadd.f32 0.0, %v2257
        %v2259 = vpop.f32.mrb[0].mxu0
        %v2260 = vadd.f32 0.0, %v2259
        %2261 = vmatprep.mubr.bf16.mxu0 0
        %2262 = vmatmul.mubr.bf16.gmra.mrb[0].mxu0 %v1051
        %v2263 = vpop.f32.mrb[0].mxu0
        %v2264 = vadd.f32 0.0, %v2263
        %v2265 = vpop.f32.mrb[0].mxu0
        %v2266 = vadd.f32 0.0, %v2265
        %v2267 = vpop.f32.mrb[0].mxu0
        %v2268 = vadd.f32 0.0, %v2267
        %v2269 = vpop.f32.mrb[0].mxu0
        %v2270 = vadd.f32 0.0, %v2269
        %2271 = vmatprep.mubr.bf16.mxu0 0
        %2272 = vmatmul.mubr.bf16.gmra.mrb[0].mxu0 %v1054
        %v2273 = vpop.f32.mrb[0].mxu0
        %v2274 = vadd.f32 0.0, %v2273
        %v2275 = vpop.f32.mrb[0].mxu0
        %v2276 = vadd.f32 0.0, %v2275
        %v2277 = vpop.f32.mrb[0].mxu0
        %v2278 = vadd.f32 0.0, %v2277
        %v2279 = vpop.f32.mrb[0].mxu0
        %v2280 = vadd.f32 0.0, %v2279
        %2281 = vmatprep.mubr.bf16.mxu0 0
        %2282 = vmatmul.mubr.bf16.gmra.mrb[0].mxu0 %v1057
        %v2283 = vpop.f32.mrb[0].mxu0
        %v2284 = vadd.f32 0.0, %v2283
        %v2285 = vpop.f32.mrb[0].mxu0
        %v2286 = vadd.f32 0.0, %v2285
        %v2287 = vpop.f32.mrb[0].mxu0
        %v2288 = vadd.f32 0.0, %v2287
        %v2289 = vpop.f32.mrb[0].mxu0
        %v2290 = vadd.f32 0.0, %v2289
        %2291 = vmatprep.mubr.bf16.mxu0 0
        %2292 = vmatmul.mubr.bf16.gmra.mrb[0].mxu0 %v1060
        %v2293 = vpop.f32.mrb[0].mxu0
        %v2294 = vadd.f32 0.0, %v2293
        %v2295 = vpop.f32.mrb[0].mxu0
        %v2296 = vadd.f32 0.0, %v2295
        %v2297 = vpop.f32.mrb[0].mxu0
        %v2298 = vadd.f32 0.0, %v2297
        %v2299 = vpop.f32.mrb[0].mxu0
        %v2300 = vadd.f32 0.0, %v2299
        %2301 = vmatprep.mubr.bf16.mxu0 0
        %2302 = vmatmul.mubr.bf16.gmra.mrb[0].mxu0 %v1063
        %v2303 = vpop.f32.mrb[0].mxu0
        %v2304 = vadd.f32 0.0, %v2303
        %v2305 = vpop.f32.mrb[0].mxu0
        %v2306 = vadd.f32 0.0, %v2305
        %v2307 = vpop.f32.mrb[0].mxu0
        %v2308 = vadd.f32 0.0, %v2307
        %v2309 = vpop.f32.mrb[0].mxu0
        %v2310 = vadd.f32 0.0, %v2309
        %2311 = vmatprep.mubr.bf16.mxu0 0
        %2312 = vmatmul.mubr.bf16.gmra.mrb[0].mxu0 %v1066
        %v2313 = vpop.f32.mrb[0].mxu0
        %v2314 = vadd.f32 0.0, %v2313
        %v2315 = vpop.f32.mrb[0].mxu0
        %v2316 = vadd.f32 0.0, %v2315
        %v2317 = vpop.f32.mrb[0].mxu0
        %v2318 = vadd.f32 0.0, %v2317
        %v2319 = vpop.f32.mrb[0].mxu0
        %v2320 = vadd.f32 0.0, %v2319
        %2321 = vmatprep.mubr.bf16.mxu0 0
        %2322 = vmatmul.mubr.bf16.gmra.mrb[0].mxu0 %v1069
        %v2323 = vpop.f32.mrb[0].mxu0
        %v2324 = vadd.f32 0.0, %v2323
        %v2325 = vpop.f32.mrb[0].mxu0
        %v2326 = vadd.f32 0.0, %v2325
        %v2327 = vpop.f32.mrb[0].mxu0
        %v2328 = vadd.f32 0.0, %v2327
        %v2329 = vpop.f32.mrb[0].mxu0
        %v2330 = vadd.f32 0.0, %v2329
        %2331 = vmatprep.mubr.bf16.mxu0 0
        %2332 = vmatmul.mubr.bf16.gmra.mrb[0].mxu0 %v1072
        %v2333 = vpop.f32.mrb[0].mxu0
        %v2334 = vadd.f32 0.0, %v2333
        %v2335 = vpop.f32.mrb[0].mxu0
        %v2336 = vadd.f32 0.0, %v2335
        %v2337 = vpop.f32.mrb[0].mxu0
        %v2338 = vadd.f32 0.0, %v2337
        %v2339 = vpop.f32.mrb[0].mxu0
        %v2340 = vadd.f32 0.0, %v2339
        %2341 = vmatprep.mubr.bf16.mxu0 0
        %2342 = vmatmul.mubr.bf16.gmra.mrb[0].mxu0 %v1075
        %v2343 = vpop.f32.mrb[0].mxu0
        %v2344 = vadd.f32 0.0, %v2343
        %v2345 = vpop.f32.mrb[0].mxu0
        %v2346 = vadd.f32 0.0, %v2345
        %v2347 = vpop.f32.mrb[0].mxu0
        %v2348 = vadd.f32 0.0, %v2347
        %v2349 = vpop.f32.mrb[0].mxu0
        %v2350 = vadd.f32 0.0, %v2349
        %2351 = vmatprep.mubr.bf16.mxu0 0
        %2352 = vmatmul.mubr.bf16.gmra.mrb[0].mxu0 %v1078
        %v2353 = vpop.f32.mrb[0].mxu0
        %v2354 = vadd.f32 0.0, %v2353
        %v2355 = vpop.f32.mrb[0].mxu0
        %v2356 = vadd.f32 0.0, %v2355
        %v2357 = vpop.f32.mrb[0].mxu0
        %v2358 = vadd.f32 0.0, %v2357
        %v2359 = vpop.f32.mrb[0].mxu0
        %v2360 = vadd.f32 0.0, %v2359
        %2361 = vmatprep.mubr.bf16.mxu0 0
        %2362 = vmatmul.mubr.bf16.gmra.mrb[0].mxu0 %v1081
        %v2363 = vpop.f32.mrb[0].mxu0
        %v2364 = vadd.f32 0.0, %v2363
        %v2365 = vpop.f32.mrb[0].mxu0
        %v2366 = vadd.f32 0.0, %v2365
        %v2367 = vpop.f32.mrb[0].mxu0
        %v2368 = vadd.f32 0.0, %v2367
        %v2369 = vpop.f32.mrb[0].mxu0
        %v2370 = vadd.f32 0.0, %v2369
        %2371 = vmatprep.mubr.bf16.mxu0 0
        %2372 = vmatmul.mubr.bf16.gmra.mrb[0].mxu0 %v1084
        %v2373 = vpop.f32.mrb[0].mxu0
        %v2374 = vadd.f32 0.0, %v2373
        %v2375 = vpop.f32.mrb[0].mxu0
        %v2376 = vadd.f32 0.0, %v2375
        %v2377 = vpop.f32.mrb[0].mxu0
        %v2378 = vadd.f32 0.0, %v2377
        %v2379 = vpop.f32.mrb[0].mxu0
        %v2380 = vadd.f32 0.0, %v2379
        %2381 = vmatprep.mubr.bf16.mxu0 0
        %2382 = vmatmul.mubr.bf16.gmra.mrb[0].mxu0 %v1087
        %v2383 = vpop.f32.mrb[0].mxu0
        %v2384 = vadd.f32 0.0, %v2383
        %v2385 = vpop.f32.mrb[0].mxu0
        %v2386 = vadd.f32 0.0, %v2385
        %v2387 = vpop.f32.mrb[0].mxu0
        %v2388 = vadd.f32 0.0, %v2387
        %v2389 = vpop.f32.mrb[0].mxu0
        %v2390 = vadd.f32 0.0, %v2389
        %2391 = vmatprep.mubr.bf16.mxu0 0
        %2392 = vmatmul.mubr.bf16.gmra.mrb[0].mxu0 %v1090
        %v2393 = vpop.f32.mrb[0].mxu0
        %v2394 = vadd.f32 0.0, %v2393
        %v2395 = vpop.f32.mrb[0].mxu0
        %v2396 = vadd.f32 0.0, %v2395
        %v2397 = vpop.f32.mrb[0].mxu0
        %v2398 = vadd.f32 0.0, %v2397
        %v2399 = vpop.f32.mrb[0].mxu0
        %v2400 = vadd.f32 0.0, %v2399
        %2401 = vmatprep.mubr.bf16.mxu0 0
        %2402 = vmatmul.mubr.bf16.gmra.mrb[0].mxu0 %v1093
        %v2403 = vpop.f32.mrb[0].mxu0
        %v2404 = vadd.f32 0.0, %v2403
        %v2405 = vpop.f32.mrb[0].mxu0
        %v2406 = vadd.f32 0.0, %v2405
        %v2407 = vpop.f32.mrb[0].mxu0
        %v2408 = vadd.f32 0.0, %v2407
        %v2409 = vpop.f32.mrb[0].mxu0
        %v2410 = vadd.f32 0.0, %v2409
        %2411 = vmatprep.mubr.bf16.mxu0 0
        %2412 = vmatmul.mubr.bf16.gmra.mrb[0].mxu0 %v1096
        %v2413 = vpop.f32.mrb[0].mxu0
        %v2414 = vadd.f32 0.0, %v2413
        %v2415 = vpop.f32.mrb[0].mxu0
        %v2416 = vadd.f32 0.0, %v2415
        %v2417 = vpop.f32.mrb[0].mxu0
        %v2418 = vadd.f32 0.0, %v2417
        %v2419 = vpop.f32.mrb[0].mxu0
        %v2420 = vadd.f32 0.0, %v2419
        %2421 = vmatprep.mubr.bf16.mxu0 0
        %2422 = vmatmul.mubr.bf16.gmra.mrb[0].mxu0 %v1099
        %v2423 = vpop.f32.mrb[0].mxu0
        %v2424 = vadd.f32 0.0, %v2423
        %v2425 = vpop.f32.mrb[0].mxu0
        %v2426 = vadd.f32 0.0, %v2425
        %v2427 = vpop.f32.mrb[0].mxu0
        %v2428 = vadd.f32 0.0, %v2427
        %v2429 = vpop.f32.mrb[0].mxu0
        %v2430 = vadd.f32 0.0, %v2429
        %2431 = vmatprep.mubr.bf16.mxu0 0
        %2432 = vmatmul.mubr.bf16.gmra.mrb[0].mxu0 %v1102
        %v2433 = vpop.f32.mrb[0].mxu0
        %v2434 = vadd.f32 0.0, %v2433
        %v2435 = vpop.f32.mrb[0].mxu0
        %v2436 = vadd.f32 0.0, %v2435
        %v2437 = vpop.f32.mrb[0].mxu0
        %v2438 = vadd.f32 0.0, %v2437
        %v2439 = vpop.f32.mrb[0].mxu0
        %v2440 = vadd.f32 0.0, %v2439
        %2441 = vmatprep.mubr.bf16.mxu0 0
        %2442 = vmatmul.mubr.bf16.gmra.mrb[0].mxu0 %v1105
        %v2443 = vpop.f32.mrb[0].mxu0
        %v2444 = vadd.f32 0.0, %v2443
        %v2445 = vpop.f32.mrb[0].mxu0
        %v2446 = vadd.f32 0.0, %v2445
        %v2447 = vpop.f32.mrb[0].mxu0
        %v2448 = vadd.f32 0.0, %v2447
        %v2449 = vpop.f32.mrb[0].mxu0
        %v2450 = vadd.f32 0.0, %v2449
        %2451 = vmatprep.mubr.bf16.mxu0 0
        %2452 = vmatmul.mubr.bf16.gmra.mrb[0].mxu0 %v1108
        %v2453 = vpop.f32.mrb[0].mxu0
        %v2454 = vadd.f32 0.0, %v2453
        %v2455 = vpop.f32.mrb[0].mxu0
        %v2456 = vadd.f32 0.0, %v2455
        %v2457 = vpop.f32.mrb[0].mxu0
        %v2458 = vadd.f32 0.0, %v2457
        %v2459 = vpop.f32.mrb[0].mxu0
        %v2460 = vadd.f32 0.0, %v2459
        %2461 = vmatprep.mubr.bf16.mxu0 0
        %2462 = vmatmul.mubr.bf16.gmra.mrb[0].mxu0 %v1111
        %v2463 = vpop.f32.mrb[0].mxu0
        %v2464 = vadd.f32 0.0, %v2463
        %v2465 = vpop.f32.mrb[0].mxu0
        %v2466 = vadd.f32 0.0, %v2465
        %v2467 = vpop.f32.mrb[0].mxu0
        %v2468 = vadd.f32 0.0, %v2467
        %v2469 = vpop.f32.mrb[0].mxu0
        %v2470 = vadd.f32 0.0, %v2469
        %2471 = vdwg.mxu0
        %v2472 = vmax.f32 %v1161, %v1165
        %v2473 = vmax.f32 %v2472, %v1171
        %v2474 = vmax.f32 %v2473, %v1175
        %v2475 = vmax.f32 %v2474, %v1181
        %v2476 = vmax.f32 %v2475, %v1185
        %v2477 = vmax.f32 %v2476, %v1191
        %v2478 = vmax.f32 %v2477, %v1195
        %v2479 = vmax.f32 %v2478, %v1201
        %v2480 = vmax.f32 %v2479, %v1205
        %v2481 = vmax.f32 %v2480, %v1211
        %v2482 = vmax.f32 %v2481, %v1215
        %v2483 = vmax.f32 %v2482, %v1221
        %v2484 = vmax.f32 %v2483, %v1225
        %v2485 = vmax.f32 %v2484, %v1231
        %v2486 = vmax.f32 %v2485, %v1235
        %v2487 = vmax.f32 %v2486, %v1241
        %v2488 = vmax.f32 %v2487, %v1245
        %v2489 = vmax.f32 %v2488, %v1251
        %v2490 = vmax.f32 %v2489, %v1255
        %v2491 = vmax.f32 %v2490, %v1261
        %v2492 = vmax.f32 %v2491, %v1265
        %v2493 = vmax.f32 %v2492, %v1271
        %v2494 = vmax.f32 %v2493, %v1275
        %v2495 = vmax.f32 %v2494, %v1281
        %v2496 = vmax.f32 %v2495, %v1285
        %v2497 = vmax.f32 %v2496, %v1291
        %v2498 = vmax.f32 %v2497, %v1295
        %v2499 = vmax.f32 %v2498, %v1301
        %v2500 = vmax.f32 %v2499, %v1305
        %v2501 = vmax.f32 %v2500, %v1311
        %v2502 = vmax.f32 %v2501, %v1315
        %v2503 = vmax.f32 %v2502, %v1321
        %v2504 = vmax.f32 %v2503, %v1325
        %v2505 = vmax.f32 %v2504, %v1331
        %v2506 = vmax.f32 %v2505, %v1335
        %v2507 = vmax.f32 %v2506, %v1341
        %v2508 = vmax.f32 %v2507, %v1345
        %v2509 = vmax.f32 %v2508, %v1351
        %v2510 = vmax.f32 %v2509, %v1355
        %v2511 = vmax.f32 %v2510, %v1361
        %v2512 = vmax.f32 %v2511, %v1365
        %v2513 = vmax.f32 %v2512, %v1371
        %v2514 = vmax.f32 %v2513, %v1375
        %v2515 = vmax.f32 %v2514, %v1381
        %v2516 = vmax.f32 %v2515, %v1385
        %v2517 = vmax.f32 %v2516, %v1391
        %v2518 = vmax.f32 %v2517, %v1395
        %v2519 = vmax.f32 %v2518, %v1401
        %v2520 = vmax.f32 %v2519, %v1405
        %v2521 = vmax.f32 %v2520, %v1411
        %v2522 = vmax.f32 %v2521, %v1415
        %v2523 = vmax.f32 %v2522, %v1421
        %v2524 = vmax.f32 %v2523, %v1425
        %v2525 = vmax.f32 %v2524, %v1431
        %v2526 = vmax.f32 %v2525, %v1435
        %v2527 = vmax.f32 %v2526, %v1441
        %v2528 = vmax.f32 %v2527, %v1445
        %v2529 = vmax.f32 %v2528, %v1451
        %v2530 = vmax.f32 %v2529, %v1455
        %v2531 = vmax.f32 %v2530, %v1461
        %v2532 = vmax.f32 %v2531, %v1465
        %v2533 = vmax.f32 %v2532, %v1471
        %v2534 = vmax.f32 %v2533, %v1475
        %v2535 = vmax.f32 %v2534, %v1481
        %v2536 = vmax.f32 %v2535, %v1485
        %v2537 = vmax.f32 %v2536, %v1491
        %v2538 = vmax.f32 %v2537, %v1495
        %v2539 = vmax.f32 %v2538, %v1501
        %v2540 = vmax.f32 %v2539, %v1505
        %v2541 = vmax.f32 %v2540, %v1511
        %v2542 = vmax.f32 %v2541, %v1515
        %v2543 = vmax.f32 %v2542, %v1521
        %v2544 = vmax.f32 %v2543, %v1525
        %v2545 = vmax.f32 %v2544, %v1531
        %v2546 = vmax.f32 %v2545, %v1535
        %v2547 = vmax.f32 %v2546, %v1541
        %v2548 = vmax.f32 %v2547, %v1545
        %v2549 = vmax.f32 %v2548, %v1551
        %v2550 = vmax.f32 %v2549, %v1555
        %v2551 = vmax.f32 %v2550, %v1561
        %v2552 = vmax.f32 %v2551, %v1565
        %v2553 = vmax.f32 %v2552, %v1571
        %v2554 = vmax.f32 %v2553, %v1575
        %v2555 = vmax.f32 %v2554, %v1581
        %v2556 = vmax.f32 %v2555, %v1585
        %v2557 = vmax.f32 %v2556, %v1591
        %v2558 = vmax.f32 %v2557, %v1595
        %v2559 = vmax.f32 %v2558, %v1601
        %v2560 = vmax.f32 %v2559, %v1605
        %v2561 = vmax.f32 %v2560, %v1611
        %v2562 = vmax.f32 %v2561, %v1615
        %v2563 = vmax.f32 %v2562, %v1621
        %v2564 = vmax.f32 %v2563, %v1625
        %v2565 = vmax.f32 %v2564, %v1631
        %v2566 = vmax.f32 %v2565, %v1635
        %v2567 = vmax.f32 %v2566, %v1641
        %v2568 = vmax.f32 %v2567, %v1645
        %v2569 = vmax.f32 %v2568, %v1651
        %v2570 = vmax.f32 %v2569, %v1655
        %v2571 = vmax.f32 %v2570, %v1661
        %v2572 = vmax.f32 %v2571, %v1665
        %v2573 = vmax.f32 %v2572, %v1671
        %v2574 = vmax.f32 %v2573, %v1675
        %v2575 = vmax.f32 %v2574, %v1681
        %v2576 = vmax.f32 %v2575, %v1685
        %v2577 = vmax.f32 %v2576, %v1691
        %v2578 = vmax.f32 %v2577, %v1695
        %v2579 = vmax.f32 %v2578, %v1701
        %v2580 = vmax.f32 %v2579, %v1705
        %v2581 = vmax.f32 %v2580, %v1711
        %v2582 = vmax.f32 %v2581, %v1715
        %v2583 = vmax.f32 %v2582, %v1721
        %v2584 = vmax.f32 %v2583, %v1725
        %v2585 = vmax.f32 %v2584, %v1731
        %v2586 = vmax.f32 %v2585, %v1735
        %v2587 = vmax.f32 %v2586, %v1741
        %v2588 = vmax.f32 %v2587, %v1745
        %v2589 = vmax.f32 %v2588, %v1751
        %v2590 = vmax.f32 %v2589, %v1755
        %v2591 = vmax.f32 %v2590, %v1761
        %v2592 = vmax.f32 %v2591, %v1765
        %v2593 = vmax.f32 %v2592, %v1771
        %v2594 = vmax.f32 %v2593, %v1775
        %v2595 = vmax.f32 %v2594, %v1781
        %v2596 = vmax.f32 %v2595, %v1785
        %v2597 = vmax.f32 %v2596, %v1791
        %v2598 = vmax.f32 %v2597, %v1795
        %v2599 = vrot.slane %v2598, 4
        %v2600 = vmax.f32 %v2598, %v2599
        %v2601 = vrot.slane %v2600, 2
        %v2602 = vmax.f32 %v2600, %v2601
        %v2603 = vrot.slane %v2602, 1
        %v2604 = vmax.f32 %v2602, %v2603
        %v2605 = vmax.f32 %v1163, %v1167
        %v2606 = vmax.f32 %v2605, %v1173
        %v2607 = vmax.f32 %v2606, %v1177
        %v2608 = vmax.f32 %v2607, %v1183
        %v2609 = vmax.f32 %v2608, %v1187
        %v2610 = vmax.f32 %v2609, %v1193
        %v2611 = vmax.f32 %v2610, %v1197
        %v2612 = vmax.f32 %v2611, %v1203
        %v2613 = vmax.f32 %v2612, %v1207
        %v2614 = vmax.f32 %v2613, %v1213
        %v2615 = vmax.f32 %v2614, %v1217
        %v2616 = vmax.f32 %v2615, %v1223
        %v2617 = vmax.f32 %v2616, %v1227
        %v2618 = vmax.f32 %v2617, %v1233
        %v2619 = vmax.f32 %v2618, %v1237
        %v2620 = vmax.f32 %v2619, %v1243
        %v2621 = vmax.f32 %v2620, %v1247
        %v2622 = vmax.f32 %v2621, %v1253
        %v2623 = vmax.f32 %v2622, %v1257
        %v2624 = vmax.f32 %v2623, %v1263
        %v2625 = vmax.f32 %v2624, %v1267
        %v2626 = vmax.f32 %v2625, %v1273
        %v2627 = vmax.f32 %v2626, %v1277
        %v2628 = vmax.f32 %v2627, %v1283
        %v2629 = vmax.f32 %v2628, %v1287
        %v2630 = vmax.f32 %v2629, %v1293
        %v2631 = vmax.f32 %v2630, %v1297
        %v2632 = vmax.f32 %v2631, %v1303
        %v2633 = vmax.f32 %v2632, %v1307
        %v2634 = vmax.f32 %v2633, %v1313
        %v2635 = vmax.f32 %v2634, %v1317
        %v2636 = vmax.f32 %v2635, %v1323
        %v2637 = vmax.f32 %v2636, %v1327
        %v2638 = vmax.f32 %v2637, %v1333
        %v2639 = vmax.f32 %v2638, %v1337
        %v2640 = vmax.f32 %v2639, %v1343
        %v2641 = vmax.f32 %v2640, %v1347
        %v2642 = vmax.f32 %v2641, %v1353
        %v2643 = vmax.f32 %v2642, %v1357
        %v2644 = vmax.f32 %v2643, %v1363
        %v2645 = vmax.f32 %v2644, %v1367
        %v2646 = vmax.f32 %v2645, %v1373
        %v2647 = vmax.f32 %v2646, %v1377
        %v2648 = vmax.f32 %v2647, %v1383
        %v2649 = vmax.f32 %v2648, %v1387
        %v2650 = vmax.f32 %v2649, %v1393
        %v2651 = vmax.f32 %v2650, %v1397
        %v2652 = vmax.f32 %v2651, %v1403
        %v2653 = vmax.f32 %v2652, %v1407
        %v2654 = vmax.f32 %v2653, %v1413
        %v2655 = vmax.f32 %v2654, %v1417
        %v2656 = vmax.f32 %v2655, %v1423
        %v2657 = vmax.f32 %v2656, %v1427
        %v2658 = vmax.f32 %v2657, %v1433
        %v2659 = vmax.f32 %v2658, %v1437
        %v2660 = vmax.f32 %v2659, %v1443
        %v2661 = vmax.f32 %v2660, %v1447
        %v2662 = vmax.f32 %v2661, %v1453
        %v2663 = vmax.f32 %v2662, %v1457
        %v2664 = vmax.f32 %v2663, %v1463
        %v2665 = vmax.f32 %v2664, %v1467
        %v2666 = vmax.f32 %v2665, %v1473
        %v2667 = vmax.f32 %v2666, %v1477
        %v2668 = vmax.f32 %v2667, %v1483
        %v2669 = vmax.f32 %v2668, %v1487
        %v2670 = vmax.f32 %v2669, %v1493
        %v2671 = vmax.f32 %v2670, %v1497
        %v2672 = vmax.f32 %v2671, %v1503
        %v2673 = vmax.f32 %v2672, %v1507
        %v2674 = vmax.f32 %v2673, %v1513
        %v2675 = vmax.f32 %v2674, %v1517
        %v2676 = vmax.f32 %v2675, %v1523
        %v2677 = vmax.f32 %v2676, %v1527
        %v2678 = vmax.f32 %v2677, %v1533
        %v2679 = vmax.f32 %v2678, %v1537
        %v2680 = vmax.f32 %v2679, %v1543
        %v2681 = vmax.f32 %v2680, %v1547
        %v2682 = vmax.f32 %v2681, %v1553
        %v2683 = vmax.f32 %v2682, %v1557
        %v2684 = vmax.f32 %v2683, %v1563
        %v2685 = vmax.f32 %v2684, %v1567
        %v2686 = vmax.f32 %v2685, %v1573
        %v2687 = vmax.f32 %v2686, %v1577
        %v2688 = vmax.f32 %v2687, %v1583
        %v2689 = vmax.f32 %v2688, %v1587
        %v2690 = vmax.f32 %v2689, %v1593
        %v2691 = vmax.f32 %v2690, %v1597
        %v2692 = vmax.f32 %v2691, %v1603
        %v2693 = vmax.f32 %v2692, %v1607
        %v2694 = vmax.f32 %v2693, %v1613
        %v2695 = vmax.f32 %v2694, %v1617
        %v2696 = vmax.f32 %v2695, %v1623
        %v2697 = vmax.f32 %v2696, %v1627
        %v2698 = vmax.f32 %v2697, %v1633
        %v2699 = vmax.f32 %v2698, %v1637
        %v2700 = vmax.f32 %v2699, %v1643
        %v2701 = vmax.f32 %v2700, %v1647
        %v2702 = vmax.f32 %v2701, %v1653
        %v2703 = vmax.f32 %v2702, %v1657
        %v2704 = vmax.f32 %v2703, %v1663
        %v2705 = vmax.f32 %v2704, %v1667
        %v2706 = vmax.f32 %v2705, %v1673
        %v2707 = vmax.f32 %v2706, %v1677
        %v2708 = vmax.f32 %v2707, %v1683
        %v2709 = vmax.f32 %v2708, %v1687
        %v2710 = vmax.f32 %v2709, %v1693
        %v2711 = vmax.f32 %v2710, %v1697
        %v2712 = vmax.f32 %v2711, %v1703
        %v2713 = vmax.f32 %v2712, %v1707
        %v2714 = vmax.f32 %v2713, %v1713
        %v2715 = vmax.f32 %v2714, %v1717
        %v2716 = vmax.f32 %v2715, %v1723
        %v2717 = vmax.f32 %v2716, %v1727
        %v2718 = vmax.f32 %v2717, %v1733
        %v2719 = vmax.f32 %v2718, %v1737
        %v2720 = vmax.f32 %v2719, %v1743
        %v2721 = vmax.f32 %v2720, %v1747
        %v2722 = vmax.f32 %v2721, %v1753
        %v2723 = vmax.f32 %v2722, %v1757
        %v2724 = vmax.f32 %v2723, %v1763
        %v2725 = vmax.f32 %v2724, %v1767
        %v2726 = vmax.f32 %v2725, %v1773
        %v2727 = vmax.f32 %v2726, %v1777
        %v2728 = vmax.f32 %v2727, %v1783
        %v2729 = vmax.f32 %v2728, %v1787
        %v2730 = vmax.f32 %v2729, %v1793
        %v2731 = vmax.f32 %v2730, %v1797
        %v2732 = vrot.slane %v2731, 4
        %v2733 = vmax.f32 %v2731, %v2732
        %v2734 = vrot.slane %v2733, 2
        %v2735 = vmax.f32 %v2733, %v2734
        %v2736 = vrot.slane %v2735, 1
        %v2737 = vmax.f32 %v2735, %v2736
        %v2738 = vmax.f32 %v1834, %v1838
        %v2739 = vmax.f32 %v2738, %v1844
        %v2740 = vmax.f32 %v2739, %v1848
        %v2741 = vmax.f32 %v2740, %v1854
        %v2742 = vmax.f32 %v2741, %v1858
        %v2743 = vmax.f32 %v2742, %v1864
        %v2744 = vmax.f32 %v2743, %v1868
        %v2745 = vmax.f32 %v2744, %v1874
        %v2746 = vmax.f32 %v2745, %v1878
        %v2747 = vmax.f32 %v2746, %v1884
        %v2748 = vmax.f32 %v2747, %v1888
        %v2749 = vmax.f32 %v2748, %v1894
        %v2750 = vmax.f32 %v2749, %v1898
        %v2751 = vmax.f32 %v2750, %v1904
        %v2752 = vmax.f32 %v2751, %v1908
        %v2753 = vmax.f32 %v2752, %v1914
        %v2754 = vmax.f32 %v2753, %v1918
        %v2755 = vmax.f32 %v2754, %v1924
        %v2756 = vmax.f32 %v2755, %v1928
        %v2757 = vmax.f32 %v2756, %v1934
        %v2758 = vmax.f32 %v2757, %v1938
        %v2759 = vmax.f32 %v2758, %v1944
        %v2760 = vmax.f32 %v2759, %v1948
        %v2761 = vmax.f32 %v2760, %v1954
        %v2762 = vmax.f32 %v2761, %v1958
        %v2763 = vmax.f32 %v2762, %v1964
        %v2764 = vmax.f32 %v2763, %v1968
        %v2765 = vmax.f32 %v2764, %v1974
        %v2766 = vmax.f32 %v2765, %v1978
        %v2767 = vmax.f32 %v2766, %v1984
        %v2768 = vmax.f32 %v2767, %v1988
        %v2769 = vmax.f32 %v2768, %v1994
        %v2770 = vmax.f32 %v2769, %v1998
        %v2771 = vmax.f32 %v2770, %v2004
        %v2772 = vmax.f32 %v2771, %v2008
        %v2773 = vmax.f32 %v2772, %v2014
        %v2774 = vmax.f32 %v2773, %v2018
        %v2775 = vmax.f32 %v2774, %v2024
        %v2776 = vmax.f32 %v2775, %v2028
        %v2777 = vmax.f32 %v2776, %v2034
        %v2778 = vmax.f32 %v2777, %v2038
        %v2779 = vmax.f32 %v2778, %v2044
        %v2780 = vmax.f32 %v2779, %v2048
        %v2781 = vmax.f32 %v2780, %v2054
        %v2782 = vmax.f32 %v2781, %v2058
        %v2783 = vmax.f32 %v2782, %v2064
        %v2784 = vmax.f32 %v2783, %v2068
        %v2785 = vmax.f32 %v2784, %v2074
        %v2786 = vmax.f32 %v2785, %v2078
        %v2787 = vmax.f32 %v2786, %v2084
        %v2788 = vmax.f32 %v2787, %v2088
        %v2789 = vmax.f32 %v2788, %v2094
        %v2790 = vmax.f32 %v2789, %v2098
        %v2791 = vmax.f32 %v2790, %v2104
        %v2792 = vmax.f32 %v2791, %v2108
        %v2793 = vmax.f32 %v2792, %v2114
        %v2794 = vmax.f32 %v2793, %v2118
        %v2795 = vmax.f32 %v2794, %v2124
        %v2796 = vmax.f32 %v2795, %v2128
        %v2797 = vmax.f32 %v2796, %v2134
        %v2798 = vmax.f32 %v2797, %v2138
        %v2799 = vmax.f32 %v2798, %v2144
        %v2800 = vmax.f32 %v2799, %v2148
        %v2801 = vmax.f32 %v2800, %v2154
        %v2802 = vmax.f32 %v2801, %v2158
        %v2803 = vmax.f32 %v2802, %v2164
        %v2804 = vmax.f32 %v2803, %v2168
        %v2805 = vmax.f32 %v2804, %v2174
        %v2806 = vmax.f32 %v2805, %v2178
        %v2807 = vmax.f32 %v2806, %v2184
        %v2808 = vmax.f32 %v2807, %v2188
        %v2809 = vmax.f32 %v2808, %v2194
        %v2810 = vmax.f32 %v2809, %v2198
        %v2811 = vmax.f32 %v2810, %v2204
        %v2812 = vmax.f32 %v2811, %v2208
        %v2813 = vmax.f32 %v2812, %v2214
        %v2814 = vmax.f32 %v2813, %v2218
        %v2815 = vmax.f32 %v2814, %v2224
        %v2816 = vmax.f32 %v2815, %v2228
        %v2817 = vmax.f32 %v2816, %v2234
        %v2818 = vmax.f32 %v2817, %v2238
        %v2819 = vmax.f32 %v2818, %v2244
        %v2820 = vmax.f32 %v2819, %v2248
        %v2821 = vmax.f32 %v2820, %v2254
        %v2822 = vmax.f32 %v2821, %v2258
        %v2823 = vmax.f32 %v2822, %v2264
        %v2824 = vmax.f32 %v2823, %v2268
        %v2825 = vmax.f32 %v2824, %v2274
        %v2826 = vmax.f32 %v2825, %v2278
        %v2827 = vmax.f32 %v2826, %v2284
        %v2828 = vmax.f32 %v2827, %v2288
        %v2829 = vmax.f32 %v2828, %v2294
        %v2830 = vmax.f32 %v2829, %v2298
        %v2831 = vmax.f32 %v2830, %v2304
        %v2832 = vmax.f32 %v2831, %v2308
        %v2833 = vmax.f32 %v2832, %v2314
        %v2834 = vmax.f32 %v2833, %v2318
        %v2835 = vmax.f32 %v2834, %v2324
        %v2836 = vmax.f32 %v2835, %v2328
        %v2837 = vmax.f32 %v2836, %v2334
        %v2838 = vmax.f32 %v2837, %v2338
        %v2839 = vmax.f32 %v2838, %v2344
        %v2840 = vmax.f32 %v2839, %v2348
        %v2841 = vmax.f32 %v2840, %v2354
        %v2842 = vmax.f32 %v2841, %v2358
        %v2843 = vmax.f32 %v2842, %v2364
        %v2844 = vmax.f32 %v2843, %v2368
        %v2845 = vmax.f32 %v2844, %v2374
        %v2846 = vmax.f32 %v2845, %v2378
        %v2847 = vmax.f32 %v2846, %v2384
        %v2848 = vmax.f32 %v2847, %v2388
        %v2849 = vmax.f32 %v2848, %v2394
        %v2850 = vmax.f32 %v2849, %v2398
        %v2851 = vmax.f32 %v2850, %v2404
        %v2852 = vmax.f32 %v2851, %v2408
        %v2853 = vmax.f32 %v2852, %v2414
        %v2854 = vmax.f32 %v2853, %v2418
        %v2855 = vmax.f32 %v2854, %v2424
        %v2856 = vmax.f32 %v2855, %v2428
        %v2857 = vmax.f32 %v2856, %v2434
        %v2858 = vmax.f32 %v2857, %v2438
        %v2859 = vmax.f32 %v2858, %v2444
        %v2860 = vmax.f32 %v2859, %v2448
        %v2861 = vmax.f32 %v2860, %v2454
        %v2862 = vmax.f32 %v2861, %v2458
        %v2863 = vmax.f32 %v2862, %v2464
        %v2864 = vmax.f32 %v2863, %v2468
        %v2865 = vrot.slane %v2864, 4
        %v2866 = vmax.f32 %v2864, %v2865
        %v2867 = vrot.slane %v2866, 2
        %v2868 = vmax.f32 %v2866, %v2867
        %v2869 = vrot.slane %v2868, 1
        %v2870 = vmax.f32 %v2868, %v2869
        %v2871 = vmax.f32 %v1836, %v1840
        %v2872 = vmax.f32 %v2871, %v1846
        %v2873 = vmax.f32 %v2872, %v1850
        %v2874 = vmax.f32 %v2873, %v1856
        %v2875 = vmax.f32 %v2874, %v1860
        %v2876 = vmax.f32 %v2875, %v1866
        %v2877 = vmax.f32 %v2876, %v1870
        %v2878 = vmax.f32 %v2877, %v1876
        %v2879 = vmax.f32 %v2878, %v1880
        %v2880 = vmax.f32 %v2879, %v1886
        %v2881 = vmax.f32 %v2880, %v1890
        %v2882 = vmax.f32 %v2881, %v1896
        %v2883 = vmax.f32 %v2882, %v1900
        %v2884 = vmax.f32 %v2883, %v1906
        %v2885 = vmax.f32 %v2884, %v1910
        %v2886 = vmax.f32 %v2885, %v1916
        %v2887 = vmax.f32 %v2886, %v1920
        %v2888 = vmax.f32 %v2887, %v1926
        %v2889 = vmax.f32 %v2888, %v1930
        %v2890 = vmax.f32 %v2889, %v1936
        %v2891 = vmax.f32 %v2890, %v1940
        %v2892 = vmax.f32 %v2891, %v1946
        %v2893 = vmax.f32 %v2892, %v1950
        %v2894 = vmax.f32 %v2893, %v1956
        %v2895 = vmax.f32 %v2894, %v1960
        %v2896 = vmax.f32 %v2895, %v1966
        %v2897 = vmax.f32 %v2896, %v1970
        %v2898 = vmax.f32 %v2897, %v1976
        %v2899 = vmax.f32 %v2898, %v1980
        %v2900 = vmax.f32 %v2899, %v1986
        %v2901 = vmax.f32 %v2900, %v1990
        %v2902 = vmax.f32 %v2901, %v1996
        %v2903 = vmax.f32 %v2902, %v2000
        %v2904 = vmax.f32 %v2903, %v2006
        %v2905 = vmax.f32 %v2904, %v2010
        %v2906 = vmax.f32 %v2905, %v2016
        %v2907 = vmax.f32 %v2906, %v2020
        %v2908 = vmax.f32 %v2907, %v2026
        %v2909 = vmax.f32 %v2908, %v2030
        %v2910 = vmax.f32 %v2909, %v2036
        %v2911 = vmax.f32 %v2910, %v2040
        %v2912 = vmax.f32 %v2911, %v2046
        %v2913 = vmax.f32 %v2912, %v2050
        %v2914 = vmax.f32 %v2913, %v2056
        %v2915 = vmax.f32 %v2914, %v2060
        %v2916 = vmax.f32 %v2915, %v2066
        %v2917 = vmax.f32 %v2916, %v2070
        %v2918 = vmax.f32 %v2917, %v2076
        %v2919 = vmax.f32 %v2918, %v2080
        %v2920 = vmax.f32 %v2919, %v2086
        %v2921 = vmax.f32 %v2920, %v2090
        %v2922 = vmax.f32 %v2921, %v2096
        %v2923 = vmax.f32 %v2922, %v2100
        %v2924 = vmax.f32 %v2923, %v2106
        %v2925 = vmax.f32 %v2924, %v2110
        %v2926 = vmax.f32 %v2925, %v2116
        %v2927 = vmax.f32 %v2926, %v2120
        %v2928 = vmax.f32 %v2927, %v2126
        %v2929 = vmax.f32 %v2928, %v2130
        %v2930 = vmax.f32 %v2929, %v2136
        %v2931 = vmax.f32 %v2930, %v2140
        %v2932 = vmax.f32 %v2931, %v2146
        %v2933 = vmax.f32 %v2932, %v2150
        %v2934 = vmax.f32 %v2933, %v2156
        %v2935 = vmax.f32 %v2934, %v2160
        %v2936 = vmax.f32 %v2935, %v2166
        %v2937 = vmax.f32 %v2936, %v2170
        %v2938 = vmax.f32 %v2937, %v2176
        %v2939 = vmax.f32 %v2938, %v2180
        %v2940 = vmax.f32 %v2939, %v2186
        %v2941 = vmax.f32 %v2940, %v2190
        %v2942 = vmax.f32 %v2941, %v2196
        %v2943 = vmax.f32 %v2942, %v2200
        %v2944 = vmax.f32 %v2943, %v2206
        %v2945 = vmax.f32 %v2944, %v2210
        %v2946 = vmax.f32 %v2945, %v2216
        %v2947 = vmax.f32 %v2946, %v2220
        %v2948 = vmax.f32 %v2947, %v2226
        %v2949 = vmax.f32 %v2948, %v2230
        %v2950 = vmax.f32 %v2949, %v2236
        %v2951 = vmax.f32 %v2950, %v2240
        %v2952 = vmax.f32 %v2951, %v2246
        %v2953 = vmax.f32 %v2952, %v2250
        %v2954 = vmax.f32 %v2953, %v2256
        %v2955 = vmax.f32 %v2954, %v2260
        %v2956 = vmax.f32 %v2955, %v2266
        %v2957 = vmax.f32 %v2956, %v2270
        %v2958 = vmax.f32 %v2957, %v2276
        %v2959 = vmax.f32 %v2958, %v2280
        %v2960 = vmax.f32 %v2959, %v2286
        %v2961 = vmax.f32 %v2960, %v2290
        %v2962 = vmax.f32 %v2961, %v2296
        %v2963 = vmax.f32 %v2962, %v2300
        %v2964 = vmax.f32 %v2963, %v2306
        %v2965 = vmax.f32 %v2964, %v2310
        %v2966 = vmax.f32 %v2965, %v2316
        %v2967 = vmax.f32 %v2966, %v2320
        %v2968 = vmax.f32 %v2967, %v2326
        %v2969 = vmax.f32 %v2968, %v2330
        %v2970 = vmax.f32 %v2969, %v2336
        %v2971 = vmax.f32 %v2970, %v2340
        %v2972 = vmax.f32 %v2971, %v2346
        %v2973 = vmax.f32 %v2972, %v2350
        %v2974 = vmax.f32 %v2973, %v2356
        %v2975 = vmax.f32 %v2974, %v2360
        %v2976 = vmax.f32 %v2975, %v2366
        %v2977 = vmax.f32 %v2976, %v2370
        %v2978 = vmax.f32 %v2977, %v2376
        %v2979 = vmax.f32 %v2978, %v2380
        %v2980 = vmax.f32 %v2979, %v2386
        %v2981 = vmax.f32 %v2980, %v2390
        %v2982 = vmax.f32 %v2981, %v2396
        %v2983 = vmax.f32 %v2982, %v2400
        %v2984 = vmax.f32 %v2983, %v2406
        %v2985 = vmax.f32 %v2984, %v2410
        %v2986 = vmax.f32 %v2985, %v2416
        %v2987 = vmax.f32 %v2986, %v2420
        %v2988 = vmax.f32 %v2987, %v2426
        %v2989 = vmax.f32 %v2988, %v2430
        %v2990 = vmax.f32 %v2989, %v2436
        %v2991 = vmax.f32 %v2990, %v2440
        %v2992 = vmax.f32 %v2991, %v2446
        %v2993 = vmax.f32 %v2992, %v2450
        %v2994 = vmax.f32 %v2993, %v2456
        %v2995 = vmax.f32 %v2994, %v2460
        %v2996 = vmax.f32 %v2995, %v2466
        %v2997 = vmax.f32 %v2996, %v2470
        %v2998 = vrot.slane %v2997, 4
        %v2999 = vmax.f32 %v2997, %v2998
        %v3000 = vrot.slane %v2999, 2
        %v3001 = vmax.f32 %v2999, %v3000
        %v3002 = vrot.slane %v3001, 1
        %v3003 = vmax.f32 %v3001, %v3002
        %v3004 = vsub.f32 %v1161, %v2604
        %v3005 = vsub.f32 %v1163, %v2737
        %v3006 = vsub.f32 %v1834, %v2870
        %v3007 = vsub.f32 %v1836, %v3003
        %v3008 = vsub.f32 %v1165, %v2604
        %v3009 = vsub.f32 %v1167, %v2737
        %v3010 = vsub.f32 %v1838, %v2870
        %v3011 = vsub.f32 %v1840, %v3003
        %v3012 = vsub.f32 %v1171, %v2604
        %v3013 = vsub.f32 %v1173, %v2737
        %v3014 = vsub.f32 %v1844, %v2870
        %v3015 = vsub.f32 %v1846, %v3003
        %v3016 = vsub.f32 %v1175, %v2604
        %v3017 = vsub.f32 %v1177, %v2737
        %v3018 = vsub.f32 %v1848, %v2870
        %v3019 = vsub.f32 %v1850, %v3003
        %v3020 = vsub.f32 %v1181, %v2604
        %v3021 = vsub.f32 %v1183, %v2737
        %v3022 = vsub.f32 %v1854, %v2870
        %v3023 = vsub.f32 %v1856, %v3003
        %v3024 = vsub.f32 %v1185, %v2604
        %v3025 = vsub.f32 %v1187, %v2737
        %v3026 = vsub.f32 %v1858, %v2870
        %v3027 = vsub.f32 %v1860, %v3003
        %v3028 = vsub.f32 %v1191, %v2604
        %v3029 = vsub.f32 %v1193, %v2737
        %v3030 = vsub.f32 %v1864, %v2870
        %v3031 = vsub.f32 %v1866, %v3003
        %v3032 = vsub.f32 %v1195, %v2604
        %v3033 = vsub.f32 %v1197, %v2737
        %v3034 = vsub.f32 %v1868, %v2870
        %v3035 = vsub.f32 %v1870, %v3003
        %v3036 = vsub.f32 %v1201, %v2604
        %v3037 = vsub.f32 %v1203, %v2737
        %v3038 = vsub.f32 %v1874, %v2870
        %v3039 = vsub.f32 %v1876, %v3003
        %v3040 = vsub.f32 %v1205, %v2604
        %v3041 = vsub.f32 %v1207, %v2737
        %v3042 = vsub.f32 %v1878, %v2870
        %v3043 = vsub.f32 %v1880, %v3003
        %v3044 = vsub.f32 %v1211, %v2604
        %v3045 = vsub.f32 %v1213, %v2737
        %v3046 = vsub.f32 %v1884, %v2870
        %v3047 = vsub.f32 %v1886, %v3003
        %v3048 = vsub.f32 %v1215, %v2604
        %v3049 = vsub.f32 %v1217, %v2737
        %v3050 = vsub.f32 %v1888, %v2870
        %v3051 = vsub.f32 %v1890, %v3003
        %v3052 = vsub.f32 %v1221, %v2604
        %v3053 = vsub.f32 %v1223, %v2737
        %v3054 = vsub.f32 %v1894, %v2870
        %v3055 = vsub.f32 %v1896, %v3003
        %v3056 = vsub.f32 %v1225, %v2604
        %v3057 = vsub.f32 %v1227, %v2737
        %v3058 = vsub.f32 %v1898, %v2870
        %v3059 = vsub.f32 %v1900, %v3003
        %v3060 = vsub.f32 %v1231, %v2604
        %v3061 = vsub.f32 %v1233, %v2737
        %v3062 = vsub.f32 %v1904, %v2870
        %v3063 = vsub.f32 %v1906, %v3003
        %v3064 = vsub.f32 %v1235, %v2604
        %v3065 = vsub.f32 %v1237, %v2737
        %v3066 = vsub.f32 %v1908, %v2870
        %v3067 = vsub.f32 %v1910, %v3003
        %v3068 = vsub.f32 %v1241, %v2604
        %v3069 = vsub.f32 %v1243, %v2737
        %v3070 = vsub.f32 %v1914, %v2870
        %v3071 = vsub.f32 %v1916, %v3003
        %v3072 = vsub.f32 %v1245, %v2604
        %v3073 = vsub.f32 %v1247, %v2737
        %v3074 = vsub.f32 %v1918, %v2870
        %v3075 = vsub.f32 %v1920, %v3003
        %v3076 = vsub.f32 %v1251, %v2604
        %v3077 = vsub.f32 %v1253, %v2737
        %v3078 = vsub.f32 %v1924, %v2870
        %v3079 = vsub.f32 %v1926, %v3003
        %v3080 = vsub.f32 %v1255, %v2604
        %v3081 = vsub.f32 %v1257, %v2737
        %v3082 = vsub.f32 %v1928, %v2870
        %v3083 = vsub.f32 %v1930, %v3003
        %v3084 = vsub.f32 %v1261, %v2604
        %v3085 = vsub.f32 %v1263, %v2737
        %v3086 = vsub.f32 %v1934, %v2870
        %v3087 = vsub.f32 %v1936, %v3003
        %v3088 = vsub.f32 %v1265, %v2604
        %v3089 = vsub.f32 %v1267, %v2737
        %v3090 = vsub.f32 %v1938, %v2870
        %v3091 = vsub.f32 %v1940, %v3003
        %v3092 = vsub.f32 %v1271, %v2604
        %v3093 = vsub.f32 %v1273, %v2737
        %v3094 = vsub.f32 %v1944, %v2870
        %v3095 = vsub.f32 %v1946, %v3003
        %v3096 = vsub.f32 %v1275, %v2604
        %v3097 = vsub.f32 %v1277, %v2737
        %v3098 = vsub.f32 %v1948, %v2870
        %v3099 = vsub.f32 %v1950, %v3003
        %v3100 = vsub.f32 %v1281, %v2604
        %v3101 = vsub.f32 %v1283, %v2737
        %v3102 = vsub.f32 %v1954, %v2870
        %v3103 = vsub.f32 %v1956, %v3003
        %v3104 = vsub.f32 %v1285, %v2604
        %v3105 = vsub.f32 %v1287, %v2737
        %v3106 = vsub.f32 %v1958, %v2870
        %v3107 = vsub.f32 %v1960, %v3003
        %v3108 = vsub.f32 %v1291, %v2604
        %v3109 = vsub.f32 %v1293, %v2737
        %v3110 = vsub.f32 %v1964, %v2870
        %v3111 = vsub.f32 %v1966, %v3003
        %v3112 = vsub.f32 %v1295, %v2604
        %v3113 = vsub.f32 %v1297, %v2737
        %v3114 = vsub.f32 %v1968, %v2870
        %v3115 = vsub.f32 %v1970, %v3003
        %v3116 = vsub.f32 %v1301, %v2604
        %v3117 = vsub.f32 %v1303, %v2737
        %v3118 = vsub.f32 %v1974, %v2870
        %v3119 = vsub.f32 %v1976, %v3003
        %v3120 = vsub.f32 %v1305, %v2604
        %v3121 = vsub.f32 %v1307, %v2737
        %v3122 = vsub.f32 %v1978, %v2870
        %v3123 = vsub.f32 %v1980, %v3003
        %v3124 = vsub.f32 %v1311, %v2604
        %v3125 = vsub.f32 %v1313, %v2737
        %v3126 = vsub.f32 %v1984, %v2870
        %v3127 = vsub.f32 %v1986, %v3003
        %v3128 = vsub.f32 %v1315, %v2604
        %v3129 = vsub.f32 %v1317, %v2737
        %v3130 = vsub.f32 %v1988, %v2870
        %v3131 = vsub.f32 %v1990, %v3003
        %v3132 = vsub.f32 %v1321, %v2604
        %v3133 = vsub.f32 %v1323, %v2737
        %v3134 = vsub.f32 %v1994, %v2870
        %v3135 = vsub.f32 %v1996, %v3003
        %v3136 = vsub.f32 %v1325, %v2604
        %v3137 = vsub.f32 %v1327, %v2737
        %v3138 = vsub.f32 %v1998, %v2870
        %v3139 = vsub.f32 %v2000, %v3003
        %v3140 = vsub.f32 %v1331, %v2604
        %v3141 = vsub.f32 %v1333, %v2737
        %v3142 = vsub.f32 %v2004, %v2870
        %v3143 = vsub.f32 %v2006, %v3003
        %v3144 = vsub.f32 %v1335, %v2604
        %v3145 = vsub.f32 %v1337, %v2737
        %v3146 = vsub.f32 %v2008, %v2870
        %v3147 = vsub.f32 %v2010, %v3003
        %v3148 = vsub.f32 %v1341, %v2604
        %v3149 = vsub.f32 %v1343, %v2737
        %v3150 = vsub.f32 %v2014, %v2870
        %v3151 = vsub.f32 %v2016, %v3003
        %v3152 = vsub.f32 %v1345, %v2604
        %v3153 = vsub.f32 %v1347, %v2737
        %v3154 = vsub.f32 %v2018, %v2870
        %v3155 = vsub.f32 %v2020, %v3003
        %v3156 = vsub.f32 %v1351, %v2604
        %v3157 = vsub.f32 %v1353, %v2737
        %v3158 = vsub.f32 %v2024, %v2870
        %v3159 = vsub.f32 %v2026, %v3003
        %v3160 = vsub.f32 %v1355, %v2604
        %v3161 = vsub.f32 %v1357, %v2737
        %v3162 = vsub.f32 %v2028, %v2870
        %v3163 = vsub.f32 %v2030, %v3003
        %v3164 = vsub.f32 %v1361, %v2604
        %v3165 = vsub.f32 %v1363, %v2737
        %v3166 = vsub.f32 %v2034, %v2870
        %v3167 = vsub.f32 %v2036, %v3003
        %v3168 = vsub.f32 %v1365, %v2604
        %v3169 = vsub.f32 %v1367, %v2737
        %v3170 = vsub.f32 %v2038, %v2870
        %v3171 = vsub.f32 %v2040, %v3003
        %v3172 = vsub.f32 %v1371, %v2604
        %v3173 = vsub.f32 %v1373, %v2737
        %v3174 = vsub.f32 %v2044, %v2870
        %v3175 = vsub.f32 %v2046, %v3003
        %v3176 = vsub.f32 %v1375, %v2604
        %v3177 = vsub.f32 %v1377, %v2737
        %v3178 = vsub.f32 %v2048, %v2870
        %v3179 = vsub.f32 %v2050, %v3003
        %v3180 = vsub.f32 %v1381, %v2604
        %v3181 = vsub.f32 %v1383, %v2737
        %v3182 = vsub.f32 %v2054, %v2870
        %v3183 = vsub.f32 %v2056, %v3003
        %v3184 = vsub.f32 %v1385, %v2604
        %v3185 = vsub.f32 %v1387, %v2737
        %v3186 = vsub.f32 %v2058, %v2870
        %v3187 = vsub.f32 %v2060, %v3003
        %v3188 = vsub.f32 %v1391, %v2604
        %v3189 = vsub.f32 %v1393, %v2737
        %v3190 = vsub.f32 %v2064, %v2870
        %v3191 = vsub.f32 %v2066, %v3003
        %v3192 = vsub.f32 %v1395, %v2604
        %v3193 = vsub.f32 %v1397, %v2737
        %v3194 = vsub.f32 %v2068, %v2870
        %v3195 = vsub.f32 %v2070, %v3003
        %v3196 = vsub.f32 %v1401, %v2604
        %v3197 = vsub.f32 %v1403, %v2737
        %v3198 = vsub.f32 %v2074, %v2870
        %v3199 = vsub.f32 %v2076, %v3003
        %v3200 = vsub.f32 %v1405, %v2604
        %v3201 = vsub.f32 %v1407, %v2737
        %v3202 = vsub.f32 %v2078, %v2870
        %v3203 = vsub.f32 %v2080, %v3003
        %v3204 = vsub.f32 %v1411, %v2604
        %v3205 = vsub.f32 %v1413, %v2737
        %v3206 = vsub.f32 %v2084, %v2870
        %v3207 = vsub.f32 %v2086, %v3003
        %v3208 = vsub.f32 %v1415, %v2604
        %v3209 = vsub.f32 %v1417, %v2737
        %v3210 = vsub.f32 %v2088, %v2870
        %v3211 = vsub.f32 %v2090, %v3003
        %v3212 = vsub.f32 %v1421, %v2604
        %v3213 = vsub.f32 %v1423, %v2737
        %v3214 = vsub.f32 %v2094, %v2870
        %v3215 = vsub.f32 %v2096, %v3003
        %v3216 = vsub.f32 %v1425, %v2604
        %v3217 = vsub.f32 %v1427, %v2737
        %v3218 = vsub.f32 %v2098, %v2870
        %v3219 = vsub.f32 %v2100, %v3003
        %v3220 = vsub.f32 %v1431, %v2604
        %v3221 = vsub.f32 %v1433, %v2737
        %v3222 = vsub.f32 %v2104, %v2870
        %v3223 = vsub.f32 %v2106, %v3003
        %v3224 = vsub.f32 %v1435, %v2604
        %v3225 = vsub.f32 %v1437, %v2737
        %v3226 = vsub.f32 %v2108, %v2870
        %v3227 = vsub.f32 %v2110, %v3003
        %v3228 = vsub.f32 %v1441, %v2604
        %v3229 = vsub.f32 %v1443, %v2737
        %v3230 = vsub.f32 %v2114, %v2870
        %v3231 = vsub.f32 %v2116, %v3003
        %v3232 = vsub.f32 %v1445, %v2604
        %v3233 = vsub.f32 %v1447, %v2737
        %v3234 = vsub.f32 %v2118, %v2870
        %v3235 = vsub.f32 %v2120, %v3003
        %v3236 = vsub.f32 %v1451, %v2604
        %v3237 = vsub.f32 %v1453, %v2737
        %v3238 = vsub.f32 %v2124, %v2870
        %v3239 = vsub.f32 %v2126, %v3003
        %v3240 = vsub.f32 %v1455, %v2604
        %v3241 = vsub.f32 %v1457, %v2737
        %v3242 = vsub.f32 %v2128, %v2870
        %v3243 = vsub.f32 %v2130, %v3003
        %v3244 = vsub.f32 %v1461, %v2604
        %v3245 = vsub.f32 %v1463, %v2737
        %v3246 = vsub.f32 %v2134, %v2870
        %v3247 = vsub.f32 %v2136, %v3003
        %v3248 = vsub.f32 %v1465, %v2604
        %v3249 = vsub.f32 %v1467, %v2737
        %v3250 = vsub.f32 %v2138, %v2870
        %v3251 = vsub.f32 %v2140, %v3003
        %v3252 = vsub.f32 %v1471, %v2604
        %v3253 = vsub.f32 %v1473, %v2737
        %v3254 = vsub.f32 %v2144, %v2870
        %v3255 = vsub.f32 %v2146, %v3003
        %v3256 = vsub.f32 %v1475, %v2604
        %v3257 = vsub.f32 %v1477, %v2737
        %v3258 = vsub.f32 %v2148, %v2870
        %v3259 = vsub.f32 %v2150, %v3003
        %v3260 = vsub.f32 %v1481, %v2604
        %v3261 = vsub.f32 %v1483, %v2737
        %v3262 = vsub.f32 %v2154, %v2870
        %v3263 = vsub.f32 %v2156, %v3003
        %v3264 = vsub.f32 %v1485, %v2604
        %v3265 = vsub.f32 %v1487, %v2737
        %v3266 = vsub.f32 %v2158, %v2870
        %v3267 = vsub.f32 %v2160, %v3003
        %v3268 = vsub.f32 %v1491, %v2604
        %v3269 = vsub.f32 %v1493, %v2737
        %v3270 = vsub.f32 %v2164, %v2870
        %v3271 = vsub.f32 %v2166, %v3003
        %v3272 = vsub.f32 %v1495, %v2604
        %v3273 = vsub.f32 %v1497, %v2737
        %v3274 = vsub.f32 %v2168, %v2870
        %v3275 = vsub.f32 %v2170, %v3003
        %v3276 = vsub.f32 %v1501, %v2604
        %v3277 = vsub.f32 %v1503, %v2737
        %v3278 = vsub.f32 %v2174, %v2870
        %v3279 = vsub.f32 %v2176, %v3003
        %v3280 = vsub.f32 %v1505, %v2604
        %v3281 = vsub.f32 %v1507, %v2737
        %v3282 = vsub.f32 %v2178, %v2870
        %v3283 = vsub.f32 %v2180, %v3003
        %v3284 = vsub.f32 %v1511, %v2604
        %v3285 = vsub.f32 %v1513, %v2737
        %v3286 = vsub.f32 %v2184, %v2870
        %v3287 = vsub.f32 %v2186, %v3003
        %v3288 = vsub.f32 %v1515, %v2604
        %v3289 = vsub.f32 %v1517, %v2737
        %v3290 = vsub.f32 %v2188, %v2870
        %v3291 = vsub.f32 %v2190, %v3003
        %v3292 = vsub.f32 %v1521, %v2604
        %v3293 = vsub.f32 %v1523, %v2737
        %v3294 = vsub.f32 %v2194, %v2870
        %v3295 = vsub.f32 %v2196, %v3003
        %v3296 = vsub.f32 %v1525, %v2604
        %v3297 = vsub.f32 %v1527, %v2737
        %v3298 = vsub.f32 %v2198, %v2870
        %v3299 = vsub.f32 %v2200, %v3003
        %v3300 = vsub.f32 %v1531, %v2604
        %v3301 = vsub.f32 %v1533, %v2737
        %v3302 = vsub.f32 %v2204, %v2870
        %v3303 = vsub.f32 %v2206, %v3003
        %v3304 = vsub.f32 %v1535, %v2604
        %v3305 = vsub.f32 %v1537, %v2737
        %v3306 = vsub.f32 %v2208, %v2870
        %v3307 = vsub.f32 %v2210, %v3003
        %v3308 = vsub.f32 %v1541, %v2604
        %v3309 = vsub.f32 %v1543, %v2737
        %v3310 = vsub.f32 %v2214, %v2870
        %v3311 = vsub.f32 %v2216, %v3003
        %v3312 = vsub.f32 %v1545, %v2604
        %v3313 = vsub.f32 %v1547, %v2737
        %v3314 = vsub.f32 %v2218, %v2870
        %v3315 = vsub.f32 %v2220, %v3003
        %v3316 = vsub.f32 %v1551, %v2604
        %v3317 = vsub.f32 %v1553, %v2737
        %v3318 = vsub.f32 %v2224, %v2870
        %v3319 = vsub.f32 %v2226, %v3003
        %v3320 = vsub.f32 %v1555, %v2604
        %v3321 = vsub.f32 %v1557, %v2737
        %v3322 = vsub.f32 %v2228, %v2870
        %v3323 = vsub.f32 %v2230, %v3003
        %v3324 = vsub.f32 %v1561, %v2604
        %v3325 = vsub.f32 %v1563, %v2737
        %v3326 = vsub.f32 %v2234, %v2870
        %v3327 = vsub.f32 %v2236, %v3003
        %v3328 = vsub.f32 %v1565, %v2604
        %v3329 = vsub.f32 %v1567, %v2737
        %v3330 = vsub.f32 %v2238, %v2870
        %v3331 = vsub.f32 %v2240, %v3003
        %v3332 = vsub.f32 %v1571, %v2604
        %v3333 = vsub.f32 %v1573, %v2737
        %v3334 = vsub.f32 %v2244, %v2870
        %v3335 = vsub.f32 %v2246, %v3003
        %v3336 = vsub.f32 %v1575, %v2604
        %v3337 = vsub.f32 %v1577, %v2737
        %v3338 = vsub.f32 %v2248, %v2870
        %v3339 = vsub.f32 %v2250, %v3003
        %v3340 = vsub.f32 %v1581, %v2604
        %v3341 = vsub.f32 %v1583, %v2737
        %v3342 = vsub.f32 %v2254, %v2870
        %v3343 = vsub.f32 %v2256, %v3003
        %v3344 = vsub.f32 %v1585, %v2604
        %v3345 = vsub.f32 %v1587, %v2737
        %v3346 = vsub.f32 %v2258, %v2870
        %v3347 = vsub.f32 %v2260, %v3003
        %v3348 = vsub.f32 %v1591, %v2604
        %v3349 = vsub.f32 %v1593, %v2737
        %v3350 = vsub.f32 %v2264, %v2870
        %v3351 = vsub.f32 %v2266, %v3003
        %v3352 = vsub.f32 %v1595, %v2604
        %v3353 = vsub.f32 %v1597, %v2737
        %v3354 = vsub.f32 %v2268, %v2870
        %v3355 = vsub.f32 %v2270, %v3003
        %v3356 = vsub.f32 %v1601, %v2604
        %v3357 = vsub.f32 %v1603, %v2737
        %v3358 = vsub.f32 %v2274, %v2870
        %v3359 = vsub.f32 %v2276, %v3003
        %v3360 = vsub.f32 %v1605, %v2604
        %v3361 = vsub.f32 %v1607, %v2737
        %v3362 = vsub.f32 %v2278, %v2870
        %v3363 = vsub.f32 %v2280, %v3003
        %v3364 = vsub.f32 %v1611, %v2604
        %v3365 = vsub.f32 %v1613, %v2737
        %v3366 = vsub.f32 %v2284, %v2870
        %v3367 = vsub.f32 %v2286, %v3003
        %v3368 = vsub.f32 %v1615, %v2604
        %v3369 = vsub.f32 %v1617, %v2737
        %v3370 = vsub.f32 %v2288, %v2870
        %v3371 = vsub.f32 %v2290, %v3003
        %v3372 = vsub.f32 %v1621, %v2604
        %v3373 = vsub.f32 %v1623, %v2737
        %v3374 = vsub.f32 %v2294, %v2870
        %v3375 = vsub.f32 %v2296, %v3003
        %v3376 = vsub.f32 %v1625, %v2604
        %v3377 = vsub.f32 %v1627, %v2737
        %v3378 = vsub.f32 %v2298, %v2870
        %v3379 = vsub.f32 %v2300, %v3003
        %v3380 = vsub.f32 %v1631, %v2604
        %v3381 = vsub.f32 %v1633, %v2737
        %v3382 = vsub.f32 %v2304, %v2870
        %v3383 = vsub.f32 %v2306, %v3003
        %v3384 = vsub.f32 %v1635, %v2604
        %v3385 = vsub.f32 %v1637, %v2737
        %v3386 = vsub.f32 %v2308, %v2870
        %v3387 = vsub.f32 %v2310, %v3003
        %v3388 = vsub.f32 %v1641, %v2604
        %v3389 = vsub.f32 %v1643, %v2737
        %v3390 = vsub.f32 %v2314, %v2870
        %v3391 = vsub.f32 %v2316, %v3003
        %v3392 = vsub.f32 %v1645, %v2604
        %v3393 = vsub.f32 %v1647, %v2737
        %v3394 = vsub.f32 %v2318, %v2870
        %v3395 = vsub.f32 %v2320, %v3003
        %v3396 = vsub.f32 %v1651, %v2604
        %v3397 = vsub.f32 %v1653, %v2737
        %v3398 = vsub.f32 %v2324, %v2870
        %v3399 = vsub.f32 %v2326, %v3003
        %v3400 = vsub.f32 %v1655, %v2604
        %v3401 = vsub.f32 %v1657, %v2737
        %v3402 = vsub.f32 %v2328, %v2870
        %v3403 = vsub.f32 %v2330, %v3003
        %v3404 = vsub.f32 %v1661, %v2604
        %v3405 = vsub.f32 %v1663, %v2737
        %v3406 = vsub.f32 %v2334, %v2870
        %v3407 = vsub.f32 %v2336, %v3003
        %v3408 = vsub.f32 %v1665, %v2604
        %v3409 = vsub.f32 %v1667, %v2737
        %v3410 = vsub.f32 %v2338, %v2870
        %v3411 = vsub.f32 %v2340, %v3003
        %v3412 = vsub.f32 %v1671, %v2604
        %v3413 = vsub.f32 %v1673, %v2737
        %v3414 = vsub.f32 %v2344, %v2870
        %v3415 = vsub.f32 %v2346, %v3003
        %v3416 = vsub.f32 %v1675, %v2604
        %v3417 = vsub.f32 %v1677, %v2737
        %v3418 = vsub.f32 %v2348, %v2870
        %v3419 = vsub.f32 %v2350, %v3003
        %v3420 = vsub.f32 %v1681, %v2604
        %v3421 = vsub.f32 %v1683, %v2737
        %v3422 = vsub.f32 %v2354, %v2870
        %v3423 = vsub.f32 %v2356, %v3003
        %v3424 = vsub.f32 %v1685, %v2604
        %v3425 = vsub.f32 %v1687, %v2737
        %v3426 = vsub.f32 %v2358, %v2870
        %v3427 = vsub.f32 %v2360, %v3003
        %v3428 = vsub.f32 %v1691, %v2604
        %v3429 = vsub.f32 %v1693, %v2737
        %v3430 = vsub.f32 %v2364, %v2870
        %v3431 = vsub.f32 %v2366, %v3003
        %v3432 = vsub.f32 %v1695, %v2604
        %v3433 = vsub.f32 %v1697, %v2737
        %v3434 = vsub.f32 %v2368, %v2870
        %v3435 = vsub.f32 %v2370, %v3003
        %v3436 = vsub.f32 %v1701, %v2604
        %v3437 = vsub.f32 %v1703, %v2737
        %v3438 = vsub.f32 %v2374, %v2870
        %v3439 = vsub.f32 %v2376, %v3003
        %v3440 = vsub.f32 %v1705, %v2604
        %v3441 = vsub.f32 %v1707, %v2737
        %v3442 = vsub.f32 %v2378, %v2870
        %v3443 = vsub.f32 %v2380, %v3003
        %v3444 = vsub.f32 %v1711, %v2604
        %v3445 = vsub.f32 %v1713, %v2737
        %v3446 = vsub.f32 %v2384, %v2870
        %v3447 = vsub.f32 %v2386, %v3003
        %v3448 = vsub.f32 %v1715, %v2604
        %v3449 = vsub.f32 %v1717, %v2737
        %v3450 = vsub.f32 %v2388, %v2870
        %v3451 = vsub.f32 %v2390, %v3003
        %v3452 = vsub.f32 %v1721, %v2604
        %v3453 = vsub.f32 %v1723, %v2737
        %v3454 = vsub.f32 %v2394, %v2870
        %v3455 = vsub.f32 %v2396, %v3003
        %v3456 = vsub.f32 %v1725, %v2604
        %v3457 = vsub.f32 %v1727, %v2737
        %v3458 = vsub.f32 %v2398, %v2870
        %v3459 = vsub.f32 %v2400, %v3003
        %v3460 = vsub.f32 %v1731, %v2604
        %v3461 = vsub.f32 %v1733, %v2737
        %v3462 = vsub.f32 %v2404, %v2870
        %v3463 = vsub.f32 %v2406, %v3003
        %v3464 = vsub.f32 %v1735, %v2604
        %v3465 = vsub.f32 %v1737, %v2737
        %v3466 = vsub.f32 %v2408, %v2870
        %v3467 = vsub.f32 %v2410, %v3003
        %v3468 = vsub.f32 %v1741, %v2604
        %v3469 = vsub.f32 %v1743, %v2737
        %v3470 = vsub.f32 %v2414, %v2870
        %v3471 = vsub.f32 %v2416, %v3003
        %v3472 = vsub.f32 %v1745, %v2604
        %v3473 = vsub.f32 %v1747, %v2737
        %v3474 = vsub.f32 %v2418, %v2870
        %v3475 = vsub.f32 %v2420, %v3003
        %v3476 = vsub.f32 %v1751, %v2604
        %v3477 = vsub.f32 %v1753, %v2737
        %v3478 = vsub.f32 %v2424, %v2870
        %v3479 = vsub.f32 %v2426, %v3003
        %v3480 = vsub.f32 %v1755, %v2604
        %v3481 = vsub.f32 %v1757, %v2737
        %v3482 = vsub.f32 %v2428, %v2870
        %v3483 = vsub.f32 %v2430, %v3003
        %v3484 = vsub.f32 %v1761, %v2604
        %v3485 = vsub.f32 %v1763, %v2737
        %v3486 = vsub.f32 %v2434, %v2870
        %v3487 = vsub.f32 %v2436, %v3003
        %v3488 = vsub.f32 %v1765, %v2604
        %v3489 = vsub.f32 %v1767, %v2737
        %v3490 = vsub.f32 %v2438, %v2870
        %v3491 = vsub.f32 %v2440, %v3003
        %v3492 = vsub.f32 %v1771, %v2604
        %v3493 = vsub.f32 %v1773, %v2737
        %v3494 = vsub.f32 %v2444, %v2870
        %v3495 = vsub.f32 %v2446, %v3003
        %v3496 = vsub.f32 %v1775, %v2604
        %v3497 = vsub.f32 %v1777, %v2737
        %v3498 = vsub.f32 %v2448, %v2870
        %v3499 = vsub.f32 %v2450, %v3003
        %v3500 = vsub.f32 %v1781, %v2604
        %v3501 = vsub.f32 %v1783, %v2737
        %v3502 = vsub.f32 %v2454, %v2870
        %v3503 = vsub.f32 %v2456, %v3003
        %v3504 = vsub.f32 %v1785, %v2604
        %v3505 = vsub.f32 %v1787, %v2737
        %v3506 = vsub.f32 %v2458, %v2870
        %v3507 = vsub.f32 %v2460, %v3003
        %v3508 = vsub.f32 %v1791, %v2604
        %v3509 = vsub.f32 %v1793, %v2737
        %v3510 = vsub.f32 %v2464, %v2870
        %v3511 = vsub.f32 %v2466, %v3003
        %v3512 = vsub.f32 %v1795, %v2604
        %v3513 = vsub.f32 %v1797, %v2737
        %v3514 = vsub.f32 %v2468, %v2870
        %v3515 = vsub.f32 %v2470, %v3003
        %v3516 = vmul.f32 %v3004, 1.442695
        %v3517 = vpow.pop %v3516
        %v3518 = vmul.f32 %v3005, 1.442695
        %v3519 = vpow.pop %v3518
        %v3520 = vmul.f32 %v3006, 1.442695
        %v3521 = vpow.pop %v3520
        %v3522 = vmul.f32 %v3007, 1.442695
        %v3523 = vpow.pop %v3522
        %v3524 = vmul.f32 %v3008, 1.442695
        %v3525 = vpow.pop %v3524
        %v3526 = vmul.f32 %v3009, 1.442695
        %v3527 = vpow.pop %v3526
        %v3528 = vmul.f32 %v3010, 1.442695
        %v3529 = vpow.pop %v3528
        %v3530 = vmul.f32 %v3011, 1.442695
        %v3531 = vpow.pop %v3530
        %v3532 = vmul.f32 %v3012, 1.442695
        %v3533 = vpow.pop %v3532
        %v3534 = vmul.f32 %v3013, 1.442695
        %v3535 = vpow.pop %v3534
        %v3536 = vmul.f32 %v3014, 1.442695
        %v3537 = vpow.pop %v3536
        %v3538 = vmul.f32 %v3015, 1.442695
        %v3539 = vpow.pop %v3538
        %v3540 = vmul.f32 %v3016, 1.442695
        %v3541 = vpow.pop %v3540
        %v3542 = vmul.f32 %v3017, 1.442695
        %v3543 = vpow.pop %v3542
        %v3544 = vmul.f32 %v3018, 1.442695
        %v3545 = vpow.pop %v3544
        %v3546 = vmul.f32 %v3019, 1.442695
        %v3547 = vpow.pop %v3546
        %v3548 = vmul.f32 %v3020, 1.442695
        %v3549 = vpow.pop %v3548
        %v3550 = vmul.f32 %v3021, 1.442695
        %v3551 = vpow.pop %v3550
        %v3552 = vmul.f32 %v3022, 1.442695
        %v3553 = vpow.pop %v3552
        %v3554 = vmul.f32 %v3023, 1.442695
        %v3555 = vpow.pop %v3554
        %v3556 = vmul.f32 %v3024, 1.442695
        %v3557 = vpow.pop %v3556
        %v3558 = vmul.f32 %v3025, 1.442695
        %v3559 = vpow.pop %v3558
        %v3560 = vmul.f32 %v3026, 1.442695
        %v3561 = vpow.pop %v3560
        %v3562 = vmul.f32 %v3027, 1.442695
        %v3563 = vpow.pop %v3562
        %v3564 = vmul.f32 %v3028, 1.442695
        %v3565 = vpow.pop %v3564
        %v3566 = vmul.f32 %v3029, 1.442695
        %v3567 = vpow.pop %v3566
        %v3568 = vmul.f32 %v3030, 1.442695
        %v3569 = vpow.pop %v3568
        %v3570 = vmul.f32 %v3031, 1.442695
        %v3571 = vpow.pop %v3570
        %v3572 = vmul.f32 %v3032, 1.442695
        %v3573 = vpow.pop %v3572
        %v3574 = vmul.f32 %v3033, 1.442695
        %v3575 = vpow.pop %v3574
        %v3576 = vmul.f32 %v3034, 1.442695
        %v3577 = vpow.pop %v3576
        %v3578 = vmul.f32 %v3035, 1.442695
        %v3579 = vpow.pop %v3578
        %v3580 = vmul.f32 %v3036, 1.442695
        %v3581 = vpow.pop %v3580
        %v3582 = vmul.f32 %v3037, 1.442695
        %v3583 = vpow.pop %v3582
        %v3584 = vmul.f32 %v3038, 1.442695
        %v3585 = vpow.pop %v3584
        %v3586 = vmul.f32 %v3039, 1.442695
        %v3587 = vpow.pop %v3586
        %v3588 = vmul.f32 %v3040, 1.442695
        %v3589 = vpow.pop %v3588
        %v3590 = vmul.f32 %v3041, 1.442695
        %v3591 = vpow.pop %v3590
        %v3592 = vmul.f32 %v3042, 1.442695
        %v3593 = vpow.pop %v3592
        %v3594 = vmul.f32 %v3043, 1.442695
        %v3595 = vpow.pop %v3594
        %v3596 = vmul.f32 %v3044, 1.442695
        %v3597 = vpow.pop %v3596
        %v3598 = vmul.f32 %v3045, 1.442695
        %v3599 = vpow.pop %v3598
        %v3600 = vmul.f32 %v3046, 1.442695
        %v3601 = vpow.pop %v3600
        %v3602 = vmul.f32 %v3047, 1.442695
        %v3603 = vpow.pop %v3602
        %v3604 = vmul.f32 %v3048, 1.442695
        %v3605 = vpow.pop %v3604
        %v3606 = vmul.f32 %v3049, 1.442695
        %v3607 = vpow.pop %v3606
        %v3608 = vmul.f32 %v3050, 1.442695
        %v3609 = vpow.pop %v3608
        %v3610 = vmul.f32 %v3051, 1.442695
        %v3611 = vpow.pop %v3610
        %v3612 = vmul.f32 %v3052, 1.442695
        %v3613 = vpow.pop %v3612
        %v3614 = vmul.f32 %v3053, 1.442695
        %v3615 = vpow.pop %v3614
        %v3616 = vmul.f32 %v3054, 1.442695
        %v3617 = vpow.pop %v3616
        %v3618 = vmul.f32 %v3055, 1.442695
        %v3619 = vpow.pop %v3618
        %v3620 = vmul.f32 %v3056, 1.442695
        %v3621 = vpow.pop %v3620
        %v3622 = vmul.f32 %v3057, 1.442695
        %v3623 = vpow.pop %v3622
        %v3624 = vmul.f32 %v3058, 1.442695
        %v3625 = vpow.pop %v3624
        %v3626 = vmul.f32 %v3059, 1.442695
        %v3627 = vpow.pop %v3626
        %v3628 = vmul.f32 %v3060, 1.442695
        %v3629 = vpow.pop %v3628
        %v3630 = vmul.f32 %v3061, 1.442695
        %v3631 = vpow.pop %v3630
        %v3632 = vmul.f32 %v3062, 1.442695
        %v3633 = vpow.pop %v3632
        %v3634 = vmul.f32 %v3063, 1.442695
        %v3635 = vpow.pop %v3634
        %v3636 = vmul.f32 %v3064, 1.442695
        %v3637 = vpow.pop %v3636
        %v3638 = vmul.f32 %v3065, 1.442695
        %v3639 = vpow.pop %v3638
        %v3640 = vmul.f32 %v3066, 1.442695
        %v3641 = vpow.pop %v3640
        %v3642 = vmul.f32 %v3067, 1.442695
        %v3643 = vpow.pop %v3642
        %v3644 = vmul.f32 %v3068, 1.442695
        %v3645 = vpow.pop %v3644
        %v3646 = vmul.f32 %v3069, 1.442695
        %v3647 = vpow.pop %v3646
        %v3648 = vmul.f32 %v3070, 1.442695
        %v3649 = vpow.pop %v3648
        %v3650 = vmul.f32 %v3071, 1.442695
        %v3651 = vpow.pop %v3650
        %v3652 = vmul.f32 %v3072, 1.442695
        %v3653 = vpow.pop %v3652
        %v3654 = vmul.f32 %v3073, 1.442695
        %v3655 = vpow.pop %v3654
        %v3656 = vmul.f32 %v3074, 1.442695
        %v3657 = vpow.pop %v3656
        %v3658 = vmul.f32 %v3075, 1.442695
        %v3659 = vpow.pop %v3658
        %v3660 = vmul.f32 %v3076, 1.442695
        %v3661 = vpow.pop %v3660
        %v3662 = vmul.f32 %v3077, 1.442695
        %v3663 = vpow.pop %v3662
        %v3664 = vmul.f32 %v3078, 1.442695
        %v3665 = vpow.pop %v3664
        %v3666 = vmul.f32 %v3079, 1.442695
        %v3667 = vpow.pop %v3666
        %v3668 = vmul.f32 %v3080, 1.442695
        %v3669 = vpow.pop %v3668
        %v3670 = vmul.f32 %v3081, 1.442695
        %v3671 = vpow.pop %v3670
        %v3672 = vmul.f32 %v3082, 1.442695
        %v3673 = vpow.pop %v3672
        %v3674 = vmul.f32 %v3083, 1.442695
        %v3675 = vpow.pop %v3674
        %v3676 = vmul.f32 %v3084, 1.442695
        %v3677 = vpow.pop %v3676
        %v3678 = vmul.f32 %v3085, 1.442695
        %v3679 = vpow.pop %v3678
        %v3680 = vmul.f32 %v3086, 1.442695
        %v3681 = vpow.pop %v3680
        %v3682 = vmul.f32 %v3087, 1.442695
        %v3683 = vpow.pop %v3682
        %v3684 = vmul.f32 %v3088, 1.442695
        %v3685 = vpow.pop %v3684
        %v3686 = vmul.f32 %v3089, 1.442695
        %v3687 = vpow.pop %v3686
        %v3688 = vmul.f32 %v3090, 1.442695
        %v3689 = vpow.pop %v3688
        %v3690 = vmul.f32 %v3091, 1.442695
        %v3691 = vpow.pop %v3690
        %v3692 = vmul.f32 %v3092, 1.442695
        %v3693 = vpow.pop %v3692
        %v3694 = vmul.f32 %v3093, 1.442695
        %v3695 = vpow.pop %v3694
        %v3696 = vmul.f32 %v3094, 1.442695
        %v3697 = vpow.pop %v3696
        %v3698 = vmul.f32 %v3095, 1.442695
        %v3699 = vpow.pop %v3698
        %v3700 = vmul.f32 %v3096, 1.442695
        %v3701 = vpow.pop %v3700
        %v3702 = vmul.f32 %v3097, 1.442695
        %v3703 = vpow.pop %v3702
        %v3704 = vmul.f32 %v3098, 1.442695
        %v3705 = vpow.pop %v3704
        %v3706 = vmul.f32 %v3099, 1.442695
        %v3707 = vpow.pop %v3706
        %v3708 = vmul.f32 %v3100, 1.442695
        %v3709 = vpow.pop %v3708
        %v3710 = vmul.f32 %v3101, 1.442695
        %v3711 = vpow.pop %v3710
        %v3712 = vmul.f32 %v3102, 1.442695
        %v3713 = vpow.pop %v3712
        %v3714 = vmul.f32 %v3103, 1.442695
        %v3715 = vpow.pop %v3714
        %v3716 = vmul.f32 %v3104, 1.442695
        %v3717 = vpow.pop %v3716
        %v3718 = vmul.f32 %v3105, 1.442695
        %v3719 = vpow.pop %v3718
        %v3720 = vmul.f32 %v3106, 1.442695
        %v3721 = vpow.pop %v3720
        %v3722 = vmul.f32 %v3107, 1.442695
        %v3723 = vpow.pop %v3722
        %v3724 = vmul.f32 %v3108, 1.442695
        %v3725 = vpow.pop %v3724
        %v3726 = vmul.f32 %v3109, 1.442695
        %v3727 = vpow.pop %v3726
        %v3728 = vmul.f32 %v3110, 1.442695
        %v3729 = vpow.pop %v3728
        %v3730 = vmul.f32 %v3111, 1.442695
        %v3731 = vpow.pop %v3730
        %v3732 = vmul.f32 %v3112, 1.442695
        %v3733 = vpow.pop %v3732
        %v3734 = vmul.f32 %v3113, 1.442695
        %v3735 = vpow.pop %v3734
        %v3736 = vmul.f32 %v3114, 1.442695
        %v3737 = vpow.pop %v3736
        %v3738 = vmul.f32 %v3115, 1.442695
        %v3739 = vpow.pop %v3738
        %v3740 = vmul.f32 %v3116, 1.442695
        %v3741 = vpow.pop %v3740
        %v3742 = vmul.f32 %v3117, 1.442695
        %v3743 = vpow.pop %v3742
        %v3744 = vmul.f32 %v3118, 1.442695
        %v3745 = vpow.pop %v3744
        %v3746 = vmul.f32 %v3119, 1.442695
        %v3747 = vpow.pop %v3746
        %v3748 = vmul.f32 %v3120, 1.442695
        %v3749 = vpow.pop %v3748
        %v3750 = vmul.f32 %v3121, 1.442695
        %v3751 = vpow.pop %v3750
        %v3752 = vmul.f32 %v3122, 1.442695
        %v3753 = vpow.pop %v3752
        %v3754 = vmul.f32 %v3123, 1.442695
        %v3755 = vpow.pop %v3754
        %v3756 = vmul.f32 %v3124, 1.442695
        %v3757 = vpow.pop %v3756
        %v3758 = vmul.f32 %v3125, 1.442695
        %v3759 = vpow.pop %v3758
        %v3760 = vmul.f32 %v3126, 1.442695
        %v3761 = vpow.pop %v3760
        %v3762 = vmul.f32 %v3127, 1.442695
        %v3763 = vpow.pop %v3762
        %v3764 = vmul.f32 %v3128, 1.442695
        %v3765 = vpow.pop %v3764
        %v3766 = vmul.f32 %v3129, 1.442695
        %v3767 = vpow.pop %v3766
        %v3768 = vmul.f32 %v3130, 1.442695
        %v3769 = vpow.pop %v3768
        %v3770 = vmul.f32 %v3131, 1.442695
        %v3771 = vpow.pop %v3770
        %v3772 = vmul.f32 %v3132, 1.442695
        %v3773 = vpow.pop %v3772
        %v3774 = vmul.f32 %v3133, 1.442695
        %v3775 = vpow.pop %v3774
        %v3776 = vmul.f32 %v3134, 1.442695
        %v3777 = vpow.pop %v3776
        %v3778 = vmul.f32 %v3135, 1.442695
        %v3779 = vpow.pop %v3778
        %v3780 = vmul.f32 %v3136, 1.442695
        %v3781 = vpow.pop %v3780
        %v3782 = vmul.f32 %v3137, 1.442695
        %v3783 = vpow.pop %v3782
        %v3784 = vmul.f32 %v3138, 1.442695
        %v3785 = vpow.pop %v3784
        %v3786 = vmul.f32 %v3139, 1.442695
        %v3787 = vpow.pop %v3786
        %v3788 = vmul.f32 %v3140, 1.442695
        %v3789 = vpow.pop %v3788
        %v3790 = vmul.f32 %v3141, 1.442695
        %v3791 = vpow.pop %v3790
        %v3792 = vmul.f32 %v3142, 1.442695
        %v3793 = vpow.pop %v3792
        %v3794 = vmul.f32 %v3143, 1.442695
        %v3795 = vpow.pop %v3794
        %v3796 = vmul.f32 %v3144, 1.442695
        %v3797 = vpow.pop %v3796
        %v3798 = vmul.f32 %v3145, 1.442695
        %v3799 = vpow.pop %v3798
        %v3800 = vmul.f32 %v3146, 1.442695
        %v3801 = vpow.pop %v3800
        %v3802 = vmul.f32 %v3147, 1.442695
        %v3803 = vpow.pop %v3802
        %v3804 = vmul.f32 %v3148, 1.442695
        %v3805 = vpow.pop %v3804
        %v3806 = vmul.f32 %v3149, 1.442695
        %v3807 = vpow.pop %v3806
        %v3808 = vmul.f32 %v3150, 1.442695
        %v3809 = vpow.pop %v3808
        %v3810 = vmul.f32 %v3151, 1.442695
        %v3811 = vpow.pop %v3810
        %v3812 = vmul.f32 %v3152, 1.442695
        %v3813 = vpow.pop %v3812
        %v3814 = vmul.f32 %v3153, 1.442695
        %v3815 = vpow.pop %v3814
        %v3816 = vmul.f32 %v3154, 1.442695
        %v3817 = vpow.pop %v3816
        %v3818 = vmul.f32 %v3155, 1.442695
        %v3819 = vpow.pop %v3818
        %v3820 = vmul.f32 %v3156, 1.442695
        %v3821 = vpow.pop %v3820
        %v3822 = vmul.f32 %v3157, 1.442695
        %v3823 = vpow.pop %v3822
        %v3824 = vmul.f32 %v3158, 1.442695
        %v3825 = vpow.pop %v3824
        %v3826 = vmul.f32 %v3159, 1.442695
        %v3827 = vpow.pop %v3826
        %v3828 = vmul.f32 %v3160, 1.442695
        %v3829 = vpow.pop %v3828
        %v3830 = vmul.f32 %v3161, 1.442695
        %v3831 = vpow.pop %v3830
        %v3832 = vmul.f32 %v3162, 1.442695
        %v3833 = vpow.pop %v3832
        %v3834 = vmul.f32 %v3163, 1.442695
        %v3835 = vpow.pop %v3834
        %v3836 = vmul.f32 %v3164, 1.442695
        %v3837 = vpow.pop %v3836
        %v3838 = vmul.f32 %v3165, 1.442695
        %v3839 = vpow.pop %v3838
        %v3840 = vmul.f32 %v3166, 1.442695
        %v3841 = vpow.pop %v3840
        %v3842 = vmul.f32 %v3167, 1.442695
        %v3843 = vpow.pop %v3842
        %v3844 = vmul.f32 %v3168, 1.442695
        %v3845 = vpow.pop %v3844
        %v3846 = vmul.f32 %v3169, 1.442695
        %v3847 = vpow.pop %v3846
        %v3848 = vmul.f32 %v3170, 1.442695
        %v3849 = vpow.pop %v3848
        %v3850 = vmul.f32 %v3171, 1.442695
        %v3851 = vpow.pop %v3850
        %v3852 = vmul.f32 %v3172, 1.442695
        %v3853 = vpow.pop %v3852
        %v3854 = vmul.f32 %v3173, 1.442695
        %v3855 = vpow.pop %v3854
        %v3856 = vmul.f32 %v3174, 1.442695
        %v3857 = vpow.pop %v3856
        %v3858 = vmul.f32 %v3175, 1.442695
        %v3859 = vpow.pop %v3858
        %v3860 = vmul.f32 %v3176, 1.442695
        %v3861 = vpow.pop %v3860
        %v3862 = vmul.f32 %v3177, 1.442695
        %v3863 = vpow.pop %v3862
        %v3864 = vmul.f32 %v3178, 1.442695
        %v3865 = vpow.pop %v3864
        %v3866 = vmul.f32 %v3179, 1.442695
        %v3867 = vpow.pop %v3866
        %v3868 = vmul.f32 %v3180, 1.442695
        %v3869 = vpow.pop %v3868
        %v3870 = vmul.f32 %v3181, 1.442695
        %v3871 = vpow.pop %v3870
        %v3872 = vmul.f32 %v3182, 1.442695
        %v3873 = vpow.pop %v3872
        %v3874 = vmul.f32 %v3183, 1.442695
        %v3875 = vpow.pop %v3874
        %v3876 = vmul.f32 %v3184, 1.442695
        %v3877 = vpow.pop %v3876
        %v3878 = vmul.f32 %v3185, 1.442695
        %v3879 = vpow.pop %v3878
        %v3880 = vmul.f32 %v3186, 1.442695
        %v3881 = vpow.pop %v3880
        %v3882 = vmul.f32 %v3187, 1.442695
        %v3883 = vpow.pop %v3882
        %v3884 = vmul.f32 %v3188, 1.442695
        %v3885 = vpow.pop %v3884
        %v3886 = vmul.f32 %v3189, 1.442695
        %v3887 = vpow.pop %v3886
        %v3888 = vmul.f32 %v3190, 1.442695
        %v3889 = vpow.pop %v3888
        %v3890 = vmul.f32 %v3191, 1.442695
        %v3891 = vpow.pop %v3890
        %v3892 = vmul.f32 %v3192, 1.442695
        %v3893 = vpow.pop %v3892
        %v3894 = vmul.f32 %v3193, 1.442695
        %v3895 = vpow.pop %v3894
        %v3896 = vmul.f32 %v3194, 1.442695
        %v3897 = vpow.pop %v3896
        %v3898 = vmul.f32 %v3195, 1.442695
        %v3899 = vpow.pop %v3898
        %v3900 = vmul.f32 %v3196, 1.442695
        %v3901 = vpow.pop %v3900
        %v3902 = vmul.f32 %v3197, 1.442695
        %v3903 = vpow.pop %v3902
        %v3904 = vmul.f32 %v3198, 1.442695
        %v3905 = vpow.pop %v3904
        %v3906 = vmul.f32 %v3199, 1.442695
        %v3907 = vpow.pop %v3906
        %v3908 = vmul.f32 %v3200, 1.442695
        %v3909 = vpow.pop %v3908
        %v3910 = vmul.f32 %v3201, 1.442695
        %v3911 = vpow.pop %v3910
        %v3912 = vmul.f32 %v3202, 1.442695
        %v3913 = vpow.pop %v3912
        %v3914 = vmul.f32 %v3203, 1.442695
        %v3915 = vpow.pop %v3914
        %v3916 = vmul.f32 %v3204, 1.442695
        %v3917 = vpow.pop %v3916
        %v3918 = vmul.f32 %v3205, 1.442695
        %v3919 = vpow.pop %v3918
        %v3920 = vmul.f32 %v3206, 1.442695
        %v3921 = vpow.pop %v3920
        %v3922 = vmul.f32 %v3207, 1.442695
        %v3923 = vpow.pop %v3922
        %v3924 = vmul.f32 %v3208, 1.442695
        %v3925 = vpow.pop %v3924
        %v3926 = vmul.f32 %v3209, 1.442695
        %v3927 = vpow.pop %v3926
        %v3928 = vmul.f32 %v3210, 1.442695
        %v3929 = vpow.pop %v3928
        %v3930 = vmul.f32 %v3211, 1.442695
        %v3931 = vpow.pop %v3930
        %v3932 = vmul.f32 %v3212, 1.442695
        %v3933 = vpow.pop %v3932
        %v3934 = vmul.f32 %v3213, 1.442695
        %v3935 = vpow.pop %v3934
        %v3936 = vmul.f32 %v3214, 1.442695
        %v3937 = vpow.pop %v3936
        %v3938 = vmul.f32 %v3215, 1.442695
        %v3939 = vpow.pop %v3938
        %v3940 = vmul.f32 %v3216, 1.442695
        %v3941 = vpow.pop %v3940
        %v3942 = vmul.f32 %v3217, 1.442695
        %v3943 = vpow.pop %v3942
        %v3944 = vmul.f32 %v3218, 1.442695
        %v3945 = vpow.pop %v3944
        %v3946 = vmul.f32 %v3219, 1.442695
        %v3947 = vpow.pop %v3946
        %v3948 = vmul.f32 %v3220, 1.442695
        %v3949 = vpow.pop %v3948
        %v3950 = vmul.f32 %v3221, 1.442695
        %v3951 = vpow.pop %v3950
        %v3952 = vmul.f32 %v3222, 1.442695
        %v3953 = vpow.pop %v3952
        %v3954 = vmul.f32 %v3223, 1.442695
        %v3955 = vpow.pop %v3954
        %v3956 = vmul.f32 %v3224, 1.442695
        %v3957 = vpow.pop %v3956
        %v3958 = vmul.f32 %v3225, 1.442695
        %v3959 = vpow.pop %v3958
        %v3960 = vmul.f32 %v3226, 1.442695
        %v3961 = vpow.pop %v3960
        %v3962 = vmul.f32 %v3227, 1.442695
        %v3963 = vpow.pop %v3962
        %v3964 = vmul.f32 %v3228, 1.442695
        %v3965 = vpow.pop %v3964
        %v3966 = vmul.f32 %v3229, 1.442695
        %v3967 = vpow.pop %v3966
        %v3968 = vmul.f32 %v3230, 1.442695
        %v3969 = vpow.pop %v3968
        %v3970 = vmul.f32 %v3231, 1.442695
        %v3971 = vpow.pop %v3970
        %v3972 = vmul.f32 %v3232, 1.442695
        %v3973 = vpow.pop %v3972
        %v3974 = vmul.f32 %v3233, 1.442695
        %v3975 = vpow.pop %v3974
        %v3976 = vmul.f32 %v3234, 1.442695
        %v3977 = vpow.pop %v3976
        %v3978 = vmul.f32 %v3235, 1.442695
        %v3979 = vpow.pop %v3978
        %v3980 = vmul.f32 %v3236, 1.442695
        %v3981 = vpow.pop %v3980
        %v3982 = vmul.f32 %v3237, 1.442695
        %v3983 = vpow.pop %v3982
        %v3984 = vmul.f32 %v3238, 1.442695
        %v3985 = vpow.pop %v3984
        %v3986 = vmul.f32 %v3239, 1.442695
        %v3987 = vpow.pop %v3986
        %v3988 = vmul.f32 %v3240, 1.442695
        %v3989 = vpow.pop %v3988
        %v3990 = vmul.f32 %v3241, 1.442695
        %v3991 = vpow.pop %v3990
        %v3992 = vmul.f32 %v3242, 1.442695
        %v3993 = vpow.pop %v3992
        %v3994 = vmul.f32 %v3243, 1.442695
        %v3995 = vpow.pop %v3994
        %v3996 = vmul.f32 %v3244, 1.442695
        %v3997 = vpow.pop %v3996
        %v3998 = vmul.f32 %v3245, 1.442695
        %v3999 = vpow.pop %v3998
        %v4000 = vmul.f32 %v3246, 1.442695
        %v4001 = vpow.pop %v4000
        %v4002 = vmul.f32 %v3247, 1.442695
        %v4003 = vpow.pop %v4002
        %v4004 = vmul.f32 %v3248, 1.442695
        %v4005 = vpow.pop %v4004
        %v4006 = vmul.f32 %v3249, 1.442695
        %v4007 = vpow.pop %v4006
        %v4008 = vmul.f32 %v3250, 1.442695
        %v4009 = vpow.pop %v4008
        %v4010 = vmul.f32 %v3251, 1.442695
        %v4011 = vpow.pop %v4010
        %v4012 = vmul.f32 %v3252, 1.442695
        %v4013 = vpow.pop %v4012
        %v4014 = vmul.f32 %v3253, 1.442695
        %v4015 = vpow.pop %v4014
        %v4016 = vmul.f32 %v3254, 1.442695
        %v4017 = vpow.pop %v4016
        %v4018 = vmul.f32 %v3255, 1.442695
        %v4019 = vpow.pop %v4018
        %v4020 = vmul.f32 %v3256, 1.442695
        %v4021 = vpow.pop %v4020
        %v4022 = vmul.f32 %v3257, 1.442695
        %v4023 = vpow.pop %v4022
        %v4024 = vmul.f32 %v3258, 1.442695
        %v4025 = vpow.pop %v4024
        %v4026 = vmul.f32 %v3259, 1.442695
        %v4027 = vpow.pop %v4026
        %v4028 = vmul.f32 %v3260, 1.442695
        %v4029 = vpow.pop %v4028
        %v4030 = vmul.f32 %v3261, 1.442695
        %v4031 = vpow.pop %v4030
        %v4032 = vmul.f32 %v3262, 1.442695
        %v4033 = vpow.pop %v4032
        %v4034 = vmul.f32 %v3263, 1.442695
        %v4035 = vpow.pop %v4034
        %v4036 = vmul.f32 %v3264, 1.442695
        %v4037 = vpow.pop %v4036
        %v4038 = vmul.f32 %v3265, 1.442695
        %v4039 = vpow.pop %v4038
        %v4040 = vmul.f32 %v3266, 1.442695
        %v4041 = vpow.pop %v4040
        %v4042 = vmul.f32 %v3267, 1.442695
        %v4043 = vpow.pop %v4042
        %v4044 = vmul.f32 %v3268, 1.442695
        %v4045 = vpow.pop %v4044
        %v4046 = vmul.f32 %v3269, 1.442695
        %v4047 = vpow.pop %v4046
        %v4048 = vmul.f32 %v3270, 1.442695
        %v4049 = vpow.pop %v4048
        %v4050 = vmul.f32 %v3271, 1.442695
        %v4051 = vpow.pop %v4050
        %v4052 = vmul.f32 %v3272, 1.442695
        %v4053 = vpow.pop %v4052
        %v4054 = vmul.f32 %v3273, 1.442695
        %v4055 = vpow.pop %v4054
        %v4056 = vmul.f32 %v3274, 1.442695
        %v4057 = vpow.pop %v4056
        %v4058 = vmul.f32 %v3275, 1.442695
        %v4059 = vpow.pop %v4058
        %v4060 = vmul.f32 %v3276, 1.442695
        %v4061 = vpow.pop %v4060
        %v4062 = vmul.f32 %v3277, 1.442695
        %v4063 = vpow.pop %v4062
        %v4064 = vmul.f32 %v3278, 1.442695
        %v4065 = vpow.pop %v4064
        %v4066 = vmul.f32 %v3279, 1.442695
        %v4067 = vpow.pop %v4066
        %v4068 = vmul.f32 %v3280, 1.442695
        %v4069 = vpow.pop %v4068
        %v4070 = vmul.f32 %v3281, 1.442695
        %v4071 = vpow.pop %v4070
        %v4072 = vmul.f32 %v3282, 1.442695
        %v4073 = vpow.pop %v4072
        %v4074 = vmul.f32 %v3283, 1.442695
        %v4075 = vpow.pop %v4074
        %v4076 = vmul.f32 %v3284, 1.442695
        %v4077 = vpow.pop %v4076
        %v4078 = vmul.f32 %v3285, 1.442695
        %v4079 = vpow.pop %v4078
        %v4080 = vmul.f32 %v3286, 1.442695
        %v4081 = vpow.pop %v4080
        %v4082 = vmul.f32 %v3287, 1.442695
        %v4083 = vpow.pop %v4082
        %v4084 = vmul.f32 %v3288, 1.442695
        %v4085 = vpow.pop %v4084
        %v4086 = vmul.f32 %v3289, 1.442695
        %v4087 = vpow.pop %v4086
        %v4088 = vmul.f32 %v3290, 1.442695
        %v4089 = vpow.pop %v4088
        %v4090 = vmul.f32 %v3291, 1.442695
        %v4091 = vpow.pop %v4090
        %v4092 = vmul.f32 %v3292, 1.442695
        %v4093 = vpow.pop %v4092
        %v4094 = vmul.f32 %v3293, 1.442695
        %v4095 = vpow.pop %v4094
        %v4096 = vmul.f32 %v3294, 1.442695
        %v4097 = vpow.pop %v4096
        %v4098 = vmul.f32 %v3295, 1.442695
        %v4099 = vpow.pop %v4098
        %v4100 = vmul.f32 %v3296, 1.442695
        %v4101 = vpow.pop %v4100
        %v4102 = vmul.f32 %v3297, 1.442695
        %v4103 = vpow.pop %v4102
        %v4104 = vmul.f32 %v3298, 1.442695
        %v4105 = vpow.pop %v4104
        %v4106 = vmul.f32 %v3299, 1.442695
        %v4107 = vpow.pop %v4106
        %v4108 = vmul.f32 %v3300, 1.442695
        %v4109 = vpow.pop %v4108
        %v4110 = vmul.f32 %v3301, 1.442695
        %v4111 = vpow.pop %v4110
        %v4112 = vmul.f32 %v3302, 1.442695
        %v4113 = vpow.pop %v4112
        %v4114 = vmul.f32 %v3303, 1.442695
        %v4115 = vpow.pop %v4114
        %v4116 = vmul.f32 %v3304, 1.442695
        %v4117 = vpow.pop %v4116
        %v4118 = vmul.f32 %v3305, 1.442695
        %v4119 = vpow.pop %v4118
        %v4120 = vmul.f32 %v3306, 1.442695
        %v4121 = vpow.pop %v4120
        %v4122 = vmul.f32 %v3307, 1.442695
        %v4123 = vpow.pop %v4122
        %v4124 = vmul.f32 %v3308, 1.442695
        %v4125 = vpow.pop %v4124
        %v4126 = vmul.f32 %v3309, 1.442695
        %v4127 = vpow.pop %v4126
        %v4128 = vmul.f32 %v3310, 1.442695
        %v4129 = vpow.pop %v4128
        %v4130 = vmul.f32 %v3311, 1.442695
        %v4131 = vpow.pop %v4130
        %v4132 = vmul.f32 %v3312, 1.442695
        %v4133 = vpow.pop %v4132
        %v4134 = vmul.f32 %v3313, 1.442695
        %v4135 = vpow.pop %v4134
        %v4136 = vmul.f32 %v3314, 1.442695
        %v4137 = vpow.pop %v4136
        %v4138 = vmul.f32 %v3315, 1.442695
        %v4139 = vpow.pop %v4138
        %v4140 = vmul.f32 %v3316, 1.442695
        %v4141 = vpow.pop %v4140
        %v4142 = vmul.f32 %v3317, 1.442695
        %v4143 = vpow.pop %v4142
        %v4144 = vmul.f32 %v3318, 1.442695
        %v4145 = vpow.pop %v4144
        %v4146 = vmul.f32 %v3319, 1.442695
        %v4147 = vpow.pop %v4146
        %v4148 = vmul.f32 %v3320, 1.442695
        %v4149 = vpow.pop %v4148
        %v4150 = vmul.f32 %v3321, 1.442695
        %v4151 = vpow.pop %v4150
        %v4152 = vmul.f32 %v3322, 1.442695
        %v4153 = vpow.pop %v4152
        %v4154 = vmul.f32 %v3323, 1.442695
        %v4155 = vpow.pop %v4154
        %v4156 = vmul.f32 %v3324, 1.442695
        %v4157 = vpow.pop %v4156
        %v4158 = vmul.f32 %v3325, 1.442695
        %v4159 = vpow.pop %v4158
        %v4160 = vmul.f32 %v3326, 1.442695
        %v4161 = vpow.pop %v4160
        %v4162 = vmul.f32 %v3327, 1.442695
        %v4163 = vpow.pop %v4162
        %v4164 = vmul.f32 %v3328, 1.442695
        %v4165 = vpow.pop %v4164
        %v4166 = vmul.f32 %v3329, 1.442695
        %v4167 = vpow.pop %v4166
        %v4168 = vmul.f32 %v3330, 1.442695
        %v4169 = vpow.pop %v4168
        %v4170 = vmul.f32 %v3331, 1.442695
        %v4171 = vpow.pop %v4170
        %v4172 = vmul.f32 %v3332, 1.442695
        %v4173 = vpow.pop %v4172
        %v4174 = vmul.f32 %v3333, 1.442695
        %v4175 = vpow.pop %v4174
        %v4176 = vmul.f32 %v3334, 1.442695
        %v4177 = vpow.pop %v4176
        %v4178 = vmul.f32 %v3335, 1.442695
        %v4179 = vpow.pop %v4178
        %v4180 = vmul.f32 %v3336, 1.442695
        %v4181 = vpow.pop %v4180
        %v4182 = vmul.f32 %v3337, 1.442695
        %v4183 = vpow.pop %v4182
        %v4184 = vmul.f32 %v3338, 1.442695
        %v4185 = vpow.pop %v4184
        %v4186 = vmul.f32 %v3339, 1.442695
        %v4187 = vpow.pop %v4186
        %v4188 = vmul.f32 %v3340, 1.442695
        %v4189 = vpow.pop %v4188
        %v4190 = vmul.f32 %v3341, 1.442695
        %v4191 = vpow.pop %v4190
        %v4192 = vmul.f32 %v3342, 1.442695
        %v4193 = vpow.pop %v4192
        %v4194 = vmul.f32 %v3343, 1.442695
        %v4195 = vpow.pop %v4194
        %v4196 = vmul.f32 %v3344, 1.442695
        %v4197 = vpow.pop %v4196
        %v4198 = vmul.f32 %v3345, 1.442695
        %v4199 = vpow.pop %v4198
        %v4200 = vmul.f32 %v3346, 1.442695
        %v4201 = vpow.pop %v4200
        %v4202 = vmul.f32 %v3347, 1.442695
        %v4203 = vpow.pop %v4202
        %v4204 = vmul.f32 %v3348, 1.442695
        %v4205 = vpow.pop %v4204
        %v4206 = vmul.f32 %v3349, 1.442695
        %v4207 = vpow.pop %v4206
        %v4208 = vmul.f32 %v3350, 1.442695
        %v4209 = vpow.pop %v4208
        %v4210 = vmul.f32 %v3351, 1.442695
        %v4211 = vpow.pop %v4210
        %v4212 = vmul.f32 %v3352, 1.442695
        %v4213 = vpow.pop %v4212
        %v4214 = vmul.f32 %v3353, 1.442695
        %v4215 = vpow.pop %v4214
        %v4216 = vmul.f32 %v3354, 1.442695
        %v4217 = vpow.pop %v4216
        %v4218 = vmul.f32 %v3355, 1.442695
        %v4219 = vpow.pop %v4218
        %v4220 = vmul.f32 %v3356, 1.442695
        %v4221 = vpow.pop %v4220
        %v4222 = vmul.f32 %v3357, 1.442695
        %v4223 = vpow.pop %v4222
        %v4224 = vmul.f32 %v3358, 1.442695
        %v4225 = vpow.pop %v4224
        %v4226 = vmul.f32 %v3359, 1.442695
        %v4227 = vpow.pop %v4226
        %v4228 = vmul.f32 %v3360, 1.442695
        %v4229 = vpow.pop %v4228
        %v4230 = vmul.f32 %v3361, 1.442695
        %v4231 = vpow.pop %v4230
        %v4232 = vmul.f32 %v3362, 1.442695
        %v4233 = vpow.pop %v4232
        %v4234 = vmul.f32 %v3363, 1.442695
        %v4235 = vpow.pop %v4234
        %v4236 = vmul.f32 %v3364, 1.442695
        %v4237 = vpow.pop %v4236
        %v4238 = vmul.f32 %v3365, 1.442695
        %v4239 = vpow.pop %v4238
        %v4240 = vmul.f32 %v3366, 1.442695
        %v4241 = vpow.pop %v4240
        %v4242 = vmul.f32 %v3367, 1.442695
        %v4243 = vpow.pop %v4242
        %v4244 = vmul.f32 %v3368, 1.442695
        %v4245 = vpow.pop %v4244
        %v4246 = vmul.f32 %v3369, 1.442695
        %v4247 = vpow.pop %v4246
        %v4248 = vmul.f32 %v3370, 1.442695
        %v4249 = vpow.pop %v4248
        %v4250 = vmul.f32 %v3371, 1.442695
        %v4251 = vpow.pop %v4250
        %v4252 = vmul.f32 %v3372, 1.442695
        %v4253 = vpow.pop %v4252
        %v4254 = vmul.f32 %v3373, 1.442695
        %v4255 = vpow.pop %v4254
        %v4256 = vmul.f32 %v3374, 1.442695
        %v4257 = vpow.pop %v4256
        %v4258 = vmul.f32 %v3375, 1.442695
        %v4259 = vpow.pop %v4258
        %v4260 = vmul.f32 %v3376, 1.442695
        %v4261 = vpow.pop %v4260
        %v4262 = vmul.f32 %v3377, 1.442695
        %v4263 = vpow.pop %v4262
        %v4264 = vmul.f32 %v3378, 1.442695
        %v4265 = vpow.pop %v4264
        %v4266 = vmul.f32 %v3379, 1.442695
        %v4267 = vpow.pop %v4266
        %v4268 = vmul.f32 %v3380, 1.442695
        %v4269 = vpow.pop %v4268
        %v4270 = vmul.f32 %v3381, 1.442695
        %v4271 = vpow.pop %v4270
        %v4272 = vmul.f32 %v3382, 1.442695
        %v4273 = vpow.pop %v4272
        %v4274 = vmul.f32 %v3383, 1.442695
        %v4275 = vpow.pop %v4274
        %v4276 = vmul.f32 %v3384, 1.442695
        %v4277 = vpow.pop %v4276
        %v4278 = vmul.f32 %v3385, 1.442695
        %v4279 = vpow.pop %v4278
        %v4280 = vmul.f32 %v3386, 1.442695
        %v4281 = vpow.pop %v4280
        %v4282 = vmul.f32 %v3387, 1.442695
        %v4283 = vpow.pop %v4282
        %v4284 = vmul.f32 %v3388, 1.442695
        %v4285 = vpow.pop %v4284
        %v4286 = vmul.f32 %v3389, 1.442695
        %v4287 = vpow.pop %v4286
        %v4288 = vmul.f32 %v3390, 1.442695
        %v4289 = vpow.pop %v4288
        %v4290 = vmul.f32 %v3391, 1.442695
        %v4291 = vpow.pop %v4290
        %v4292 = vmul.f32 %v3392, 1.442695
        %v4293 = vpow.pop %v4292
        %v4294 = vmul.f32 %v3393, 1.442695
        %v4295 = vpow.pop %v4294
        %v4296 = vmul.f32 %v3394, 1.442695
        %v4297 = vpow.pop %v4296
        %v4298 = vmul.f32 %v3395, 1.442695
        %v4299 = vpow.pop %v4298
        %v4300 = vmul.f32 %v3396, 1.442695
        %v4301 = vpow.pop %v4300
        %v4302 = vmul.f32 %v3397, 1.442695
        %v4303 = vpow.pop %v4302
        %v4304 = vmul.f32 %v3398, 1.442695
        %v4305 = vpow.pop %v4304
        %v4306 = vmul.f32 %v3399, 1.442695
        %v4307 = vpow.pop %v4306
        %v4308 = vmul.f32 %v3400, 1.442695
        %v4309 = vpow.pop %v4308
        %v4310 = vmul.f32 %v3401, 1.442695
        %v4311 = vpow.pop %v4310
        %v4312 = vmul.f32 %v3402, 1.442695
        %v4313 = vpow.pop %v4312
        %v4314 = vmul.f32 %v3403, 1.442695
        %v4315 = vpow.pop %v4314
        %v4316 = vmul.f32 %v3404, 1.442695
        %v4317 = vpow.pop %v4316
        %v4318 = vmul.f32 %v3405, 1.442695
        %v4319 = vpow.pop %v4318
        %v4320 = vmul.f32 %v3406, 1.442695
        %v4321 = vpow.pop %v4320
        %v4322 = vmul.f32 %v3407, 1.442695
        %v4323 = vpow.pop %v4322
        %v4324 = vmul.f32 %v3408, 1.442695
        %v4325 = vpow.pop %v4324
        %v4326 = vmul.f32 %v3409, 1.442695
        %v4327 = vpow.pop %v4326
        %v4328 = vmul.f32 %v3410, 1.442695
        %v4329 = vpow.pop %v4328
        %v4330 = vmul.f32 %v3411, 1.442695
        %v4331 = vpow.pop %v4330
        %v4332 = vmul.f32 %v3412, 1.442695
        %v4333 = vpow.pop %v4332
        %v4334 = vmul.f32 %v3413, 1.442695
        %v4335 = vpow.pop %v4334
        %v4336 = vmul.f32 %v3414, 1.442695
        %v4337 = vpow.pop %v4336
        %v4338 = vmul.f32 %v3415, 1.442695
        %v4339 = vpow.pop %v4338
        %v4340 = vmul.f32 %v3416, 1.442695
        %v4341 = vpow.pop %v4340
        %v4342 = vmul.f32 %v3417, 1.442695
        %v4343 = vpow.pop %v4342
        %v4344 = vmul.f32 %v3418, 1.442695
        %v4345 = vpow.pop %v4344
        %v4346 = vmul.f32 %v3419, 1.442695
        %v4347 = vpow.pop %v4346
        %v4348 = vmul.f32 %v3420, 1.442695
        %v4349 = vpow.pop %v4348
        %v4350 = vmul.f32 %v3421, 1.442695
        %v4351 = vpow.pop %v4350
        %v4352 = vmul.f32 %v3422, 1.442695
        %v4353 = vpow.pop %v4352
        %v4354 = vmul.f32 %v3423, 1.442695
        %v4355 = vpow.pop %v4354
        %v4356 = vmul.f32 %v3424, 1.442695
        %v4357 = vpow.pop %v4356
        %v4358 = vmul.f32 %v3425, 1.442695
        %v4359 = vpow.pop %v4358
        %v4360 = vmul.f32 %v3426, 1.442695
        %v4361 = vpow.pop %v4360
        %v4362 = vmul.f32 %v3427, 1.442695
        %v4363 = vpow.pop %v4362
        %v4364 = vmul.f32 %v3428, 1.442695
        %v4365 = vpow.pop %v4364
        %v4366 = vmul.f32 %v3429, 1.442695
        %v4367 = vpow.pop %v4366
        %v4368 = vmul.f32 %v3430, 1.442695
        %v4369 = vpow.pop %v4368
        %v4370 = vmul.f32 %v3431, 1.442695
        %v4371 = vpow.pop %v4370
        %v4372 = vmul.f32 %v3432, 1.442695
        %v4373 = vpow.pop %v4372
        %v4374 = vmul.f32 %v3433, 1.442695
        %v4375 = vpow.pop %v4374
        %v4376 = vmul.f32 %v3434, 1.442695
        %v4377 = vpow.pop %v4376
        %v4378 = vmul.f32 %v3435, 1.442695
        %v4379 = vpow.pop %v4378
        %v4380 = vmul.f32 %v3436, 1.442695
        %v4381 = vpow.pop %v4380
        %v4382 = vmul.f32 %v3437, 1.442695
        %v4383 = vpow.pop %v4382
        %v4384 = vmul.f32 %v3438, 1.442695
        %v4385 = vpow.pop %v4384
        %v4386 = vmul.f32 %v3439, 1.442695
        %v4387 = vpow.pop %v4386
        %v4388 = vmul.f32 %v3440, 1.442695
        %v4389 = vpow.pop %v4388
        %v4390 = vmul.f32 %v3441, 1.442695
        %v4391 = vpow.pop %v4390
        %v4392 = vmul.f32 %v3442, 1.442695
        %v4393 = vpow.pop %v4392
        %v4394 = vmul.f32 %v3443, 1.442695
        %v4395 = vpow.pop %v4394
        %v4396 = vmul.f32 %v3444, 1.442695
        %v4397 = vpow.pop %v4396
        %v4398 = vmul.f32 %v3445, 1.442695
        %v4399 = vpow.pop %v4398
        %v4400 = vmul.f32 %v3446, 1.442695
        %v4401 = vpow.pop %v4400
        %v4402 = vmul.f32 %v3447, 1.442695
        %v4403 = vpow.pop %v4402
        %v4404 = vmul.f32 %v3448, 1.442695
        %v4405 = vpow.pop %v4404
        %v4406 = vmul.f32 %v3449, 1.442695
        %v4407 = vpow.pop %v4406
        %v4408 = vmul.f32 %v3450, 1.442695
        %v4409 = vpow.pop %v4408
        %v4410 = vmul.f32 %v3451, 1.442695
        %v4411 = vpow.pop %v4410
        %v4412 = vmul.f32 %v3452, 1.442695
        %v4413 = vpow.pop %v4412
        %v4414 = vmul.f32 %v3453, 1.442695
        %v4415 = vpow.pop %v4414
        %v4416 = vmul.f32 %v3454, 1.442695
        %v4417 = vpow.pop %v4416
        %v4418 = vmul.f32 %v3455, 1.442695
        %v4419 = vpow.pop %v4418
        %v4420 = vmul.f32 %v3456, 1.442695
        %v4421 = vpow.pop %v4420
        %v4422 = vmul.f32 %v3457, 1.442695
        %v4423 = vpow.pop %v4422
        %v4424 = vmul.f32 %v3458, 1.442695
        %v4425 = vpow.pop %v4424
        %v4426 = vmul.f32 %v3459, 1.442695
        %v4427 = vpow.pop %v4426
        %v4428 = vmul.f32 %v3460, 1.442695
        %v4429 = vpow.pop %v4428
        %v4430 = vmul.f32 %v3461, 1.442695
        %v4431 = vpow.pop %v4430
        %v4432 = vmul.f32 %v3462, 1.442695
        %v4433 = vpow.pop %v4432
        %v4434 = vmul.f32 %v3463, 1.442695
        %v4435 = vpow.pop %v4434
        %v4436 = vmul.f32 %v3464, 1.442695
        %v4437 = vpow.pop %v4436
        %v4438 = vmul.f32 %v3465, 1.442695
        %v4439 = vpow.pop %v4438
        %v4440 = vmul.f32 %v3466, 1.442695
        %v4441 = vpow.pop %v4440
        %v4442 = vmul.f32 %v3467, 1.442695
        %v4443 = vpow.pop %v4442
        %v4444 = vmul.f32 %v3468, 1.442695
        %v4445 = vpow.pop %v4444
        %v4446 = vmul.f32 %v3469, 1.442695
        %v4447 = vpow.pop %v4446
        %v4448 = vmul.f32 %v3470, 1.442695
        %v4449 = vpow.pop %v4448
        %v4450 = vmul.f32 %v3471, 1.442695
        %v4451 = vpow.pop %v4450
        %v4452 = vmul.f32 %v3472, 1.442695
        %v4453 = vpow.pop %v4452
        %v4454 = vmul.f32 %v3473, 1.442695
        %v4455 = vpow.pop %v4454
        %v4456 = vmul.f32 %v3474, 1.442695
        %v4457 = vpow.pop %v4456
        %v4458 = vmul.f32 %v3475, 1.442695
        %v4459 = vpow.pop %v4458
        %v4460 = vmul.f32 %v3476, 1.442695
        %v4461 = vpow.pop %v4460
        %v4462 = vmul.f32 %v3477, 1.442695
        %v4463 = vpow.pop %v4462
        %v4464 = vmul.f32 %v3478, 1.442695
        %v4465 = vpow.pop %v4464
        %v4466 = vmul.f32 %v3479, 1.442695
        %v4467 = vpow.pop %v4466
        %v4468 = vmul.f32 %v3480, 1.442695
        %v4469 = vpow.pop %v4468
        %v4470 = vmul.f32 %v3481, 1.442695
        %v4471 = vpow.pop %v4470
        %v4472 = vmul.f32 %v3482, 1.442695
        %v4473 = vpow.pop %v4472
        %v4474 = vmul.f32 %v3483, 1.442695
        %v4475 = vpow.pop %v4474
        %v4476 = vmul.f32 %v3484, 1.442695
        %v4477 = vpow.pop %v4476
        %v4478 = vmul.f32 %v3485, 1.442695
        %v4479 = vpow.pop %v4478
        %v4480 = vmul.f32 %v3486, 1.442695
        %v4481 = vpow.pop %v4480
        %v4482 = vmul.f32 %v3487, 1.442695
        %v4483 = vpow.pop %v4482
        %v4484 = vmul.f32 %v3488, 1.442695
        %v4485 = vpow.pop %v4484
        %v4486 = vmul.f32 %v3489, 1.442695
        %v4487 = vpow.pop %v4486
        %v4488 = vmul.f32 %v3490, 1.442695
        %v4489 = vpow.pop %v4488
        %v4490 = vmul.f32 %v3491, 1.442695
        %v4491 = vpow.pop %v4490
        %v4492 = vmul.f32 %v3492, 1.442695
        %v4493 = vpow.pop %v4492
        %v4494 = vmul.f32 %v3493, 1.442695
        %v4495 = vpow.pop %v4494
        %v4496 = vmul.f32 %v3494, 1.442695
        %v4497 = vpow.pop %v4496
        %v4498 = vmul.f32 %v3495, 1.442695
        %v4499 = vpow.pop %v4498
        %v4500 = vmul.f32 %v3496, 1.442695
        %v4501 = vpow.pop %v4500
        %v4502 = vmul.f32 %v3497, 1.442695
        %v4503 = vpow.pop %v4502
        %v4504 = vmul.f32 %v3498, 1.442695
        %v4505 = vpow.pop %v4504
        %v4506 = vmul.f32 %v3499, 1.442695
        %v4507 = vpow.pop %v4506
        %v4508 = vmul.f32 %v3500, 1.442695
        %v4509 = vpow.pop %v4508
        %v4510 = vmul.f32 %v3501, 1.442695
        %v4511 = vpow.pop %v4510
        %v4512 = vmul.f32 %v3502, 1.442695
        %v4513 = vpow.pop %v4512
        %v4514 = vmul.f32 %v3503, 1.442695
        %v4515 = vpow.pop %v4514
        %v4516 = vmul.f32 %v3504, 1.442695
        %v4517 = vpow.pop %v4516
        %v4518 = vmul.f32 %v3505, 1.442695
        %v4519 = vpow.pop %v4518
        %v4520 = vmul.f32 %v3506, 1.442695
        %v4521 = vpow.pop %v4520
        %v4522 = vmul.f32 %v3507, 1.442695
        %v4523 = vpow.pop %v4522
        %v4524 = vmul.f32 %v3508, 1.442695
        %v4525 = vpow.pop %v4524
        %v4526 = vmul.f32 %v3509, 1.442695
        %v4527 = vpow.pop %v4526
        %v4528 = vmul.f32 %v3510, 1.442695
        %v4529 = vpow.pop %v4528
        %v4530 = vmul.f32 %v3511, 1.442695
        %v4531 = vpow.pop %v4530
        %v4532 = vmul.f32 %v3512, 1.442695
        %v4533 = vpow.pop %v4532
        %v4534 = vmul.f32 %v3513, 1.442695
        %v4535 = vpow.pop %v4534
        %v4536 = vmul.f32 %v3514, 1.442695
        %v4537 = vpow.pop %v4536
        %v4538 = vmul.f32 %v3515, 1.442695
        %v4539 = vpow.pop %v4538
        %v4540 = vpack.c.bf16 %v3525, %v3517
        %v4541 = vpack.c.bf16 %v3527, %v3519
        %v4542 = vpack.c.bf16 %v3529, %v3521
        %v4543 = vpack.c.bf16 %v3531, %v3523
        %v4544 = vpack.c.bf16 %v3541, %v3533
        %v4545 = vpack.c.bf16 %v3543, %v3535
        %v4546 = vpack.c.bf16 %v3545, %v3537
        %v4547 = vpack.c.bf16 %v3547, %v3539
        %v4548 = vpack.c.bf16 %v3557, %v3549
        %v4549 = vpack.c.bf16 %v3559, %v3551
        %v4550 = vpack.c.bf16 %v3561, %v3553
        %v4551 = vpack.c.bf16 %v3563, %v3555
        %v4552 = vpack.c.bf16 %v3573, %v3565
        %v4553 = vpack.c.bf16 %v3575, %v3567
        %v4554 = vpack.c.bf16 %v3577, %v3569
        %v4555 = vpack.c.bf16 %v3579, %v3571
        %v4556 = vpack.c.bf16 %v3589, %v3581
        %v4557 = vpack.c.bf16 %v3591, %v3583
        %v4558 = vpack.c.bf16 %v3593, %v3585
        %v4559 = vpack.c.bf16 %v3595, %v3587
        %v4560 = vpack.c.bf16 %v3605, %v3597
        %v4561 = vpack.c.bf16 %v3607, %v3599
        %v4562 = vpack.c.bf16 %v3609, %v3601
        %v4563 = vpack.c.bf16 %v3611, %v3603
        %v4564 = vpack.c.bf16 %v3621, %v3613
        %v4565 = vpack.c.bf16 %v3623, %v3615
        %v4566 = vpack.c.bf16 %v3625, %v3617
        %v4567 = vpack.c.bf16 %v3627, %v3619
        %v4568 = vpack.c.bf16 %v3637, %v3629
        %v4569 = vpack.c.bf16 %v3639, %v3631
        %v4570 = vpack.c.bf16 %v3641, %v3633
        %v4571 = vpack.c.bf16 %v3643, %v3635
        %v4572 = vpack.c.bf16 %v3653, %v3645
        %v4573 = vpack.c.bf16 %v3655, %v3647
        %v4574 = vpack.c.bf16 %v3657, %v3649
        %v4575 = vpack.c.bf16 %v3659, %v3651
        %v4576 = vpack.c.bf16 %v3669, %v3661
        %v4577 = vpack.c.bf16 %v3671, %v3663
        %v4578 = vpack.c.bf16 %v3673, %v3665
        %v4579 = vpack.c.bf16 %v3675, %v3667
        %v4580 = vpack.c.bf16 %v3685, %v3677
        %v4581 = vpack.c.bf16 %v3687, %v3679
        %v4582 = vpack.c.bf16 %v3689, %v3681
        %v4583 = vpack.c.bf16 %v3691, %v3683
        %v4584 = vpack.c.bf16 %v3701, %v3693
        %v4585 = vpack.c.bf16 %v3703, %v3695
        %v4586 = vpack.c.bf16 %v3705, %v3697
        %v4587 = vpack.c.bf16 %v3707, %v3699
        %v4588 = vpack.c.bf16 %v3717, %v3709
        %v4589 = vpack.c.bf16 %v3719, %v3711
        %v4590 = vpack.c.bf16 %v3721, %v3713
        %v4591 = vpack.c.bf16 %v3723, %v3715
        %v4592 = vpack.c.bf16 %v3733, %v3725
        %v4593 = vpack.c.bf16 %v3735, %v3727
        %v4594 = vpack.c.bf16 %v3737, %v3729
        %v4595 = vpack.c.bf16 %v3739, %v3731
        %v4596 = vpack.c.bf16 %v3749, %v3741
        %v4597 = vpack.c.bf16 %v3751, %v3743
        %v4598 = vpack.c.bf16 %v3753, %v3745
        %v4599 = vpack.c.bf16 %v3755, %v3747
        %v4600 = vpack.c.bf16 %v3765, %v3757
        %v4601 = vpack.c.bf16 %v3767, %v3759
        %v4602 = vpack.c.bf16 %v3769, %v3761
        %v4603 = vpack.c.bf16 %v3771, %v3763
        %v4604 = vpack.c.bf16 %v3781, %v3773
        %v4605 = vpack.c.bf16 %v3783, %v3775
        %v4606 = vpack.c.bf16 %v3785, %v3777
        %v4607 = vpack.c.bf16 %v3787, %v3779
        %v4608 = vpack.c.bf16 %v3797, %v3789
        %v4609 = vpack.c.bf16 %v3799, %v3791
        %v4610 = vpack.c.bf16 %v3801, %v3793
        %v4611 = vpack.c.bf16 %v3803, %v3795
        %v4612 = vpack.c.bf16 %v3813, %v3805
        %v4613 = vpack.c.bf16 %v3815, %v3807
        %v4614 = vpack.c.bf16 %v3817, %v3809
        %v4615 = vpack.c.bf16 %v3819, %v3811
        %v4616 = vpack.c.bf16 %v3829, %v3821
        %v4617 = vpack.c.bf16 %v3831, %v3823
        %v4618 = vpack.c.bf16 %v3833, %v3825
        %v4619 = vpack.c.bf16 %v3835, %v3827
        %v4620 = vpack.c.bf16 %v3845, %v3837
        %v4621 = vpack.c.bf16 %v3847, %v3839
        %v4622 = vpack.c.bf16 %v3849, %v3841
        %v4623 = vpack.c.bf16 %v3851, %v3843
        %v4624 = vpack.c.bf16 %v3861, %v3853
        %v4625 = vpack.c.bf16 %v3863, %v3855
        %v4626 = vpack.c.bf16 %v3865, %v3857
        %v4627 = vpack.c.bf16 %v3867, %v3859
        %v4628 = vpack.c.bf16 %v3877, %v3869
        %v4629 = vpack.c.bf16 %v3879, %v3871
        %v4630 = vpack.c.bf16 %v3881, %v3873
        %v4631 = vpack.c.bf16 %v3883, %v3875
        %v4632 = vpack.c.bf16 %v3893, %v3885
        %v4633 = vpack.c.bf16 %v3895, %v3887
        %v4634 = vpack.c.bf16 %v3897, %v3889
        %v4635 = vpack.c.bf16 %v3899, %v3891
        %v4636 = vpack.c.bf16 %v3909, %v3901
        %v4637 = vpack.c.bf16 %v3911, %v3903
        %v4638 = vpack.c.bf16 %v3913, %v3905
        %v4639 = vpack.c.bf16 %v3915, %v3907
        %v4640 = vpack.c.bf16 %v3925, %v3917
        %v4641 = vpack.c.bf16 %v3927, %v3919
        %v4642 = vpack.c.bf16 %v3929, %v3921
        %v4643 = vpack.c.bf16 %v3931, %v3923
        %v4644 = vpack.c.bf16 %v3941, %v3933
        %v4645 = vpack.c.bf16 %v3943, %v3935
        %v4646 = vpack.c.bf16 %v3945, %v3937
        %v4647 = vpack.c.bf16 %v3947, %v3939
        %v4648 = vpack.c.bf16 %v3957, %v3949
        %v4649 = vpack.c.bf16 %v3959, %v3951
        %v4650 = vpack.c.bf16 %v3961, %v3953
        %v4651 = vpack.c.bf16 %v3963, %v3955
        %v4652 = vpack.c.bf16 %v3973, %v3965
        %v4653 = vpack.c.bf16 %v3975, %v3967
        %v4654 = vpack.c.bf16 %v3977, %v3969
        %v4655 = vpack.c.bf16 %v3979, %v3971
        %v4656 = vpack.c.bf16 %v3989, %v3981
        %v4657 = vpack.c.bf16 %v3991, %v3983
        %v4658 = vpack.c.bf16 %v3993, %v3985
        %v4659 = vpack.c.bf16 %v3995, %v3987
        %v4660 = vpack.c.bf16 %v4005, %v3997
        %v4661 = vpack.c.bf16 %v4007, %v3999
        %v4662 = vpack.c.bf16 %v4009, %v4001
        %v4663 = vpack.c.bf16 %v4011, %v4003
        %v4664 = vpack.c.bf16 %v4021, %v4013
        %v4665 = vpack.c.bf16 %v4023, %v4015
        %v4666 = vpack.c.bf16 %v4025, %v4017
        %v4667 = vpack.c.bf16 %v4027, %v4019
        %v4668 = vpack.c.bf16 %v4037, %v4029
        %v4669 = vpack.c.bf16 %v4039, %v4031
        %v4670 = vpack.c.bf16 %v4041, %v4033
        %v4671 = vpack.c.bf16 %v4043, %v4035
        %v4672 = vpack.c.bf16 %v4053, %v4045
        %v4673 = vpack.c.bf16 %v4055, %v4047
        %v4674 = vpack.c.bf16 %v4057, %v4049
        %v4675 = vpack.c.bf16 %v4059, %v4051
        %v4676 = vpack.c.bf16 %v4069, %v4061
        %v4677 = vpack.c.bf16 %v4071, %v4063
        %v4678 = vpack.c.bf16 %v4073, %v4065
        %v4679 = vpack.c.bf16 %v4075, %v4067
        %v4680 = vpack.c.bf16 %v4085, %v4077
        %v4681 = vpack.c.bf16 %v4087, %v4079
        %v4682 = vpack.c.bf16 %v4089, %v4081
        %v4683 = vpack.c.bf16 %v4091, %v4083
        %v4684 = vpack.c.bf16 %v4101, %v4093
        %v4685 = vpack.c.bf16 %v4103, %v4095
        %v4686 = vpack.c.bf16 %v4105, %v4097
        %v4687 = vpack.c.bf16 %v4107, %v4099
        %v4688 = vpack.c.bf16 %v4117, %v4109
        %v4689 = vpack.c.bf16 %v4119, %v4111
        %v4690 = vpack.c.bf16 %v4121, %v4113
        %v4691 = vpack.c.bf16 %v4123, %v4115
        %v4692 = vpack.c.bf16 %v4133, %v4125
        %v4693 = vpack.c.bf16 %v4135, %v4127
        %v4694 = vpack.c.bf16 %v4137, %v4129
        %v4695 = vpack.c.bf16 %v4139, %v4131
        %v4696 = vpack.c.bf16 %v4149, %v4141
        %v4697 = vpack.c.bf16 %v4151, %v4143
        %v4698 = vpack.c.bf16 %v4153, %v4145
        %v4699 = vpack.c.bf16 %v4155, %v4147
        %v4700 = vpack.c.bf16 %v4165, %v4157
        %v4701 = vpack.c.bf16 %v4167, %v4159
        %v4702 = vpack.c.bf16 %v4169, %v4161
        %v4703 = vpack.c.bf16 %v4171, %v4163
        %v4704 = vpack.c.bf16 %v4181, %v4173
        %v4705 = vpack.c.bf16 %v4183, %v4175
        %v4706 = vpack.c.bf16 %v4185, %v4177
        %v4707 = vpack.c.bf16 %v4187, %v4179
        %v4708 = vpack.c.bf16 %v4197, %v4189
        %v4709 = vpack.c.bf16 %v4199, %v4191
        %v4710 = vpack.c.bf16 %v4201, %v4193
        %v4711 = vpack.c.bf16 %v4203, %v4195
        %v4712 = vpack.c.bf16 %v4213, %v4205
        %v4713 = vpack.c.bf16 %v4215, %v4207
        %v4714 = vpack.c.bf16 %v4217, %v4209
        %v4715 = vpack.c.bf16 %v4219, %v4211
        %v4716 = vpack.c.bf16 %v4229, %v4221
        %v4717 = vpack.c.bf16 %v4231, %v4223
        %v4718 = vpack.c.bf16 %v4233, %v4225
        %v4719 = vpack.c.bf16 %v4235, %v4227
        %v4720 = vpack.c.bf16 %v4245, %v4237
        %v4721 = vpack.c.bf16 %v4247, %v4239
        %v4722 = vpack.c.bf16 %v4249, %v4241
        %v4723 = vpack.c.bf16 %v4251, %v4243
        %v4724 = vpack.c.bf16 %v4261, %v4253
        %v4725 = vpack.c.bf16 %v4263, %v4255
        %v4726 = vpack.c.bf16 %v4265, %v4257
        %v4727 = vpack.c.bf16 %v4267, %v4259
        %v4728 = vpack.c.bf16 %v4277, %v4269
        %v4729 = vpack.c.bf16 %v4279, %v4271
        %v4730 = vpack.c.bf16 %v4281, %v4273
        %v4731 = vpack.c.bf16 %v4283, %v4275
        %v4732 = vpack.c.bf16 %v4293, %v4285
        %v4733 = vpack.c.bf16 %v4295, %v4287
        %v4734 = vpack.c.bf16 %v4297, %v4289
        %v4735 = vpack.c.bf16 %v4299, %v4291
        %v4736 = vpack.c.bf16 %v4309, %v4301
        %v4737 = vpack.c.bf16 %v4311, %v4303
        %v4738 = vpack.c.bf16 %v4313, %v4305
        %v4739 = vpack.c.bf16 %v4315, %v4307
        %v4740 = vpack.c.bf16 %v4325, %v4317
        %v4741 = vpack.c.bf16 %v4327, %v4319
        %v4742 = vpack.c.bf16 %v4329, %v4321
        %v4743 = vpack.c.bf16 %v4331, %v4323
        %v4744 = vpack.c.bf16 %v4341, %v4333
        %v4745 = vpack.c.bf16 %v4343, %v4335
        %v4746 = vpack.c.bf16 %v4345, %v4337
        %v4747 = vpack.c.bf16 %v4347, %v4339
        %v4748 = vpack.c.bf16 %v4357, %v4349
        %v4749 = vpack.c.bf16 %v4359, %v4351
        %v4750 = vpack.c.bf16 %v4361, %v4353
        %v4751 = vpack.c.bf16 %v4363, %v4355
        %v4752 = vpack.c.bf16 %v4373, %v4365
        %v4753 = vpack.c.bf16 %v4375, %v4367
        %v4754 = vpack.c.bf16 %v4377, %v4369
        %v4755 = vpack.c.bf16 %v4379, %v4371
        %v4756 = vpack.c.bf16 %v4389, %v4381
        %v4757 = vpack.c.bf16 %v4391, %v4383
        %v4758 = vpack.c.bf16 %v4393, %v4385
        %v4759 = vpack.c.bf16 %v4395, %v4387
        %v4760 = vpack.c.bf16 %v4405, %v4397
        %v4761 = vpack.c.bf16 %v4407, %v4399
        %v4762 = vpack.c.bf16 %v4409, %v4401
        %v4763 = vpack.c.bf16 %v4411, %v4403
        %v4764 = vpack.c.bf16 %v4421, %v4413
        %v4765 = vpack.c.bf16 %v4423, %v4415
        %v4766 = vpack.c.bf16 %v4425, %v4417
        %v4767 = vpack.c.bf16 %v4427, %v4419
        %v4768 = vpack.c.bf16 %v4437, %v4429
        %v4769 = vpack.c.bf16 %v4439, %v4431
        %v4770 = vpack.c.bf16 %v4441, %v4433
        %v4771 = vpack.c.bf16 %v4443, %v4435
        %v4772 = vpack.c.bf16 %v4453, %v4445
        %v4773 = vpack.c.bf16 %v4455, %v4447
        %v4774 = vpack.c.bf16 %v4457, %v4449
        %v4775 = vpack.c.bf16 %v4459, %v4451
        %v4776 = vpack.c.bf16 %v4469, %v4461
        %v4777 = vpack.c.bf16 %v4471, %v4463
        %v4778 = vpack.c.bf16 %v4473, %v4465
        %v4779 = vpack.c.bf16 %v4475, %v4467
        %v4780 = vpack.c.bf16 %v4485, %v4477
        %v4781 = vpack.c.bf16 %v4487, %v4479
        %v4782 = vpack.c.bf16 %v4489, %v4481
        %v4783 = vpack.c.bf16 %v4491, %v4483
        %v4784 = vpack.c.bf16 %v4501, %v4493
        %v4785 = vpack.c.bf16 %v4503, %v4495
        %v4786 = vpack.c.bf16 %v4505, %v4497
        %v4787 = vpack.c.bf16 %v4507, %v4499
        %v4788 = vpack.c.bf16 %v4517, %v4509
        %v4789 = vpack.c.bf16 %v4519, %v4511
        %v4790 = vpack.c.bf16 %v4521, %v4513
        %v4791 = vpack.c.bf16 %v4523, %v4515
        %v4792 = vpack.c.bf16 %v4533, %v4525
        %v4793 = vpack.c.bf16 %v4535, %v4527
        %v4794 = vpack.c.bf16 %v4537, %v4529
        %v4795 = vpack.c.bf16 %v4539, %v4531
        %v4796 = vld [vmem:[#allocation4] sm:$0xff]
        %v4797 = vld [vmem:[#allocation4 + $0x8] sm:$0xff]
        %v4798 = vld [vmem:[#allocation4 + $0x10] sm:$0xff]
        %v4799 = vld [vmem:[#allocation4 + $0x18] sm:$0xff]
        %v4800 = vld [vmem:[#allocation4 + $0x20] sm:$0xff]
        %v4801 = vld [vmem:[#allocation4 + $0x28] sm:$0xff]
        %v4802 = vld [vmem:[#allocation4 + $0x30] sm:$0xff]
        %v4803 = vld [vmem:[#allocation4 + $0x38] sm:$0xff]
        %v4804 = vld [vmem:[#allocation4 + $0x40] sm:$0xff]
        %v4805 = vld [vmem:[#allocation4 + $0x48] sm:$0xff]
        %v4806 = vld [vmem:[#allocation4 + $0x50] sm:$0xff]
        %v4807 = vld [vmem:[#allocation4 + $0x58] sm:$0xff]
        %v4808 = vld [vmem:[#allocation4 + $0x60] sm:$0xff]
        %v4809 = vld [vmem:[#allocation4 + $0x68] sm:$0xff]
        %v4810 = vld [vmem:[#allocation4 + $0x70] sm:$0xff]
        %v4811 = vld [vmem:[#allocation4 + $0x78] sm:$0xff]
        %v4812 = vld [vmem:[#allocation4 + $0x80] sm:$0xff]
        %v4813 = vld [vmem:[#allocation4 + $0x88] sm:$0xff]
        %v4814 = vld [vmem:[#allocation4 + $0x90] sm:$0xff]
        %v4815 = vld [vmem:[#allocation4 + $0x98] sm:$0xff]
        %v4836 = vunpack.c.l.b16 %v4796
        %v4837 = vunpack.c.h.b16 %v4796
        %v4838 = vunpack.c.l.b16 %v4797
        %v4839 = vunpack.c.h.b16 %v4797
        %v4840 = vunpack.c.l.b16 %v4798
        %v4841 = vunpack.c.h.b16 %v4798
        %v4842 = vunpack.c.l.b16 %v4799
        %v4843 = vunpack.c.h.b16 %v4799
        %v4844 = vunpack.c.l.b16 %v4800
        %v4845 = vunpack.c.h.b16 %v4800
        %v4846 = vunpack.c.l.b16 %v4801
        %v4847 = vunpack.c.h.b16 %v4801
        %v4848 = vunpack.c.l.b16 %v4802
        %v4849 = vunpack.c.h.b16 %v4802
        %v4850 = vunpack.c.l.b16 %v4803
        %v4851 = vunpack.c.h.b16 %v4803
        %v4852 = vunpack.c.l.b16 %v4804
        %v4853 = vunpack.c.h.b16 %v4804
        %v4854 = vunpack.c.l.b16 %v4805
        %v4855 = vunpack.c.h.b16 %v4805
        %v4856 = vunpack.c.l.b16 %v4806
        %v4857 = vunpack.c.h.b16 %v4806
        %v4858 = vunpack.c.l.b16 %v4807
        %v4859 = vunpack.c.h.b16 %v4807
        %v4860 = vunpack.c.l.b16 %v4808
        %v4861 = vunpack.c.h.b16 %v4808
        %v4862 = vunpack.c.l.b16 %v4809
        %v4863 = vunpack.c.h.b16 %v4809
        %v4864 = vunpack.c.l.b16 %v4810
        %v4865 = vunpack.c.h.b16 %v4810
        %v4866 = vunpack.c.l.b16 %v4811
        %v4867 = vunpack.c.h.b16 %v4811
        %v4868 = vunpack.c.l.b16 %v4812
        %v4869 = vunpack.c.h.b16 %v4812
        %v4870 = vunpack.c.l.b16 %v4813
        %v4871 = vunpack.c.h.b16 %v4813
        %v4872 = vunpack.c.l.b16 %v4814
        %v4873 = vunpack.c.h.b16 %v4814
        %v4874 = vunpack.c.l.b16 %v4815
        %v4875 = vunpack.c.h.b16 %v4815
        %v4876 = vpack.c.b16 %v4844, %v4836
        %v4877 = vpack.c.b16 %v4845, %v4837
        %v4878 = vpack.c.b16 %v4846, %v4838
        %v4879 = vpack.c.b16 %v4847, %v4839
        %v4880 = vpack.c.b16 %v4848, %v4840
        %v4881 = vpack.c.b16 %v4849, %v4841
        %v4882 = vpack.c.b16 %v4850, %v4842
        %v4883 = vpack.c.b16 %v4851, %v4843
        %v4884 = vpack.c.b16 %v4860, %v4852
        %v4885 = vpack.c.b16 %v4861, %v4853
        %v4886 = vpack.c.b16 %v4862, %v4854
        %v4887 = vpack.c.b16 %v4863, %v4855
        %v4888 = vpack.c.b16 %v4864, %v4856
        %v4889 = vpack.c.b16 %v4865, %v4857
        %v4890 = vpack.c.b16 %v4866, %v4858
        %v4891 = vpack.c.b16 %v4867, %v4859
        %v4892 = vpack.c.b16 %v4868, %v4868
        %v4893 = vpack.c.b16 %v4869, %v4869
        %v4894 = vpack.c.b16 %v4870, %v4870
        %v4895 = vpack.c.b16 %v4871, %v4871
        %v4896 = vpack.c.b16 %v4872, %v4872
        %v4897 = vpack.c.b16 %v4873, %v4873
        %v4898 = vpack.c.b16 %v4874, %v4874
        %v4899 = vpack.c.b16 %v4875, %v4875
        %4924 = vmatprep.subr.bf16.mxu0 %v4541
        %4925 = vmatpush1.bf16.msra.mxu0 %v4540
        %4926 = vmatprep.subr.bf16.mxu0 %v4545
        %4927 = vmatpush1.bf16.msra.mxu0 %v4544
        %4928 = vmatprep.subr.bf16.mxu0 %v4549
        %4929 = vmatpush1.bf16.msra.mxu0 %v4548
        %4930 = vmatprep.subr.bf16.mxu0 %v4553
        %4931 = vmatpush1.bf16.msra.mxu0 %v4552
        %4932 = vmatprep.subr.bf16.mxu0 %v4557
        %4933 = vmatpush1.bf16.msra.mxu0 %v4556
        %4934 = vmatprep.subr.bf16.mxu0 %v4561
        %4935 = vmatpush1.bf16.msra.mxu0 %v4560
        %4936 = vmatprep.subr.bf16.mxu0 %v4565
        %4937 = vmatpush1.bf16.msra.mxu0 %v4564
        %4938 = vmatprep.subr.bf16.mxu0 %v4569
        %4939 = vmatpush1.bf16.msra.mxu0 %v4568
        %4940 = vmatprep.subr.bf16.mxu0 %v4573
        %4941 = vmatpush1.bf16.msra.mxu0 %v4572
        %4942 = vmatprep.subr.bf16.mxu0 %v4577
        %4943 = vmatpush1.bf16.msra.mxu0 %v4576
        %4944 = vmatprep.subr.bf16.mxu0 %v4581
        %4945 = vmatpush1.bf16.msra.mxu0 %v4580
        %4946 = vmatprep.subr.bf16.mxu0 %v4585
        %4947 = vmatpush1.bf16.msra.mxu0 %v4584
        %4948 = vmatprep.subr.bf16.mxu0 %v4589
        %4949 = vmatpush1.bf16.msra.mxu0 %v4588
        %4950 = vmatprep.subr.bf16.mxu0 %v4593
        %4951 = vmatpush1.bf16.msra.mxu0 %v4592
        %4952 = vmatprep.subr.bf16.mxu0 %v4597
        %4953 = vmatpush1.bf16.msra.mxu0 %v4596
        %4954 = vmatprep.subr.bf16.mxu0 %v4601
        %4955 = vmatpush1.bf16.msra.mxu0 %v4600
        %4956 = vmatprep.mubr.bf16.mxu0 %v4877
        %4957 = vmatmul.mubr.bf16.gmra.mrb[0].mxu0 %v4876
        %v4958 = vpop.f32.mrb[0].mxu0
        %v4959 = vadd.f32 0.0, %v4958
        %v4960 = vpop.f32.mrb[0].mxu0
        %v4961 = vadd.f32 0.0, %v4960
        %v4962 = vpop.f32.mrb[0].mxu0
        %v4963 = vadd.f32 0.0, %v4962
        %v4964 = vpop.f32.mrb[0].mxu0
        %v4965 = vadd.f32 0.0, %v4964
        %4966 = vmatprep.mubr.bf16.mxu0 %v4885
        %4967 = vmatmul.mubr.bf16.gmra.mrb[0].mxu0 %v4884
        %v4968 = vpop.f32.mrb[0].mxu0
        %v4969 = vadd.f32 0.0, %v4968
        %v4970 = vpop.f32.mrb[0].mxu0
        %v4971 = vadd.f32 0.0, %v4970
        %v4972 = vpop.f32.mrb[0].mxu0
        %v4973 = vadd.f32 0.0, %v4972
        %v4974 = vpop.f32.mrb[0].mxu0
        %v4975 = vadd.f32 0.0, %v4974
        %4976 = vmatprep.mubr.bf16.mxu0 %v4893
        %4977 = vmatmul.mubr.bf16.gmra.mrb[0].mxu0 %v4892
        %v4978 = vpop.f32.mrb[0].mxu0
        %v4979 = vadd.f32 0.0, %v4978
        %v4980 = vpop.f32.mrb[0].mxu0
        %v4981 = vadd.f32 0.0, %v4980
        %v4982 = vpop.f32.mrb[0].mxu0
        %v4983 = vpop.f32.mrb[0].mxu0
        %4984 = vdwg.mxu0
        %4985 = vmatprep.subr.bf16.mxu0 %v4605
        %4986 = vmatpush1.bf16.msra.mxu0 %v4604
        %4987 = vmatprep.subr.bf16.mxu0 %v4609
        %4988 = vmatpush1.bf16.msra.mxu0 %v4608
        %4989 = vmatprep.subr.bf16.mxu0 %v4613
        %4990 = vmatpush1.bf16.msra.mxu0 %v4612
        %4991 = vmatprep.subr.bf16.mxu0 %v4617
        %4992 = vmatpush1.bf16.msra.mxu0 %v4616
        %4993 = vmatprep.subr.bf16.mxu0 %v4621
        %4994 = vmatpush1.bf16.msra.mxu0 %v4620
        %4995 = vmatprep.subr.bf16.mxu0 %v4625
        %4996 = vmatpush1.bf16.msra.mxu0 %v4624
        %4997 = vmatprep.subr.bf16.mxu0 %v4629
        %4998 = vmatpush1.bf16.msra.mxu0 %v4628
        %4999 = vmatprep.subr.bf16.mxu0 %v4633
        %5000 = vmatpush1.bf16.msra.mxu0 %v4632
        %5001 = vmatprep.subr.bf16.mxu0 %v4637
        %5002 = vmatpush1.bf16.msra.mxu0 %v4636
        %5003 = vmatprep.subr.bf16.mxu0 %v4641
        %5004 = vmatpush1.bf16.msra.mxu0 %v4640
        %5005 = vmatprep.subr.bf16.mxu0 %v4645
        %5006 = vmatpush1.bf16.msra.mxu0 %v4644
        %5007 = vmatprep.subr.bf16.mxu0 %v4649
        %5008 = vmatpush1.bf16.msra.mxu0 %v4648
        %5009 = vmatprep.subr.bf16.mxu0 %v4653
        %5010 = vmatpush1.bf16.msra.mxu0 %v4652
        %5011 = vmatprep.subr.bf16.mxu0 %v4657
        %5012 = vmatpush1.bf16.msra.mxu0 %v4656
        %5013 = vmatprep.subr.bf16.mxu0 %v4661
        %5014 = vmatpush1.bf16.msra.mxu0 %v4660
        %5015 = vmatprep.subr.bf16.mxu0 %v4665
        %5016 = vmatpush1.bf16.msra.mxu0 %v4664
        %5017 = vmatprep.mubr.bf16.mxu0 %v4879
        %5018 = vmatmul.mubr.bf16.gmra.mrb[0].mxu0 %v4878
        %v5019 = vpop.f32.mrb[0].mxu0
        %v5020 = vadd.f32 %v4959, %v5019
        %v5021 = vpop.f32.mrb[0].mxu0
        %v5022 = vadd.f32 %v4961, %v5021
        %v5023 = vpop.f32.mrb[0].mxu0
        %v5024 = vadd.f32 %v4963, %v5023
        %v5025 = vpop.f32.mrb[0].mxu0
        %v5026 = vadd.f32 %v4965, %v5025
        %5027 = vmatprep.mubr.bf16.mxu0 %v4887
        %5028 = vmatmul.mubr.bf16.gmra.mrb[0].mxu0 %v4886
        %v5029 = vpop.f32.mrb[0].mxu0
        %v5030 = vadd.f32 %v4969, %v5029
        %v5031 = vpop.f32.mrb[0].mxu0
        %v5032 = vadd.f32 %v4971, %v5031
        %v5033 = vpop.f32.mrb[0].mxu0
        %v5034 = vadd.f32 %v4973, %v5033
        %v5035 = vpop.f32.mrb[0].mxu0
        %v5036 = vadd.f32 %v4975, %v5035
        %5037 = vmatprep.mubr.bf16.mxu0 %v4895
        %5038 = vmatmul.mubr.bf16.gmra.mrb[0].mxu0 %v4894
        %v5039 = vpop.f32.mrb[0].mxu0
        %v5040 = vadd.f32 %v4979, %v5039
        %v5041 = vpop.f32.mrb[0].mxu0
        %v5042 = vadd.f32 %v4981, %v5041
        %v5043 = vpop.f32.mrb[0].mxu0
        %v5044 = vpop.f32.mrb[0].mxu0
        %5045 = vdwg.mxu0
        %5046 = vmatprep.subr.bf16.mxu0 %v4669
        %5047 = vmatpush1.bf16.msra.mxu0 %v4668
        %5048 = vmatprep.subr.bf16.mxu0 %v4673
        %5049 = vmatpush1.bf16.msra.mxu0 %v4672
        %5050 = vmatprep.subr.bf16.mxu0 %v4677
        %5051 = vmatpush1.bf16.msra.mxu0 %v4676
        %5052 = vmatprep.subr.bf16.mxu0 %v4681
        %5053 = vmatpush1.bf16.msra.mxu0 %v4680
        %5054 = vmatprep.subr.bf16.mxu0 %v4685
        %5055 = vmatpush1.bf16.msra.mxu0 %v4684
        %5056 = vmatprep.subr.bf16.mxu0 %v4689
        %5057 = vmatpush1.bf16.msra.mxu0 %v4688
        %5058 = vmatprep.subr.bf16.mxu0 %v4693
        %5059 = vmatpush1.bf16.msra.mxu0 %v4692
        %5060 = vmatprep.subr.bf16.mxu0 %v4697
        %5061 = vmatpush1.bf16.msra.mxu0 %v4696
        %5062 = vmatprep.subr.bf16.mxu0 %v4701
        %5063 = vmatpush1.bf16.msra.mxu0 %v4700
        %5064 = vmatprep.subr.bf16.mxu0 %v4705
        %5065 = vmatpush1.bf16.msra.mxu0 %v4704
        %5066 = vmatprep.subr.bf16.mxu0 %v4709
        %5067 = vmatpush1.bf16.msra.mxu0 %v4708
        %5068 = vmatprep.subr.bf16.mxu0 %v4713
        %5069 = vmatpush1.bf16.msra.mxu0 %v4712
        %5070 = vmatprep.subr.bf16.mxu0 %v4717
        %5071 = vmatpush1.bf16.msra.mxu0 %v4716
        %5072 = vmatprep.subr.bf16.mxu0 %v4721
        %5073 = vmatpush1.bf16.msra.mxu0 %v4720
        %5074 = vmatprep.subr.bf16.mxu0 %v4725
        %5075 = vmatpush1.bf16.msra.mxu0 %v4724
        %5076 = vmatprep.subr.bf16.mxu0 %v4729
        %5077 = vmatpush1.bf16.msra.mxu0 %v4728
        %5078 = vmatprep.mubr.bf16.mxu0 %v4881
        %5079 = vmatmul.mubr.bf16.gmra.mrb[0].mxu0 %v4880
        %v5080 = vpop.f32.mrb[0].mxu0
        %v5081 = vadd.f32 %v5020, %v5080
        %v5082 = vpop.f32.mrb[0].mxu0
        %v5083 = vadd.f32 %v5022, %v5082
        %v5084 = vpop.f32.mrb[0].mxu0
        %v5085 = vadd.f32 %v5024, %v5084
        %v5086 = vpop.f32.mrb[0].mxu0
        %v5087 = vadd.f32 %v5026, %v5086
        %5088 = vmatprep.mubr.bf16.mxu0 %v4889
        %5089 = vmatmul.mubr.bf16.gmra.mrb[0].mxu0 %v4888
        %v5090 = vpop.f32.mrb[0].mxu0
        %v5091 = vadd.f32 %v5030, %v5090
        %v5092 = vpop.f32.mrb[0].mxu0
        %v5093 = vadd.f32 %v5032, %v5092
        %v5094 = vpop.f32.mrb[0].mxu0
        %v5095 = vadd.f32 %v5034, %v5094
        %v5096 = vpop.f32.mrb[0].mxu0
        %v5097 = vadd.f32 %v5036, %v5096
        %5098 = vmatprep.mubr.bf16.mxu0 %v4897
        %5099 = vmatmul.mubr.bf16.gmra.mrb[0].mxu0 %v4896
        %v5100 = vpop.f32.mrb[0].mxu0
        %v5101 = vadd.f32 %v5040, %v5100
        %v5102 = vpop.f32.mrb[0].mxu0
        %v5103 = vadd.f32 %v5042, %v5102
        %v5104 = vpop.f32.mrb[0].mxu0
        %v5105 = vpop.f32.mrb[0].mxu0
        %5106 = vdwg.mxu0
        %5107 = vmatprep.subr.bf16.mxu0 %v4733
        %5108 = vmatpush1.bf16.msra.mxu0 %v4732
        %5109 = vmatprep.subr.bf16.mxu0 %v4737
        %5110 = vmatpush1.bf16.msra.mxu0 %v4736
        %5111 = vmatprep.subr.bf16.mxu0 %v4741
        %5112 = vmatpush1.bf16.msra.mxu0 %v4740
        %5113 = vmatprep.subr.bf16.mxu0 %v4745
        %5114 = vmatpush1.bf16.msra.mxu0 %v4744
        %5115 = vmatprep.subr.bf16.mxu0 %v4749
        %5116 = vmatpush1.bf16.msra.mxu0 %v4748
        %5117 = vmatprep.subr.bf16.mxu0 %v4753
        %5118 = vmatpush1.bf16.msra.mxu0 %v4752
        %5119 = vmatprep.subr.bf16.mxu0 %v4757
        %5120 = vmatpush1.bf16.msra.mxu0 %v4756
        %5121 = vmatprep.subr.bf16.mxu0 %v4761
        %5122 = vmatpush1.bf16.msra.mxu0 %v4760
        %5123 = vmatprep.subr.bf16.mxu0 %v4765
        %5124 = vmatpush1.bf16.msra.mxu0 %v4764
        %5125 = vmatprep.subr.bf16.mxu0 %v4769
        %5126 = vmatpush1.bf16.msra.mxu0 %v4768
        %5127 = vmatprep.subr.bf16.mxu0 %v4773
        %5128 = vmatpush1.bf16.msra.mxu0 %v4772
        %5129 = vmatprep.subr.bf16.mxu0 %v4777
        %5130 = vmatpush1.bf16.msra.mxu0 %v4776
        %5131 = vmatprep.subr.bf16.mxu0 %v4781
        %5132 = vmatpush1.bf16.msra.mxu0 %v4780
        %5133 = vmatprep.subr.bf16.mxu0 %v4785
        %5134 = vmatpush1.bf16.msra.mxu0 %v4784
        %5135 = vmatprep.subr.bf16.mxu0 %v4789
        %5136 = vmatpush1.bf16.msra.mxu0 %v4788
        %5137 = vmatprep.subr.bf16.mxu0 %v4793
        %5138 = vmatpush1.bf16.msra.mxu0 %v4792
        %5139 = vmatprep.mubr.bf16.mxu0 %v4883
        %5140 = vmatmul.mubr.bf16.gmra.mrb[0].mxu0 %v4882
        %v5141 = vpop.f32.mrb[0].mxu0
        %v5142 = vadd.f32 %v5081, %v5141
        %v5143 = vpop.f32.mrb[0].mxu0
        %v5144 = vadd.f32 %v5083, %v5143
        %v5145 = vpop.f32.mrb[0].mxu0
        %v5146 = vadd.f32 %v5085, %v5145
        %v5147 = vpop.f32.mrb[0].mxu0
        %v5148 = vadd.f32 %v5087, %v5147
        %5149 = vmatprep.mubr.bf16.mxu0 %v4891
        %5150 = vmatmul.mubr.bf16.gmra.mrb[0].mxu0 %v4890
        %v5151 = vpop.f32.mrb[0].mxu0
        %v5152 = vadd.f32 %v5091, %v5151
        %v5153 = vpop.f32.mrb[0].mxu0
        %v5154 = vadd.f32 %v5093, %v5153
        %v5155 = vpop.f32.mrb[0].mxu0
        %v5156 = vadd.f32 %v5095, %v5155
        %v5157 = vpop.f32.mrb[0].mxu0
        %v5158 = vadd.f32 %v5097, %v5157
        %5159 = vmatprep.mubr.bf16.mxu0 %v4899
        %5160 = vmatmul.mubr.bf16.gmra.mrb[0].mxu0 %v4898
        %v5161 = vpop.f32.mrb[0].mxu0
        %v5162 = vadd.f32 %v5101, %v5161
        %v5163 = vpop.f32.mrb[0].mxu0
        %v5164 = vadd.f32 %v5103, %v5163
        %v5165 = vpop.f32.mrb[0].mxu0
        %v5166 = vpop.f32.mrb[0].mxu0
        %5167 = vdwg.mxu0
        %5168 = vmatprep.subr.bf16.mxu0 %v4543
        %5169 = vmatpush1.bf16.msra.mxu0 %v4542
        %5170 = vmatprep.subr.bf16.mxu0 %v4547
        %5171 = vmatpush1.bf16.msra.mxu0 %v4546
        %5172 = vmatprep.subr.bf16.mxu0 %v4551
        %5173 = vmatpush1.bf16.msra.mxu0 %v4550
        %5174 = vmatprep.subr.bf16.mxu0 %v4555
        %5175 = vmatpush1.bf16.msra.mxu0 %v4554
        %5176 = vmatprep.subr.bf16.mxu0 %v4559
        %5177 = vmatpush1.bf16.msra.mxu0 %v4558
        %5178 = vmatprep.subr.bf16.mxu0 %v4563
        %5179 = vmatpush1.bf16.msra.mxu0 %v4562
        %5180 = vmatprep.subr.bf16.mxu0 %v4567
        %5181 = vmatpush1.bf16.msra.mxu0 %v4566
        %5182 = vmatprep.subr.bf16.mxu0 %v4571
        %5183 = vmatpush1.bf16.msra.mxu0 %v4570
        %5184 = vmatprep.subr.bf16.mxu0 %v4575
        %5185 = vmatpush1.bf16.msra.mxu0 %v4574
        %5186 = vmatprep.subr.bf16.mxu0 %v4579
        %5187 = vmatpush1.bf16.msra.mxu0 %v4578
        %5188 = vmatprep.subr.bf16.mxu0 %v4583
        %5189 = vmatpush1.bf16.msra.mxu0 %v4582
        %5190 = vmatprep.subr.bf16.mxu0 %v4587
        %5191 = vmatpush1.bf16.msra.mxu0 %v4586
        %5192 = vmatprep.subr.bf16.mxu0 %v4591
        %5193 = vmatpush1.bf16.msra.mxu0 %v4590
        %5194 = vmatprep.subr.bf16.mxu0 %v4595
        %5195 = vmatpush1.bf16.msra.mxu0 %v4594
        %5196 = vmatprep.subr.bf16.mxu0 %v4599
        %5197 = vmatpush1.bf16.msra.mxu0 %v4598
        %5198 = vmatprep.subr.bf16.mxu0 %v4603
        %5199 = vmatpush1.bf16.msra.mxu0 %v4602
        %5200 = vmatprep.mubr.bf16.mxu0 %v4877
        %5201 = vmatmul.mubr.bf16.gmra.mrb[0].mxu0 %v4876
        %v5202 = vpop.f32.mrb[0].mxu0
        %v5203 = vadd.f32 0.0, %v5202
        %v5204 = vpop.f32.mrb[0].mxu0
        %v5205 = vadd.f32 0.0, %v5204
        %v5206 = vpop.f32.mrb[0].mxu0
        %v5207 = vadd.f32 0.0, %v5206
        %v5208 = vpop.f32.mrb[0].mxu0
        %v5209 = vadd.f32 0.0, %v5208
        %5210 = vmatprep.mubr.bf16.mxu0 %v4885
        %5211 = vmatmul.mubr.bf16.gmra.mrb[0].mxu0 %v4884
        %v5212 = vpop.f32.mrb[0].mxu0
        %v5213 = vadd.f32 0.0, %v5212
        %v5214 = vpop.f32.mrb[0].mxu0
        %v5215 = vadd.f32 0.0, %v5214
        %v5216 = vpop.f32.mrb[0].mxu0
        %v5217 = vadd.f32 0.0, %v5216
        %v5218 = vpop.f32.mrb[0].mxu0
        %v5219 = vadd.f32 0.0, %v5218
        %5220 = vmatprep.mubr.bf16.mxu0 %v4893
        %5221 = vmatmul.mubr.bf16.gmra.mrb[0].mxu0 %v4892
        %v5222 = vpop.f32.mrb[0].mxu0
        %v5223 = vadd.f32 0.0, %v5222
        %v5224 = vpop.f32.mrb[0].mxu0
        %v5225 = vadd.f32 0.0, %v5224
        %v5226 = vpop.f32.mrb[0].mxu0
        %v5227 = vpop.f32.mrb[0].mxu0
        %5228 = vdwg.mxu0
        %5229 = vmatprep.subr.bf16.mxu0 %v4607
        %5230 = vmatpush1.bf16.msra.mxu0 %v4606
        %5231 = vmatprep.subr.bf16.mxu0 %v4611
        %5232 = vmatpush1.bf16.msra.mxu0 %v4610
        %5233 = vmatprep.subr.bf16.mxu0 %v4615
        %5234 = vmatpush1.bf16.msra.mxu0 %v4614
        %5235 = vmatprep.subr.bf16.mxu0 %v4619
        %5236 = vmatpush1.bf16.msra.mxu0 %v4618
        %5237 = vmatprep.subr.bf16.mxu0 %v4623
        %5238 = vmatpush1.bf16.msra.mxu0 %v4622
        %5239 = vmatprep.subr.bf16.mxu0 %v4627
        %5240 = vmatpush1.bf16.msra.mxu0 %v4626
        %5241 = vmatprep.subr.bf16.mxu0 %v4631
        %5242 = vmatpush1.bf16.msra.mxu0 %v4630
        %5243 = vmatprep.subr.bf16.mxu0 %v4635
        %5244 = vmatpush1.bf16.msra.mxu0 %v4634
        %5245 = vmatprep.subr.bf16.mxu0 %v4639
        %5246 = vmatpush1.bf16.msra.mxu0 %v4638
        %5247 = vmatprep.subr.bf16.mxu0 %v4643
        %5248 = vmatpush1.bf16.msra.mxu0 %v4642
        %5249 = vmatprep.subr.bf16.mxu0 %v4647
        %5250 = vmatpush1.bf16.msra.mxu0 %v4646
        %5251 = vmatprep.subr.bf16.mxu0 %v4651
        %5252 = vmatpush1.bf16.msra.mxu0 %v4650
        %5253 = vmatprep.subr.bf16.mxu0 %v4655
        %5254 = vmatpush1.bf16.msra.mxu0 %v4654
        %5255 = vmatprep.subr.bf16.mxu0 %v4659
        %5256 = vmatpush1.bf16.msra.mxu0 %v4658
        %5257 = vmatprep.subr.bf16.mxu0 %v4663
        %5258 = vmatpush1.bf16.msra.mxu0 %v4662
        %5259 = vmatprep.subr.bf16.mxu0 %v4667
        %5260 = vmatpush1.bf16.msra.mxu0 %v4666
        %5261 = vmatprep.mubr.bf16.mxu0 %v4879
        %5262 = vmatmul.mubr.bf16.gmra.mrb[0].mxu0 %v4878
        %v5263 = vpop.f32.mrb[0].mxu0
        %v5264 = vadd.f32 %v5203, %v5263
        %v5265 = vpop.f32.mrb[0].mxu0
        %v5266 = vadd.f32 %v5205, %v5265
        %v5267 = vpop.f32.mrb[0].mxu0
        %v5268 = vadd.f32 %v5207, %v5267
        %v5269 = vpop.f32.mrb[0].mxu0
        %v5270 = vadd.f32 %v5209, %v5269
        %5271 = vmatprep.mubr.bf16.mxu0 %v4887
        %5272 = vmatmul.mubr.bf16.gmra.mrb[0].mxu0 %v4886
        %v5273 = vpop.f32.mrb[0].mxu0
        %v5274 = vadd.f32 %v5213, %v5273
        %v5275 = vpop.f32.mrb[0].mxu0
        %v5276 = vadd.f32 %v5215, %v5275
        %v5277 = vpop.f32.mrb[0].mxu0
        %v5278 = vadd.f32 %v5217, %v5277
        %v5279 = vpop.f32.mrb[0].mxu0
        %v5280 = vadd.f32 %v5219, %v5279
        %5281 = vmatprep.mubr.bf16.mxu0 %v4895
        %5282 = vmatmul.mubr.bf16.gmra.mrb[0].mxu0 %v4894
        %v5283 = vpop.f32.mrb[0].mxu0
        %v5284 = vadd.f32 %v5223, %v5283
        %v5285 = vpop.f32.mrb[0].mxu0
        %v5286 = vadd.f32 %v5225, %v5285
        %v5287 = vpop.f32.mrb[0].mxu0
        %v5288 = vpop.f32.mrb[0].mxu0
        %5289 = vdwg.mxu0
        %5290 = vmatprep.subr.bf16.mxu0 %v4671
        %5291 = vmatpush1.bf16.msra.mxu0 %v4670
        %5292 = vmatprep.subr.bf16.mxu0 %v4675
        %5293 = vmatpush1.bf16.msra.mxu0 %v4674
        %5294 = vmatprep.subr.bf16.mxu0 %v4679
        %5295 = vmatpush1.bf16.msra.mxu0 %v4678
        %5296 = vmatprep.subr.bf16.mxu0 %v4683
        %5297 = vmatpush1.bf16.msra.mxu0 %v4682
        %5298 = vmatprep.subr.bf16.mxu0 %v4687
        %5299 = vmatpush1.bf16.msra.mxu0 %v4686
        %5300 = vmatprep.subr.bf16.mxu0 %v4691
        %5301 = vmatpush1.bf16.msra.mxu0 %v4690
        %5302 = vmatprep.subr.bf16.mxu0 %v4695
        %5303 = vmatpush1.bf16.msra.mxu0 %v4694
        %5304 = vmatprep.subr.bf16.mxu0 %v4699
        %5305 = vmatpush1.bf16.msra.mxu0 %v4698
        %5306 = vmatprep.subr.bf16.mxu0 %v4703
        %5307 = vmatpush1.bf16.msra.mxu0 %v4702
        %5308 = vmatprep.subr.bf16.mxu0 %v4707
        %5309 = vmatpush1.bf16.msra.mxu0 %v4706
        %5310 = vmatprep.subr.bf16.mxu0 %v4711
        %5311 = vmatpush1.bf16.msra.mxu0 %v4710
        %5312 = vmatprep.subr.bf16.mxu0 %v4715
        %5313 = vmatpush1.bf16.msra.mxu0 %v4714
        %5314 = vmatprep.subr.bf16.mxu0 %v4719
        %5315 = vmatpush1.bf16.msra.mxu0 %v4718
        %5316 = vmatprep.subr.bf16.mxu0 %v4723
        %5317 = vmatpush1.bf16.msra.mxu0 %v4722
        %5318 = vmatprep.subr.bf16.mxu0 %v4727
        %5319 = vmatpush1.bf16.msra.mxu0 %v4726
        %5320 = vmatprep.subr.bf16.mxu0 %v4731
        %5321 = vmatpush1.bf16.msra.mxu0 %v4730
        %5322 = vmatprep.mubr.bf16.mxu0 %v4881
        %5323 = vmatmul.mubr.bf16.gmra.mrb[0].mxu0 %v4880
        %v5324 = vpop.f32.mrb[0].mxu0
        %v5325 = vadd.f32 %v5264, %v5324
        %v5326 = vpop.f32.mrb[0].mxu0
        %v5327 = vadd.f32 %v5266, %v5326
        %v5328 = vpop.f32.mrb[0].mxu0
        %v5329 = vadd.f32 %v5268, %v5328
        %v5330 = vpop.f32.mrb[0].mxu0
        %v5331 = vadd.f32 %v5270, %v5330
        %5332 = vmatprep.mubr.bf16.mxu0 %v4889
        %5333 = vmatmul.mubr.bf16.gmra.mrb[0].mxu0 %v4888
        %v5334 = vpop.f32.mrb[0].mxu0
        %v5335 = vadd.f32 %v5274, %v5334
        %v5336 = vpop.f32.mrb[0].mxu0
        %v5337 = vadd.f32 %v5276, %v5336
        %v5338 = vpop.f32.mrb[0].mxu0
        %v5339 = vadd.f32 %v5278, %v5338
        %v5340 = vpop.f32.mrb[0].mxu0
        %v5341 = vadd.f32 %v5280, %v5340
        %5342 = vmatprep.mubr.bf16.mxu0 %v4897
        %5343 = vmatmul.mubr.bf16.gmra.mrb[0].mxu0 %v4896
        %v5344 = vpop.f32.mrb[0].mxu0
        %v5345 = vadd.f32 %v5284, %v5344
        %v5346 = vpop.f32.mrb[0].mxu0
        %v5347 = vadd.f32 %v5286, %v5346
        %v5348 = vpop.f32.mrb[0].mxu0
        %v5349 = vpop.f32.mrb[0].mxu0
        %5350 = vdwg.mxu0
        %5351 = vmatprep.subr.bf16.mxu0 %v4735
        %5352 = vmatpush1.bf16.msra.mxu0 %v4734
        %5353 = vmatprep.subr.bf16.mxu0 %v4739
        %5354 = vmatpush1.bf16.msra.mxu0 %v4738
        %5355 = vmatprep.subr.bf16.mxu0 %v4743
        %5356 = vmatpush1.bf16.msra.mxu0 %v4742
        %5357 = vmatprep.subr.bf16.mxu0 %v4747
        %5358 = vmatpush1.bf16.msra.mxu0 %v4746
        %5359 = vmatprep.subr.bf16.mxu0 %v4751
        %5360 = vmatpush1.bf16.msra.mxu0 %v4750
        %5361 = vmatprep.subr.bf16.mxu0 %v4755
        %5362 = vmatpush1.bf16.msra.mxu0 %v4754
        %5363 = vmatprep.subr.bf16.mxu0 %v4759
        %5364 = vmatpush1.bf16.msra.mxu0 %v4758
        %5365 = vmatprep.subr.bf16.mxu0 %v4763
        %5366 = vmatpush1.bf16.msra.mxu0 %v4762
        %5367 = vmatprep.subr.bf16.mxu0 %v4767
        %5368 = vmatpush1.bf16.msra.mxu0 %v4766
        %5369 = vmatprep.subr.bf16.mxu0 %v4771
        %5370 = vmatpush1.bf16.msra.mxu0 %v4770
        %5371 = vmatprep.subr.bf16.mxu0 %v4775
        %5372 = vmatpush1.bf16.msra.mxu0 %v4774
        %5373 = vmatprep.subr.bf16.mxu0 %v4779
        %5374 = vmatpush1.bf16.msra.mxu0 %v4778
        %5375 = vmatprep.subr.bf16.mxu0 %v4783
        %5376 = vmatpush1.bf16.msra.mxu0 %v4782
        %5377 = vmatprep.subr.bf16.mxu0 %v4787
        %5378 = vmatpush1.bf16.msra.mxu0 %v4786
        %5379 = vmatprep.subr.bf16.mxu0 %v4791
        %5380 = vmatpush1.bf16.msra.mxu0 %v4790
        %5381 = vmatprep.subr.bf16.mxu0 %v4795
        %5382 = vmatpush1.bf16.msra.mxu0 %v4794
        %5383 = vmatprep.mubr.bf16.mxu0 %v4883
        %5384 = vmatmul.mubr.bf16.gmra.mrb[0].mxu0 %v4882
        %v5385 = vpop.f32.mrb[0].mxu0
        %v5386 = vadd.f32 %v5325, %v5385
        %v5387 = vpop.f32.mrb[0].mxu0
        %v5388 = vadd.f32 %v5327, %v5387
        %v5389 = vpop.f32.mrb[0].mxu0
        %v5390 = vadd.f32 %v5329, %v5389
        %v5391 = vpop.f32.mrb[0].mxu0
        %v5392 = vadd.f32 %v5331, %v5391
        %5393 = vmatprep.mubr.bf16.mxu0 %v4891
        %5394 = vmatmul.mubr.bf16.gmra.mrb[0].mxu0 %v4890
        %v5395 = vpop.f32.mrb[0].mxu0
        %v5396 = vadd.f32 %v5335, %v5395
        %v5397 = vpop.f32.mrb[0].mxu0
        %v5398 = vadd.f32 %v5337, %v5397
        %v5399 = vpop.f32.mrb[0].mxu0
        %v5400 = vadd.f32 %v5339, %v5399
        %v5401 = vpop.f32.mrb[0].mxu0
        %v5402 = vadd.f32 %v5341, %v5401
        %5403 = vmatprep.mubr.bf16.mxu0 %v4899
        %5404 = vmatmul.mubr.bf16.gmra.mrb[0].mxu0 %v4898
        %v5405 = vpop.f32.mrb[0].mxu0
        %v5406 = vadd.f32 %v5345, %v5405
        %v5407 = vpop.f32.mrb[0].mxu0
        %v5408 = vadd.f32 %v5347, %v5407
        %v5409 = vpop.f32.mrb[0].mxu0
        %v5410 = vpop.f32.mrb[0].mxu0
        %5411 = vdwg.mxu0
        %s5412 = sld [smem:[#allocation5]]
        %v5413 = vrcp.pop %v5162
        %v5414 = vrcp.pop %v5164
        %v5415 = vrcp.pop %v5406
        %v5416 = vrcp.pop %v5408
        %v5417 = vstv %s5412
        %v5418 = vmul.f32 %v5417, %v5413
        %v5419 = vmul.f32 %v5417, %v5414
        %v5420 = vmul.f32 %v5417, %v5415
        %v5421 = vmul.f32 %v5417, %v5416
        %s5422 = smul.addr %s748, 8
        %s5423 = scalar_lea.vmem %s181, %s5422 [#allocation6]
        %v5424 = vld [vmem:[%s5423] sm:$0xff]
        %v5425 = vld [vmem:[%s5423 + $0x8] sm:$0xff]
        %v5426 = vld [vmem:[%s5423 + $0x10] sm:$0xff]
        %v5427 = vld [vmem:[%s5423 + $0x18] sm:$0xff]
        %v5428 = vld [vmem:[%s5423 + $0x40] sm:$0xff]
        %v5429 = vld [vmem:[%s5423 + $0x48] sm:$0xff]
        %v5430 = vld [vmem:[%s5423 + $0x50] sm:$0xff]
        %v5431 = vld [vmem:[%s5423 + $0x58] sm:$0xff]
        %v5432 = vld [vmem:[%s5423 + $0x80] sm:$0xff]
        %v5433 = vld [vmem:[%s5423 + $0x88] sm:$0xff]
        %v5434 = vld [vmem:[%s5423 + $0x90] sm:$0xff]
        %v5435 = vld [vmem:[%s5423 + $0x98] sm:$0xff]
        %v5436 = vld [vmem:[%s5423 + $0xc0] sm:$0xff]
        %v5437 = vld [vmem:[%s5423 + $0xc8] sm:$0xff]
        %v5438 = vld [vmem:[%s5423 + $0xd0] sm:$0xff]
        %v5439 = vld [vmem:[%s5423 + $0xd8] sm:$0xff]
        %v5440 = vlaneseq
        %v5441 = vshrl.u32 %v5440, 7
        %v5442 = vsub.s32 0, %v5441
        %v5443 = vrot.slane %v5418, %v5442
        %v5444 = vlaneseq
        %v5445 = vshrl.u32 %v5444, 7
        %v5446 = vsub.s32 0, %v5445
        %v5447 = vrot.slane %v5419, %v5446
        %v5448 = vlaneseq
        %v5449 = vshrl.u32 %v5448, 7
        %v5450 = vsub.s32 0, %v5449
        %v5451 = vrot.slane %v5420, %v5450
        %v5452 = vlaneseq
        %v5453 = vshrl.u32 %v5452, 7
        %v5454 = vsub.s32 0, %v5453
        %v5455 = vrot.slane %v5421, %v5454
        %v5456 = vmul.f32 %v5142, %v5443
        %v5457 = vmul.f32 %v5144, %v5447
        %v5458 = vmul.f32 %v5386, %v5451
        %v5459 = vmul.f32 %v5388, %v5455
        %v5460 = vmul.f32 %v5146, %v5443
        %v5461 = vmul.f32 %v5148, %v5447
        %v5462 = vmul.f32 %v5390, %v5451
        %v5463 = vmul.f32 %v5392, %v5455
        %v5464 = vmul.f32 %v5152, %v5443
        %v5465 = vmul.f32 %v5154, %v5447
        %v5466 = vmul.f32 %v5396, %v5451
        %v5467 = vmul.f32 %v5398, %v5455
        %v5468 = vmul.f32 %v5156, %v5443
        %v5469 = vmul.f32 %v5158, %v5447
        %v5470 = vmul.f32 %v5400, %v5451
        %v5471 = vmul.f32 %v5402, %v5455
        %v5472 = vadd.f32 %v5456, %v5424
        %v5473 = vadd.f32 %v5457, %v5425
        %v5474 = vadd.f32 %v5458, %v5426
        %v5475 = vadd.f32 %v5459, %v5427
        %v5476 = vadd.f32 %v5460, %v5428
        %v5477 = vadd.f32 %v5461, %v5429
        %v5478 = vadd.f32 %v5462, %v5430
        %v5479 = vadd.f32 %v5463, %v5431
        %v5480 = vadd.f32 %v5464, %v5432
        %v5481 = vadd.f32 %v5465, %v5433
        %v5482 = vadd.f32 %v5466, %v5434
        %v5483 = vadd.f32 %v5467, %v5435
        %v5484 = vadd.f32 %v5468, %v5436
        %v5485 = vadd.f32 %v5469, %v5437
        %v5486 = vadd.f32 %v5470, %v5438
        %v5487 = vadd.f32 %v5471, %v5439
        %5488 = vst [vmem:[%s203] sm:$0xff] %v5472
        %5489 = vst [vmem:[%s203 + $0x8] sm:$0xff] %v5473
        %5490 = vst [vmem:[%s203 + $0x10] sm:$0xff] %v5474
        %5491 = vst [vmem:[%s203 + $0x18] sm:$0xff] %v5475
        %5492 = vst [vmem:[%s203 + $0x20] sm:$0xff] %v5476
        %5493 = vst [vmem:[%s203 + $0x28] sm:$0xff] %v5477
        %5494 = vst [vmem:[%s203 + $0x30] sm:$0xff] %v5478
        %5495 = vst [vmem:[%s203 + $0x38] sm:$0xff] %v5479
        %5496 = vst [vmem:[%s203 + $0x40] sm:$0xff] %v5480
        %5497 = vst [vmem:[%s203 + $0x48] sm:$0xff] %v5481
        %5498 = vst [vmem:[%s203 + $0x50] sm:$0xff] %v5482
        %5499 = vst [vmem:[%s203 + $0x58] sm:$0xff] %v5483
        %5500 = vst [vmem:[%s203 + $0x60] sm:$0xff] %v5484
        %5501 = vst [vmem:[%s203 + $0x68] sm:$0xff] %v5485
        %5502 = vst [vmem:[%s203 + $0x70] sm:$0xff] %v5486
        %5503 = vst [vmem:[%s203 + $0x78] sm:$0xff] %v5487
        %s5504 = sand.u32 %s111, 1
        %s5505 = scalar_lea.sflag [#allocation8], %s5504
        %s5506 = sand.u32 %s111, 1
        %s5507 = smul.addr %s5506, 128
        %s5508 = scalar_lea.vmem [#allocation9], %s5507
        // Predicated region
        $region41: #{tpu_custom_call.1} parent=31 // pred_check
          %p5509 = pneg %p121
        $region42: #{tpu_custom_call.1} parent=31 // pred_check_branch
          %5511 = sbr.rel (%p5509) target = $region44
        $region43: #{tpu_custom_call.1} parent=31 // pred_region
          %s5512 = smul.u32 4, %s26
          %s5514 = ssub.s32 2048, 2048
          %5515 = vsyncadd %s5505, %s5514
          %s5516 = smul.addr %s25, 32
          %s5517 = sadd.s32 %s5512, %s5516
          %s5518 = smul.addr %s5517, 128
          %s5519 = scalar_lea.hbm %s3, %s5518
          %s5520 = sshll.u32 %s5508, 4
          %s5521 = int_to_ptr.vmem [resolvable:$true] %s5520
          %5526 = dma.vmem_to_hbm [thread:$0]  %s5521, 2048, %s5519, %s5505, 512, 1024, 32
        $region44: #{tpu_custom_call.1} parent=31 // pred_fallthru
          _
      $region32: #{tpu_custom_call.1} parent=5 // pred_fallthru
        _
      %p5527 = scmp.le.s32.totalorder 2, %s16
      // Predicated region
      $region45: #{tpu_custom_call.1} parent=5 // pred_check
        %p5528 = pneg %p5527
      $region46: #{tpu_custom_call.1} parent=5 // pred_check_branch
        %5530 = sbr.rel (%p5528) target = $region48
      $region47: #{tpu_custom_call.1} parent=5 // pred_region
        %s5531 = ssub.s32 %s16, 2
        // Predicated region
        $region49: #{tpu_custom_call.1} parent=47 // pred_check
          %p5532 = pneg %p127
        $region50: #{tpu_custom_call.1} parent=47 // pred_check_branch
          %5534 = sbr.rel (%p5532) target = $region52
        $region51: #{tpu_custom_call.1} parent=47 // pred_region
          %s5535 = sand.u32 %s112, 1
          %s5536 = scalar_lea.sflag [#allocation8], %s5535
          %s5537 = sand.u32 %s112, 1
          %s5538 = smul.addr %s5537, 128
          %s5539 = scalar_lea.vmem [#allocation9], %s5538
          %5540 = dma.done %s5536, 2048
        $region52: #{tpu_custom_call.1} parent=47 // pred_fallthru
          _
      $region48: #{tpu_custom_call.1} parent=5 // pred_fallthru
        _
    $region6: #{tpu_custom_call.1} parent=1 // loop_footer
      %s20 = sadd.s32 1, %s16
    $region7: #{tpu_custom_call.1} parent=1 // loop_footer_branch
      %15 = sbr.rel target = $region3
    $region8: #{tpu_custom_call.1} parent=1 // loop_exit
      _
    %5541 = vsyncpa [#allocation7], 1
    %s5542 = scalar_lea.sflag [#allocation7], 1
    %5543 = vsyncpa %s5542, 1
    %5544 = vsyncpa [#allocation8], 1
    %s5545 = scalar_lea.sflag [#allocation8], 1
    %5546 = vsyncpa %s5545, 1

</llo_original>
